<compile_context>
chip_gen: v5e
topology: v5e:2x2
jax: 0.10.0
libtpu: 0.0.40
codegen_flags: <defaults>
</compile_context>

<pallas_src>
import jax
import jax.numpy as jnp
from jax.experimental import pallas as pl
from jax.experimental.pallas import tpu as pltpu

NEG_SLOPE = 0.2
BN_EPS = 1e-5

# Row-tile cap over the point axis.  With the fused max-pool kernels the
# largest per-tile footprint is pass 2's in-kernel (tile, 1024) f32 conv3
# block (~4 MiB at 1024 rows), so 1024 rows is safe on v5e/v6e (128 MiB
# physical VMEM) *and* on v7x (64 MiB physical).
TILE_ROWS_CAP = 1024


# ---------------------------------------------------------------------------
# small helpers
# ---------------------------------------------------------------------------
def _pick_tile(n, cap=TILE_ROWS_CAP):
    """Largest divisor of n that is <= cap and a multiple of 8 (prefer 256)."""
    if n <= cap:
        return n
    for step in (256, 8):          # multiples of 256 first (MXU M-dim fill)
        for t in range(cap - cap % step, step - 1, -step):
            if n % t == 0:
                return t
    # TODO(synk): handle ragged point counts with padding + in-kernel masks
    # instead of failing; silent giant tiles could exceed VMEM.
    raise ValueError(
        f"point axis {n} has no multiple-of-8 tile <= {cap}; pad N/B*N")


def _vmem_bytes(shape, itemsize=4):
    """VMEM footprint of a block, accounting for dtype-aware (sub, 128) tiling."""
    dims = list(shape)
    dims[-1] = -(-dims[-1] // 128) * 128
    if len(dims) >= 2:
        sub = 8 * (4 // itemsize)          # 8 for f32, 16 for bf16
        dims[-2] = -(-dims[-2] // sub) * sub
    n = 1
    for d in dims:
        n *= d
    return n * itemsize


def _cparams(semantics, tile_bytes, resident_bytes=0):
    """CompilerParams with a VMEM limit derived from the tile footprint.

    Clamped to 32 MiB so the request is safe on v7x's 64 MiB physical VMEM
    while still comfortably above the v5e 16 MiB scoped default.
    """
    vmem = 2 * tile_bytes + resident_bytes + (4 << 20)   # x2 double-buffering
    vmem = int(min(max(vmem, 16 << 20), 32 << 20))
    return pltpu.CompilerParams(dimension_semantics=semantics,
                                vmem_limit_bytes=vmem)


def _const_spec(shape):
    """Full-array block with a constant index map (fetched once, VMEM resident)."""
    return pl.BlockSpec(shape, lambda *_: (0,) * len(shape))


def _lrelu(h):
    return jnp.maximum(h, NEG_SLOPE * h)


def _bn_fold(s, ss, count, gamma, beta):
    """Fold per-channel sum / sum-of-squares into BN (scale, shift)."""
    # TODO(synk): one-pass sum/sumsq can cancel for huge, un-normalized
    # activations; switch to shifted/Welford accumulation if that bites.
    mean = s / count
    var = jnp.maximum(ss / count - mean * mean, 0.0)      # biased variance
    scale = gamma * jax.lax.rsqrt(var + BN_EPS)           # (1, C)
    shift = beta - mean * scale                           # (1, C)
    return scale, shift


# ---------------------------------------------------------------------------
# kernels
# ---------------------------------------------------------------------------
def _conv12_kmax_kernel(x_ref, w1_ref, s1_ref, t1_ref, w2_ref,
                        mx_ref, mn_ref, st_ref):
    # conv1 (6->64, bf16 MXU) -> BN1 -> LReLU -> conv2 (64->128, bf16 MXU),
    # then running max AND min of the raw conv2 output over neighbours K
    # (grid axis 1) plus BN2 sum / sum-of-squares, all accumulated into
    # resident output blocks.  The (K, P, 128) activation never hits HBM.
    k = pl.program_id(1)
    h1 = jnp.dot(x_ref[...], w1_ref[...], preferred_element_type=jnp.float32)
    a1 = _lrelu(h1 * s1_ref[...] + t1_ref[...])
    h2 = jnp.dot(a1.astype(jnp.bfloat16), w2_ref[...],
                 preferred_element_type=jnp.float32)
    stats = jnp.concatenate(
        [jnp.sum(h2, axis=0, keepdims=True),
         jnp.sum(h2 * h2, axis=0, keepdims=True)], axis=0)      # (2, 128)

    @pl.when(k == 0)
    def _():
        mx_ref[...] = h2
        mn_ref[...] = h2
        st_ref[...] = stats

    @pl.when(k > 0)
    def _():
        mx_ref[...] = jnp.maximum(mx_ref[...], h2)
        mn_ref[...] = jnp.minimum(mn_ref[...], h2)
        st_ref[...] = st_ref[...] + stats


def _conv3_nmax_kernel(mx2_ref, mn2_ref, s2_ref, t2_ref, w3_ref,
                       pmx_ref, pmn_ref, st_ref):
    # K-max hoist finish: pick max-vs-min of the raw conv2 output by the sign
    # of the folded BN2 scale (LeakyReLU(BN2(.)) is per-channel monotone),
    # apply BN2+LReLU, conv3 (128->1024, bf16 MXU), then accumulate the
    # per-batch running max/min of raw conv3 over the point axis (grid axis 1)
    # plus BN3 stats into resident blocks.  The (P, 1024) activation never
    # hits HBM and the separate N-max pass is gone.
    t = pl.program_id(1)
    s2 = s2_ref[...]
    h2 = jnp.where(s2 >= 0.0, mx2_ref[...], mn2_ref[...])
    a2 = _lrelu(h2 * s2 + t2_ref[...])
    h3 = jnp.dot(a2.astype(jnp.bfloat16), w3_ref[...],
                 preferred_element_type=jnp.float32)             # (tn, 1024)
    tmax = jnp.max(h3, axis=0, keepdims=True)
    tmin = jnp.min(h3, axis=0, keepdims=True)
    stats = jnp.concatenate(
        [jnp.sum(h3, axis=0, keepdims=True),
         jnp.sum(h3 * h3, axis=0, keepdims=True)], axis=0)       # (2, 1024)

    @pl.when(t == 0)
    def _():
        pmx_ref[...] = tmax
        pmn_ref[...] = tmin
        st_ref[...] = stats

    @pl.when(t > 0)
    def _():
        pmx_ref[...] = jnp.maximum(pmx_ref[...], tmax)
        pmn_ref[...] = jnp.minimum(pmn_ref[...], tmin)
        st_ref[...] = st_ref[...] + stats


def _tail_kernel(p_ref, wl1_ref, g4_ref, b4_ref, wl2_ref, g5_ref, b5_ref,
                 wt_ref, bt_ref, out_ref):
    # tiny tail on (B, 1024): linear1 + BN(512) + LReLU, linear2 + BN(256) +
    # LReLU, transform (weight 0, bias eye(3)); lane-padded (B, 128) output.
    def bn_lrelu(h, gamma, beta):
        mean = jnp.mean(h, axis=0, keepdims=True)
        var = jnp.mean(jnp.square(h - mean), axis=0, keepdims=True)
        return _lrelu((h - mean) * jax.lax.rsqrt(var + BN_EPS) * gamma + beta)

    h = jnp.dot(p_ref[...], wl1_ref[...], preferred_element_type=jnp.float32)
    h = bn_lrelu(h, g4_ref[...], b4_ref[...])
    h = jnp.dot(h, wl2_ref[...], preferred_element_type=jnp.float32)
    h = bn_lrelu(h, g5_ref[...], b5_ref[...])
    out_ref[...] = (jnp.dot(h, wt_ref[...], preferred_element_type=jnp.float32)
                    + bt_ref[...])


# ---------------------------------------------------------------------------
# parameters (fresh torch module equivalents)
# ---------------------------------------------------------------------------
def init_params(key):
    ks = jax.random.split(key, 5)

    def w(k, shape, fan_in):
        return jax.random.normal(k, shape, jnp.float32) / jnp.sqrt(
            jnp.float32(fan_in))

    def bn(c):
        return jnp.ones((1, c), jnp.float32), jnp.zeros((1, c), jnp.float32)

    w1 = w(ks[0], (6, 64), 6)          # Conv2d(6, 64, 1, bias=False)
    w2 = w(ks[1], (64, 128), 64)       # Conv2d(64, 128, 1, bias=False)
    w3 = w(ks[2], (128, 1024), 128)    # Conv1d(128, 1024, 1, bias=False)
    wl1 = w(ks[3], (1024, 512), 1024)  # Linear(1024, 512, bias=False)
    wl2 = w(ks[4], (512, 256), 512)    # Linear(512, 256, bias=False)

    g1, b1 = bn(64)
    g2, b2 = bn(128)
    g3, b3 = bn(1024)
    g4, b4 = bn(512)
    g5, b5 = bn(256)

    # transform layer: init.constant_(weight, 0); init.eye_(bias.view(3, 3))
    wt = jnp.zeros((256, 9), jnp.float32)
    bt = jnp.eye(3, dtype=jnp.float32).reshape(1, 9)

    return (w1, g1, b1, w2, g2, b2, w3, g3, b3,
            wl1, g4, b4, wl2, g5, b5, wt, bt)


# ---------------------------------------------------------------------------
# forward pass
# ---------------------------------------------------------------------------
@jax.jit
def transform_net(x, params):
    """x: (B, 6, N, K) float32 (PyTorch NCHW).  Returns (B, 3, 3)."""
    (w1, g1, b1, w2, g2, b2, w3, g3, b3,
     wl1, g4, b4, wl2, g5, b5, wt, bt) = params

    B, C, N, K = x.shape
    assert C == 6, "Transform_Net expects 6 input channels"
    P = B * N
    tp = _pick_tile(P)           # row tile over the (b, n) point axis
    tn = _pick_tile(N)           # row tile inside one batch element (N-max)
    n_pt = P // tp
    n_nt = N // tn
    f32 = jnp.float32
    bf16 = jnp.bfloat16

    # K-major, channels-last point layout: (K, B*N, 6)
    xk6 = jnp.transpose(x, (3, 0, 2, 1)).reshape(K, P, C).astype(f32)

    # --- BN1 statistics via the Gram trick (tiny, plain XLA, f32) -----------
    # sum(h1) = sum(x) @ w1 ; sum(h1^2) = diag(w1^T (x^T x) w1)
    x2d = xk6.reshape(K * P, C)
    colsum = jnp.sum(x2d, axis=0)                                   # (6,)
    gram = jnp.dot(x2d.T, x2d, preferred_element_type=f32)          # (6, 6)
    sum_h1 = colsum @ w1                                            # (64,)
    sumsq_h1 = jnp.einsum('ic,ij,jc->c', w1, gram, w1)              # (64,)
    sc1, sh1 = _bn_fold(sum_h1[None, :], sumsq_h1[None, :],
                        float(P * K), g1, b1)

    # Pallas inputs: channel-padded 6->8, bf16 operands for the MXU.
    xk = jnp.pad(xk6, ((0, 0), (0, 0), (0, 8 - C))).astype(bf16)    # (K, P, 8)
    w1p = jnp.pad(w1, ((0, 8 - C), (0, 0))).astype(bf16)            # (8, 64)
    w2b = w2.astype(bf16)                                           # (64, 128)
    w3b = w3.astype(bf16)                                           # (128, 1024)

    vec = lambda c: pl.BlockSpec((1, c), lambda *_: (0, 0))

    # --- pass 1: conv1->BN1->LReLU->conv2, fused K-max/min + BN2 stats ------
    h2mx, h2mn, stats2 = pl.pallas_call(
        _conv12_kmax_kernel,
        grid=(n_pt, K),
        in_specs=[
            pl.BlockSpec((None, tp, 8), lambda t, k: (k, t, 0)),
            _const_spec((8, 64)), vec(64), vec(64), _const_spec((64, 128)),
        ],
        out_specs=(
            pl.BlockSpec((tp, 128), lambda t, k: (t, 0)),
            pl.BlockSpec((tp, 128), lambda t, k: (t, 0)),
            pl.BlockSpec((None, 2, 128), lambda t, k: (t, 0, 0)),
        ),
        out_shape=(
            jax.ShapeDtypeStruct((P, 128), f32),
            jax.ShapeDtypeStruct((P, 128), f32),
            jax.ShapeDtypeStruct((n_pt, 2, 128), f32),
        ),
        compiler_params=_cparams(
            ("parallel", "arbitrary"),
            _vmem_bytes((tp, 8), 2) + 2 * _vmem_bytes((tp, 128))
            + _vmem_bytes((2, 128)),
            _vmem_bytes((8, 64), 2) + _vmem_bytes((64, 128), 2)
            + 2 * _vmem_bytes((1, 64)) + 2 * _vmem_bytes((tp, 128))),
        cost_estimate=pl.CostEstimate(
            flops=2 * P * K * (8 * 64 + 64 * 128),
            transcendentals=0,
            bytes_accessed=K * P * 8 * 2 + 2 * P * 128 * 4),
    )(xk, w1p, sc1, sh1, w2b)
    st2 = jnp.sum(stats2, axis=0)                                   # (2, 128)
    sc2, sh2 = _bn_fold(st2[0:1], st2[1:2], float(P * K), g2, b2)

    # --- pass 2: BN2->LReLU->conv3, fused per-batch N-max/min + BN3 stats ---
    # Parallel axis is B (>= 2 keeps both v7x TensorCores busy); the point
    # axis is the resident-accumulator ("arbitrary") axis.
    h2mx_r = h2mx.reshape(B, N, 128)
    h2mn_r = h2mn.reshape(B, N, 128)
    pmx, pmn, stats3 = pl.pallas_call(
        _conv3_nmax_kernel,
        grid=(B, n_nt),
        in_specs=[
            pl.BlockSpec((None, tn, 128), lambda b, t: (b, t, 0)),
            pl.BlockSpec((None, tn, 128), lambda b, t: (b, t, 0)),
            vec(128), vec(128), _const_spec((128, 1024)),
        ],
        out_specs=(
            pl.BlockSpec((None, 1, 1024), lambda b, t: (b, 0, 0)),
            pl.BlockSpec((None, 1, 1024), lambda b, t: (b, 0, 0)),
            pl.BlockSpec((None, 2, 1024), lambda b, t: (b, 0, 0)),
        ),
        out_shape=(
            jax.ShapeDtypeStruct((B, 1, 1024), f32),
            jax.ShapeDtypeStruct((B, 1, 1024), f32),
            jax.ShapeDtypeStruct((B, 2, 1024), f32),
        ),
        compiler_params=_cparams(
            ("parallel", "arbitrary"),
            2 * _vmem_bytes((tn, 128)) + 2 * _vmem_bytes((1, 1024))
            + _vmem_bytes((2, 1024)),
            _vmem_bytes((128, 1024), 2) + 2 * _vmem_bytes((1, 128))
            + _vmem_bytes((tn, 1024)) + _vmem_bytes((tn, 128))),
        cost_estimate=pl.CostEstimate(
            flops=2 * P * 128 * 1024,
            transcendentals=0,
            bytes_accessed=2 * P * 128 * 4 + 128 * 1024 * 2
            + B * 4 * 1024 * 4),
    )(h2mx_r, h2mn_r, sc2, sh2, w3b)
    st3 = jnp.sum(stats3, axis=0)                                   # (2, 1024)
    sc3, sh3 = _bn_fold(st3[0:1], st3[1:2], float(P), g3, b3)

    # BN3 + LReLU on the pooled (B, 1024) result (tiny; sign-select completes
    # the N-max hoist) — plain XLA.
    pooled_raw = jnp.where(sc3 >= 0.0,
                           pmx.reshape(B, 1024), pmn.reshape(B, 1024))
    pooled = _lrelu(pooled_raw * sc3 + sh3)

    # --- pass 3: tiny tail, lane-padded output ------------------------------
    wtp = jnp.pad(wt, ((0, 0), (0, 128 - wt.shape[1])))             # (256, 128)
    btp = jnp.pad(bt, ((0, 0), (0, 128 - bt.shape[1])))             # (1, 128)
    vmem = pl.BlockSpec(memory_space=pltpu.MemorySpace.VMEM)
    out_pad = pl.pallas_call(
        _tail_kernel,
        out_shape=jax.ShapeDtypeStruct((B, 128), f32),
        in_specs=[vmem] * 9,
        out_specs=vmem,
        compiler_params=pltpu.CompilerParams(vmem_limit_bytes=16 << 20),
    )(pooled, wl1, g4, b4, wl2, g5, b5, wtp, btp)

    return out_pad[:, :9].reshape(B, 3, 3)


if __name__ == "__main__":
    key = jax.random.PRNGKey(0)
    kx, kp = jax.random.split(key)

    B, N, K = 2, 16, 8
    x = jax.random.normal(kx, (B, 6, N, K), dtype=jnp.float32)
    params = init_params(kp)

    out = transform_net(x, params)
    out = jax.block_until_ready(out)

    assert out.shape == (B, 3, 3)
    assert out.dtype == jnp.float32
    # transform layer has zero weight and identity bias -> output == eye(3)
    assert jnp.allclose(out, jnp.broadcast_to(jnp.eye(3), (B, 3, 3)), atol=1e-5)
    print("KERNEL_OK")
</pallas_src>

<mosaic_0001>
module attributes {stable_mosaic.version = 11 : i64} {
  func.func @_conv12_kmax_kernel(%arg0: i32, %arg1: i32, %arg2: memref<1x32x8xbf16, #tpu.memory_space<vmem>>, %arg3: memref<8x64xbf16, #tpu.memory_space<vmem>>, %arg4: memref<1x64xf32, #tpu.memory_space<vmem>>, %arg5: memref<1x64xf32, #tpu.memory_space<vmem>>, %arg6: memref<64x128xbf16, #tpu.memory_space<vmem>>, %arg7: memref<32x128xf32, #tpu.memory_space<vmem>>, %arg8: memref<32x128xf32, #tpu.memory_space<vmem>>, %arg9: memref<1x2x128xf32, #tpu.memory_space<vmem>>) attributes {dimension_semantics = [#tpu.dimension_semantics<parallel>, #tpu.dimension_semantics<arbitrary>], iteration_bounds = array<i64: 1, 8>, scalar_prefetch = 0 : i64, scratch_operands = 0 : i64, tpu.core_type = #tpu.core_type<tc>, window_params = [{transform_indices = @transform_0, window_bounds = array<i64: 1, 32, 8>}, {pipeline_mode = #tpu.pipeline_mode<synchronous>, transform_indices = @transform_1, window_bounds = array<i64: 8, 64>}, {pipeline_mode = #tpu.pipeline_mode<synchronous>, transform_indices = @transform_2, window_bounds = array<i64: 1, 64>}, {pipeline_mode = #tpu.pipeline_mode<synchronous>, transform_indices = @transform_3, window_bounds = array<i64: 1, 64>}, {pipeline_mode = #tpu.pipeline_mode<synchronous>, transform_indices = @transform_4, window_bounds = array<i64: 64, 128>}, {transform_indices = @transform_5, window_bounds = array<i64: 32, 128>}, {transform_indices = @transform_6, window_bounds = array<i64: 32, 128>}, {transform_indices = @transform_7, window_bounds = array<i64: 1, 2, 128>}]} {
    %c0 = arith.constant 0 : index
    %c0_0 = arith.constant 0 : index
    %c0_1 = arith.constant 0 : index
    %0 = vector.load %arg2[%c0, %c0_0, %c0_1] : memref<1x32x8xbf16, #tpu.memory_space<vmem>>, vector<1x32x8xbf16>
    %1 = vector.shape_cast %0 : vector<1x32x8xbf16> to vector<32x8xbf16>
    %c0_2 = arith.constant 0 : index
    %c0_3 = arith.constant 0 : index
    %2 = vector.load %arg3[%c0_2, %c0_3] : memref<8x64xbf16, #tpu.memory_space<vmem>>, vector<8x64xbf16>
    %cst = arith.constant dense<0.000000e+00> : vector<32x64xf32>
    %3 = tpu.matmul %1, %2, %cst {dimension_numbers = #tpu.dot_dimension_numbers<[1], [0], [0], [1], [0, 0, 1, 1], [], []>} : vector<32x8xbf16>, vector<8x64xbf16>, vector<32x64xf32> -> vector<32x64xf32>
    %c0_4 = arith.constant 0 : index
    %c0_5 = arith.constant 0 : index
    %4 = vector.load %arg4[%c0_4, %c0_5] : memref<1x64xf32, #tpu.memory_space<vmem>>, vector<1x64xf32>
    %5 = vector.broadcast %4 : vector<1x64xf32> to vector<32x64xf32>
    %6 = arith.mulf %3, %5 : vector<32x64xf32>
    %c0_6 = arith.constant 0 : index
    %c0_7 = arith.constant 0 : index
    %7 = vector.load %arg5[%c0_6, %c0_7] : memref<1x64xf32, #tpu.memory_space<vmem>>, vector<1x64xf32>
    %8 = vector.broadcast %7 : vector<1x64xf32> to vector<32x64xf32>
    %9 = arith.addf %6, %8 : vector<32x64xf32>
    %cst_8 = arith.constant 2.000000e-01 : f32
    %10 = vector.broadcast %cst_8 : f32 to vector<32x64xf32>
    %11 = arith.mulf %10, %9 : vector<32x64xf32>
    %12 = arith.maximumf %9, %11 : vector<32x64xf32>
    %13 = arith.truncf %12 : vector<32x64xf32> to vector<32x64xbf16>
    %c0_9 = arith.constant 0 : index
    %c0_10 = arith.constant 0 : index
    %14 = vector.load %arg6[%c0_9, %c0_10] : memref<64x128xbf16, #tpu.memory_space<vmem>>, vector<64x128xbf16>
    %cst_11 = arith.constant dense<0.000000e+00> : vector<32x128xf32>
    %15 = tpu.matmul %13, %14, %cst_11 {dimension_numbers = #tpu.dot_dimension_numbers<[1], [0], [0], [1], [0, 0, 1, 1], [], []>} : vector<32x64xbf16>, vector<64x128xbf16>, vector<32x128xf32> -> vector<32x128xf32>
    %cst_12 = arith.constant dense<0.000000e+00> : vector<128xf32>
    %16 = vector.multi_reduction <add>, %15, %cst_12 [0] : vector<32x128xf32> to vector<128xf32>
    %17 = vector.shape_cast %16 : vector<128xf32> to vector<1x128xf32>
    %18 = arith.mulf %15, %15 : vector<32x128xf32>
    %cst_13 = arith.constant dense<0.000000e+00> : vector<128xf32>
    %19 = vector.multi_reduction <add>, %18, %cst_13 [0] : vector<32x128xf32> to vector<128xf32>
    %20 = vector.shape_cast %19 : vector<128xf32> to vector<1x128xf32>
    %21 = tpu.concatenate %17, %20 in 0 : vector<1x128xf32>, vector<1x128xf32> -> vector<2x128xf32>
    %c0_i32 = arith.constant 0 : i32
    %22 = arith.cmpi eq, %arg1, %c0_i32 : i32
    %23 = arith.extui %22 : i1 to i32
    %c0_i32_14 = arith.constant 0 : i32
    %24 = arith.cmpi ne, %23, %c0_i32_14 : i32
    scf.if %24 {
      %c0_17 = arith.constant 0 : index
      %c0_18 = arith.constant 0 : index
      %28 = vector.load %arg7[%c0_17, %c0_18] : memref<32x128xf32, #tpu.memory_space<vmem>>, vector<32x128xf32>
      tpu.vector_store %arg7[%c0_17, %c0_18], %15 {strides = array<i32>} : memref<32x128xf32, #tpu.memory_space<vmem>>, vector<32x128xf32>,
      %c0_19 = arith.constant 0 : index
      %c0_20 = arith.constant 0 : index
      %29 = vector.load %arg8[%c0_19, %c0_20] : memref<32x128xf32, #tpu.memory_space<vmem>>, vector<32x128xf32>
      tpu.vector_store %arg8[%c0_19, %c0_20], %15 {strides = array<i32>} : memref<32x128xf32, #tpu.memory_space<vmem>>, vector<32x128xf32>,
      %c0_21 = arith.constant 0 : index
      %c0_22 = arith.constant 0 : index
      %c0_23 = arith.constant 0 : index
      %30 = vector.load %arg9[%c0_21, %c0_22, %c0_23] : memref<1x2x128xf32, #tpu.memory_space<vmem>>, vector<1x2x128xf32>
      %31 = vector.shape_cast %30 : vector<1x2x128xf32> to vector<2x128xf32>
      %32 = vector.shape_cast %21 : vector<2x128xf32> to vector<1x2x128xf32>
      tpu.vector_store %arg9[%c0_21, %c0_22, %c0_23], %32 {strides = array<i32>} : memref<1x2x128xf32, #tpu.memory_space<vmem>>, vector<1x2x128xf32>,
    } else {
    }
    %c0_i32_15 = arith.constant 0 : i32
    %25 = arith.cmpi sgt, %arg1, %c0_i32_15 : i32
    %26 = arith.extui %25 : i1 to i32
    %c0_i32_16 = arith.constant 0 : i32
    %27 = arith.cmpi ne, %26, %c0_i32_16 : i32
    scf.if %27 {
      %c0_17 = arith.constant 0 : index
      %c0_18 = arith.constant 0 : index
      %28 = vector.load %arg7[%c0_17, %c0_18] : memref<32x128xf32, #tpu.memory_space<vmem>>, vector<32x128xf32>
      %29 = arith.maximumf %28, %15 : vector<32x128xf32>
      %c0_19 = arith.constant 0 : index
      %c0_20 = arith.constant 0 : index
      %30 = vector.load %arg7[%c0_19, %c0_20] : memref<32x128xf32, #tpu.memory_space<vmem>>, vector<32x128xf32>
      tpu.vector_store %arg7[%c0_19, %c0_20], %29 {strides = array<i32>} : memref<32x128xf32, #tpu.memory_space<vmem>>, vector<32x128xf32>,
      %c0_21 = arith.constant 0 : index
      %c0_22 = arith.constant 0 : index
      %31 = vector.load %arg8[%c0_21, %c0_22] : memref<32x128xf32, #tpu.memory_space<vmem>>, vector<32x128xf32>
      %32 = arith.minimumf %31, %15 : vector<32x128xf32>
      %c0_23 = arith.constant 0 : index
      %c0_24 = arith.constant 0 : index
      %33 = vector.load %arg8[%c0_23, %c0_24] : memref<32x128xf32, #tpu.memory_space<vmem>>, vector<32x128xf32>
      tpu.vector_store %arg8[%c0_23, %c0_24], %32 {strides = array<i32>} : memref<32x128xf32, #tpu.memory_space<vmem>>, vector<32x128xf32>,
      %c0_25 = arith.constant 0 : index
      %c0_26 = arith.constant 0 : index
      %c0_27 = arith.constant 0 : index
      %34 = vector.load %arg9[%c0_25, %c0_26, %c0_27] : memref<1x2x128xf32, #tpu.memory_space<vmem>>, vector<1x2x128xf32>
      %35 = vector.shape_cast %34 : vector<1x2x128xf32> to vector<2x128xf32>
      %36 = arith.addf %35, %21 : vector<2x128xf32>
      %c0_28 = arith.constant 0 : index
      %c0_29 = arith.constant 0 : index
      %c0_30 = arith.constant 0 : index
      %37 = vector.load %arg9[%c0_28, %c0_29, %c0_30] : memref<1x2x128xf32, #tpu.memory_space<vmem>>, vector<1x2x128xf32>
      %38 = vector.shape_cast %37 : vector<1x2x128xf32> to vector<2x128xf32>
      %39 = vector.shape_cast %36 : vector<2x128xf32> to vector<1x2x128xf32>
      tpu.vector_store %arg9[%c0_28, %c0_29, %c0_30], %39 {strides = array<i32>} : memref<1x2x128xf32, #tpu.memory_space<vmem>>, vector<1x2x128xf32>,
    } else {
    }
    return
  }
  func.func @transform_0(%arg0: i32, %arg1: i32) -> (i32, i32, i32) {
    %c0_i32 = arith.constant 0 : i32
    %c0_i32_0 = arith.constant 0 : i32
    return %arg1, %arg0, %c0_i32 : i32, i32, i32
  }
  func.func @transform_1(%arg0: i32, %arg1: i32) -> (i32, i32) {
    %c0_i32 = arith.constant 0 : i32
    %c0_i32_0 = arith.constant 0 : i32
    %c0_i32_1 = arith.constant 0 : i32
    return %c0_i32, %c0_i32_0 : i32, i32
  }
  func.func @transform_2(%arg0: i32, %arg1: i32) -> (i32, i32) {
    %c0_i32 = arith.constant 0 : i32
    %c0_i32_0 = arith.constant 0 : i32
    %c0_i32_1 = arith.constant 0 : i32
    return %c0_i32, %c0_i32_0 : i32, i32
  }
  func.func @transform_3(%arg0: i32, %arg1: i32) -> (i32, i32) {
    %c0_i32 = arith.constant 0 : i32
    %c0_i32_0 = arith.constant 0 : i32
    %c0_i32_1 = arith.constant 0 : i32
    return %c0_i32, %c0_i32_0 : i32, i32
  }
  func.func @transform_4(%arg0: i32, %arg1: i32) -> (i32, i32) {
    %c0_i32 = arith.constant 0 : i32
    %c0_i32_0 = arith.constant 0 : i32
    %c0_i32_1 = arith.constant 0 : i32
    return %c0_i32, %c0_i32_0 : i32, i32
  }
  func.func @transform_5(%arg0: i32, %arg1: i32) -> (i32, i32) {
    %c0_i32 = arith.constant 0 : i32
    %c0_i32_0 = arith.constant 0 : i32
    return %arg0, %c0_i32 : i32, i32
  }
  func.func @transform_6(%arg0: i32, %arg1: i32) -> (i32, i32) {
    %c0_i32 = arith.constant 0 : i32
    %c0_i32_0 = arith.constant 0 : i32
    return %arg0, %c0_i32 : i32, i32
  }
  func.func @transform_7(%arg0: i32, %arg1: i32) -> (i32, i32, i32) {
    %c0_i32 = arith.constant 0 : i32
    %c0_i32_0 = arith.constant 0 : i32
    %c0_i32_1 = arith.constant 0 : i32
    return %arg0, %c0_i32, %c0_i32_0 : i32, i32, i32
  }
}

module attributes {stable_mosaic.version = 11 : i64} {
  func.func @_conv3_nmax_kernel(%arg0: i32, %arg1: i32, %arg2: memref<1x16x128xf32, #tpu.memory_space<vmem>>, %arg3: memref<1x16x128xf32, #tpu.memory_space<vmem>>, %arg4: memref<1x128xf32, #tpu.memory_space<vmem>>, %arg5: memref<1x128xf32, #tpu.memory_space<vmem>>, %arg6: memref<128x1024xbf16, #tpu.memory_space<vmem>>, %arg7: memref<1x1x1024xf32, #tpu.memory_space<vmem>>, %arg8: memref<1x1x1024xf32, #tpu.memory_space<vmem>>, %arg9: memref<1x2x1024xf32, #tpu.memory_space<vmem>>) attributes {dimension_semantics = [#tpu.dimension_semantics<parallel>, #tpu.dimension_semantics<arbitrary>], iteration_bounds = array<i64: 2, 1>, scalar_prefetch = 0 : i64, scratch_operands = 0 : i64, tpu.core_type = #tpu.core_type<tc>, window_params = [{transform_indices = @transform_0, window_bounds = array<i64: 1, 16, 128>}, {transform_indices = @transform_1, window_bounds = array<i64: 1, 16, 128>}, {pipeline_mode = #tpu.pipeline_mode<synchronous>, transform_indices = @transform_2, window_bounds = array<i64: 1, 128>}, {pipeline_mode = #tpu.pipeline_mode<synchronous>, transform_indices = @transform_3, window_bounds = array<i64: 1, 128>}, {pipeline_mode = #tpu.pipeline_mode<synchronous>, transform_indices = @transform_4, window_bounds = array<i64: 128, 1024>}, {transform_indices = @transform_5, window_bounds = array<i64: 1, 1, 1024>}, {transform_indices = @transform_6, window_bounds = array<i64: 1, 1, 1024>}, {transform_indices = @transform_7, window_bounds = array<i64: 1, 2, 1024>}]} {
    %c0 = arith.constant 0 : index
    %c0_0 = arith.constant 0 : index
    %0 = vector.load %arg4[%c0, %c0_0] : memref<1x128xf32, #tpu.memory_space<vmem>>, vector<1x128xf32>
    %cst = arith.constant 0.000000e+00 : f32
    %1 = vector.broadcast %cst : f32 to vector<1x128xf32>
    %2 = arith.cmpf oge, %0, %1 : vector<1x128xf32>
    %c0_1 = arith.constant 0 : index
    %c0_2 = arith.constant 0 : index
    %c0_3 = arith.constant 0 : index
    %3 = vector.load %arg2[%c0_1, %c0_2, %c0_3] : memref<1x16x128xf32, #tpu.memory_space<vmem>>, vector<1x16x128xf32>
    %4 = vector.shape_cast %3 : vector<1x16x128xf32> to vector<16x128xf32>
    %c0_4 = arith.constant 0 : index
    %c0_5 = arith.constant 0 : index
    %c0_6 = arith.constant 0 : index
    %5 = vector.load %arg3[%c0_4, %c0_5, %c0_6] : memref<1x16x128xf32, #tpu.memory_space<vmem>>, vector<1x16x128xf32>
    %6 = vector.shape_cast %5 : vector<1x16x128xf32> to vector<16x128xf32>
    %7 = vector.shape_cast %2 : vector<1x128xi1> to vector<1x128xi1>
    %8 = vector.broadcast %7 : vector<1x128xi1> to vector<16x128xi1>
    %9 = arith.select %8, %4, %6 : vector<16x128xi1>, vector<16x128xf32>
    %10 = vector.broadcast %0 : vector<1x128xf32> to vector<16x128xf32>
    %11 = arith.mulf %9, %10 : vector<16x128xf32>
    %c0_7 = arith.constant 0 : index
    %c0_8 = arith.constant 0 : index
    %12 = vector.load %arg5[%c0_7, %c0_8] : memref<1x128xf32, #tpu.memory_space<vmem>>, vector<1x128xf32>
    %13 = vector.broadcast %12 : vector<1x128xf32> to vector<16x128xf32>
    %14 = arith.addf %11, %13 : vector<16x128xf32>
    %cst_9 = arith.constant 2.000000e-01 : f32
    %15 = vector.broadcast %cst_9 : f32 to vector<16x128xf32>
    %16 = arith.mulf %15, %14 : vector<16x128xf32>
    %17 = arith.maximumf %14, %16 : vector<16x128xf32>
    %18 = arith.truncf %17 : vector<16x128xf32> to vector<16x128xbf16>
    %c0_10 = arith.constant 0 : index
    %c0_11 = arith.constant 0 : index
    %19 = vector.load %arg6[%c0_10, %c0_11] : memref<128x1024xbf16, #tpu.memory_space<vmem>>, vector<128x1024xbf16>
    %cst_12 = arith.constant dense<0.000000e+00> : vector<16x1024xf32>
    %20 = tpu.matmul %18, %19, %cst_12 {dimension_numbers = #tpu.dot_dimension_numbers<[1], [0], [0], [1], [0, 0, 1, 1], [], []>} : vector<16x128xbf16>, vector<128x1024xbf16>, vector<16x1024xf32> -> vector<16x1024xf32>
    %cst_13 = arith.constant dense<0xFF800000> : vector<1024xf32>
    %21 = vector.multi_reduction <maximumf>, %20, %cst_13 [0] : vector<16x1024xf32> to vector<1024xf32>
    %22 = vector.shape_cast %21 : vector<1024xf32> to vector<1x1024xf32>
    %cst_14 = arith.constant dense<0x7F800000> : vector<1024xf32>
    %23 = vector.multi_reduction <minimumf>, %20, %cst_14 [0] : vector<16x1024xf32> to vector<1024xf32>
    %24 = vector.shape_cast %23 : vector<1024xf32> to vector<1x1024xf32>
    %cst_15 = arith.constant dense<0.000000e+00> : vector<1024xf32>
    %25 = vector.multi_reduction <add>, %20, %cst_15 [0] : vector<16x1024xf32> to vector<1024xf32>
    %26 = vector.shape_cast %25 : vector<1024xf32> to vector<1x1024xf32>
    %27 = arith.mulf %20, %20 : vector<16x1024xf32>
    %cst_16 = arith.constant dense<0.000000e+00> : vector<1024xf32>
    %28 = vector.multi_reduction <add>, %27, %cst_16 [0] : vector<16x1024xf32> to vector<1024xf32>
    %29 = vector.shape_cast %28 : vector<1024xf32> to vector<1x1024xf32>
    %30 = tpu.concatenate %26, %29 in 0 : vector<1x1024xf32>, vector<1x1024xf32> -> vector<2x1024xf32>
    %c0_i32 = arith.constant 0 : i32
    %31 = arith.cmpi eq, %arg1, %c0_i32 : i32
    %32 = arith.extui %31 : i1 to i32
    %c0_i32_17 = arith.constant 0 : i32
    %33 = arith.cmpi ne, %32, %c0_i32_17 : i32
    scf.if %33 {
      %c0_20 = arith.constant 0 : index
      %c0_21 = arith.constant 0 : index
      %c0_22 = arith.constant 0 : index
      %37 = vector.load %arg7[%c0_20, %c0_21, %c0_22] : memref<1x1x1024xf32, #tpu.memory_space<vmem>>, vector<1x1x1024xf32>
      %38 = vector.shape_cast %37 : vector<1x1x1024xf32> to vector<1x1024xf32>
      %39 = vector.shape_cast %22 : vector<1x1024xf32> to vector<1x1x1024xf32>
      tpu.vector_store %arg7[%c0_20, %c0_21, %c0_22], %39 {strides = array<i32>} : memref<1x1x1024xf32, #tpu.memory_space<vmem>>, vector<1x1x1024xf32>,
      %c0_23 = arith.constant 0 : index
      %c0_24 = arith.constant 0 : index
      %c0_25 = arith.constant 0 : index
      %40 = vector.load %arg8[%c0_23, %c0_24, %c0_25] : memref<1x1x1024xf32, #tpu.memory_space<vmem>>, vector<1x1x1024xf32>
      %41 = vector.shape_cast %40 : vector<1x1x1024xf32> to vector<1x1024xf32>
      %42 = vector.shape_cast %24 : vector<1x1024xf32> to vector<1x1x1024xf32>
      tpu.vector_store %arg8[%c0_23, %c0_24, %c0_25], %42 {strides = array<i32>} : memref<1x1x1024xf32, #tpu.memory_space<vmem>>, vector<1x1x1024xf32>,
      %c0_26 = arith.constant 0 : index
      %c0_27 = arith.constant 0 : index
      %c0_28 = arith.constant 0 : index
      %43 = vector.load %arg9[%c0_26, %c0_27, %c0_28] : memref<1x2x1024xf32, #tpu.memory_space<vmem>>, vector<1x2x1024xf32>
      %44 = vector.shape_cast %43 : vector<1x2x1024xf32> to vector<2x1024xf32>
      %45 = vector.shape_cast %30 : vector<2x1024xf32> to vector<1x2x1024xf32>
      tpu.vector_store %arg9[%c0_26, %c0_27, %c0_28], %45 {strides = array<i32>} : memref<1x2x1024xf32, #tpu.memory_space<vmem>>, vector<1x2x1024xf32>,
    } else {
    }
    %c0_i32_18 = arith.constant 0 : i32
    %34 = arith.cmpi sgt, %arg1, %c0_i32_18 : i32
    %35 = arith.extui %34 : i1 to i32
    %c0_i32_19 = arith.constant 0 : i32
    %36 = arith.cmpi ne, %35, %c0_i32_19 : i32
    scf.if %36 {
      %c0_20 = arith.constant 0 : index
      %c0_21 = arith.constant 0 : index
      %c0_22 = arith.constant 0 : index
      %37 = vector.load %arg7[%c0_20, %c0_21, %c0_22] : memref<1x1x1024xf32, #tpu.memory_space<vmem>>, vector<1x1x1024xf32>
      %38 = vector.shape_cast %37 : vector<1x1x1024xf32> to vector<1x1024xf32>
      %39 = arith.maximumf %38, %22 : vector<1x1024xf32>
      %c0_23 = arith.constant 0 : index
      %c0_24 = arith.constant 0 : index
      %c0_25 = arith.constant 0 : index
      %40 = vector.load %arg7[%c0_23, %c0_24, %c0_25] : memref<1x1x1024xf32, #tpu.memory_space<vmem>>, vector<1x1x1024xf32>
      %41 = vector.shape_cast %40 : vector<1x1x1024xf32> to vector<1x1024xf32>
      %42 = vector.shape_cast %39 : vector<1x1024xf32> to vector<1x1x1024xf32>
      tpu.vector_store %arg7[%c0_23, %c0_24, %c0_25], %42 {strides = array<i32>} : memref<1x1x1024xf32, #tpu.memory_space<vmem>>, vector<1x1x1024xf32>,
      %c0_26 = arith.constant 0 : index
      %c0_27 = arith.constant 0 : index
      %c0_28 = arith.constant 0 : index
      %43 = vector.load %arg8[%c0_26, %c0_27, %c0_28] : memref<1x1x1024xf32, #tpu.memory_space<vmem>>, vector<1x1x1024xf32>
      %44 = vector.shape_cast %43 : vector<1x1x1024xf32> to vector<1x1024xf32>
      %45 = arith.minimumf %44, %24 : vector<1x1024xf32>
      %c0_29 = arith.constant 0 : index
      %c0_30 = arith.constant 0 : index
      %c0_31 = arith.constant 0 : index
      %46 = vector.load %arg8[%c0_29, %c0_30, %c0_31] : memref<1x1x1024xf32, #tpu.memory_space<vmem>>, vector<1x1x1024xf32>
      %47 = vector.shape_cast %46 : vector<1x1x1024xf32> to vector<1x1024xf32>
      %48 = vector.shape_cast %45 : vector<1x1024xf32> to vector<1x1x1024xf32>
      tpu.vector_store %arg8[%c0_29, %c0_30, %c0_31], %48 {strides = array<i32>} : memref<1x1x1024xf32, #tpu.memory_space<vmem>>, vector<1x1x1024xf32>,
      %c0_32 = arith.constant 0 : index
      %c0_33 = arith.constant 0 : index
      %c0_34 = arith.constant 0 : index
      %49 = vector.load %arg9[%c0_32, %c0_33, %c0_34] : memref<1x2x1024xf32, #tpu.memory_space<vmem>>, vector<1x2x1024xf32>
      %50 = vector.shape_cast %49 : vector<1x2x1024xf32> to vector<2x1024xf32>
      %51 = arith.addf %50, %30 : vector<2x1024xf32>
      %c0_35 = arith.constant 0 : index
      %c0_36 = arith.constant 0 : index
      %c0_37 = arith.constant 0 : index
      %52 = vector.load %arg9[%c0_35, %c0_36, %c0_37] : memref<1x2x1024xf32, #tpu.memory_space<vmem>>, vector<1x2x1024xf32>
      %53 = vector.shape_cast %52 : vector<1x2x1024xf32> to vector<2x1024xf32>
      %54 = vector.shape_cast %51 : vector<2x1024xf32> to vector<1x2x1024xf32>
      tpu.vector_store %arg9[%c0_35, %c0_36, %c0_37], %54 {strides = array<i32>} : memref<1x2x1024xf32, #tpu.memory_space<vmem>>, vector<1x2x1024xf32>,
    } else {
    }
    return
  }
  func.func @transform_0(%arg0: i32, %arg1: i32) -> (i32, i32, i32) {
    %c0_i32 = arith.constant 0 : i32
    %c0_i32_0 = arith.constant 0 : i32
    return %arg0, %arg1, %c0_i32 : i32, i32, i32
  }
  func.func @transform_1(%arg0: i32, %arg1: i32) -> (i32, i32, i32) {
    %c0_i32 = arith.constant 0 : i32
    %c0_i32_0 = arith.constant 0 : i32
    return %arg0, %arg1, %c0_i32 : i32, i32, i32
  }
  func.func @transform_2(%arg0: i32, %arg1: i32) -> (i32, i32) {
    %c0_i32 = arith.constant 0 : i32
    %c0_i32_0 = arith.constant 0 : i32
    %c0_i32_1 = arith.constant 0 : i32
    return %c0_i32, %c0_i32_0 : i32, i32
  }
  func.func @transform_3(%arg0: i32, %arg1: i32) -> (i32, i32) {
    %c0_i32 = arith.constant 0 : i32
    %c0_i32_0 = arith.constant 0 : i32
    %c0_i32_1 = arith.constant 0 : i32
    return %c0_i32, %c0_i32_0 : i32, i32
  }
  func.func @transform_4(%arg0: i32, %arg1: i32) -> (i32, i32) {
    %c0_i32 = arith.constant 0 : i32
    %c0_i32_0 = arith.constant 0 : i32
    %c0_i32_1 = arith.constant 0 : i32
    return %c0_i32, %c0_i32_0 : i32, i32
  }
  func.func @transform_5(%arg0: i32, %arg1: i32) -> (i32, i32, i32) {
    %c0_i32 = arith.constant 0 : i32
    %c0_i32_0 = arith.constant 0 : i32
    %c0_i32_1 = arith.constant 0 : i32
    return %arg0, %c0_i32, %c0_i32_0 : i32, i32, i32
  }
  func.func @transform_6(%arg0: i32, %arg1: i32) -> (i32, i32, i32) {
    %c0_i32 = arith.constant 0 : i32
    %c0_i32_0 = arith.constant 0 : i32
    %c0_i32_1 = arith.constant 0 : i32
    return %arg0, %c0_i32, %c0_i32_0 : i32, i32, i32
  }
  func.func @transform_7(%arg0: i32, %arg1: i32) -> (i32, i32, i32) {
    %c0_i32 = arith.constant 0 : i32
    %c0_i32_0 = arith.constant 0 : i32
    %c0_i32_1 = arith.constant 0 : i32
    return %arg0, %c0_i32, %c0_i32_0 : i32, i32, i32
  }
}

module attributes {stable_mosaic.version = 11 : i64} {
  func.func @_tail_kernel(%arg0: memref<2x1024xf32, #tpu.memory_space<vmem>>, %arg1: memref<1024x512xf32, #tpu.memory_space<vmem>>, %arg2: memref<1x512xf32, #tpu.memory_space<vmem>>, %arg3: memref<1x512xf32, #tpu.memory_space<vmem>>, %arg4: memref<512x256xf32, #tpu.memory_space<vmem>>, %arg5: memref<1x256xf32, #tpu.memory_space<vmem>>, %arg6: memref<1x256xf32, #tpu.memory_space<vmem>>, %arg7: memref<256x128xf32, #tpu.memory_space<vmem>>, %arg8: memref<1x128xf32, #tpu.memory_space<vmem>>, %arg9: memref<2x128xf32, #tpu.memory_space<vmem>>) attributes {dimension_semantics = [], scalar_prefetch = 0 : i64, scratch_operands = 0 : i64, tpu.core_type = #tpu.core_type<tc>} {
    %c0 = arith.constant 0 : index
    %c0_0 = arith.constant 0 : index
    %0 = vector.load %arg0[%c0, %c0_0] : memref<2x1024xf32, #tpu.memory_space<vmem>>, vector<2x1024xf32>
    %c0_1 = arith.constant 0 : index
    %c0_2 = arith.constant 0 : index
    %1 = vector.load %arg1[%c0_1, %c0_2] : memref<1024x512xf32, #tpu.memory_space<vmem>>, vector<1024x512xf32>
    %cst = arith.constant dense<0.000000e+00> : vector<2x512xf32>
    %2 = tpu.matmul %0, %1, %cst {dimension_numbers = #tpu.dot_dimension_numbers<[1], [0], [0], [1], [0, 0, 1, 1], [], []>} : vector<2x1024xf32>, vector<1024x512xf32>, vector<2x512xf32> -> vector<2x512xf32>
    %c0_3 = arith.constant 0 : index
    %c0_4 = arith.constant 0 : index
    %3 = vector.load %arg2[%c0_3, %c0_4] : memref<1x512xf32, #tpu.memory_space<vmem>>, vector<1x512xf32>
    %c0_5 = arith.constant 0 : index
    %c0_6 = arith.constant 0 : index
    %4 = vector.load %arg3[%c0_5, %c0_6] : memref<1x512xf32, #tpu.memory_space<vmem>>, vector<1x512xf32>
    %cst_7 = arith.constant dense<0.000000e+00> : vector<512xf32>
    %5 = vector.multi_reduction <add>, %2, %cst_7 [0] : vector<2x512xf32> to vector<512xf32>
    %6 = vector.shape_cast %5 : vector<512xf32> to vector<1x512xf32>
    %cst_8 = arith.constant 2.000000e+00 : f32
    %7 = vector.broadcast %cst_8 : f32 to vector<1x512xf32>
    %8 = arith.divf %6, %7 : vector<1x512xf32>
    %9 = vector.broadcast %8 : vector<1x512xf32> to vector<2x512xf32>
    %10 = arith.subf %2, %9 : vector<2x512xf32>
    %11 = arith.mulf %10, %10 : vector<2x512xf32>
    %cst_9 = arith.constant dense<0.000000e+00> : vector<512xf32>
    %12 = vector.multi_reduction <add>, %11, %cst_9 [0] : vector<2x512xf32> to vector<512xf32>
    %13 = vector.shape_cast %12 : vector<512xf32> to vector<1x512xf32>
    %cst_10 = arith.constant 2.000000e+00 : f32
    %14 = vector.broadcast %cst_10 : f32 to vector<1x512xf32>
    %15 = arith.divf %13, %14 : vector<1x512xf32>
    %16 = vector.broadcast %8 : vector<1x512xf32> to vector<2x512xf32>
    %17 = arith.subf %2, %16 : vector<2x512xf32>
    %cst_11 = arith.constant 9.99999974E-6 : f32
    %18 = vector.broadcast %cst_11 : f32 to vector<1x512xf32>
    %19 = arith.addf %15, %18 : vector<1x512xf32>
    %20 = math.rsqrt %19 : vector<1x512xf32>
    %21 = vector.broadcast %20 : vector<1x512xf32> to vector<2x512xf32>
    %22 = arith.mulf %17, %21 : vector<2x512xf32>
    %23 = vector.broadcast %3 : vector<1x512xf32> to vector<2x512xf32>
    %24 = arith.mulf %22, %23 : vector<2x512xf32>
    %25 = vector.broadcast %4 : vector<1x512xf32> to vector<2x512xf32>
    %26 = arith.addf %24, %25 : vector<2x512xf32>
    %cst_12 = arith.constant 2.000000e-01 : f32
    %27 = vector.broadcast %cst_12 : f32 to vector<2x512xf32>
    %28 = arith.mulf %27, %26 : vector<2x512xf32>
    %29 = arith.maximumf %26, %28 : vector<2x512xf32>
    %c0_13 = arith.constant 0 : index
    %c0_14 = arith.constant 0 : index
    %30 = vector.load %arg4[%c0_13, %c0_14] : memref<512x256xf32, #tpu.memory_space<vmem>>, vector<512x256xf32>
    %cst_15 = arith.constant dense<0.000000e+00> : vector<2x256xf32>
    %31 = tpu.matmul %29, %30, %cst_15 {dimension_numbers = #tpu.dot_dimension_numbers<[1], [0], [0], [1], [0, 0, 1, 1], [], []>} : vector<2x512xf32>, vector<512x256xf32>, vector<2x256xf32> -> vector<2x256xf32>
    %c0_16 = arith.constant 0 : index
    %c0_17 = arith.constant 0 : index
    %32 = vector.load %arg5[%c0_16, %c0_17] : memref<1x256xf32, #tpu.memory_space<vmem>>, vector<1x256xf32>
    %c0_18 = arith.constant 0 : index
    %c0_19 = arith.constant 0 : index
    %33 = vector.load %arg6[%c0_18, %c0_19] : memref<1x256xf32, #tpu.memory_space<vmem>>, vector<1x256xf32>
    %cst_20 = arith.constant dense<0.000000e+00> : vector<256xf32>
    %34 = vector.multi_reduction <add>, %31, %cst_20 [0] : vector<2x256xf32> to vector<256xf32>
    %35 = vector.shape_cast %34 : vector<256xf32> to vector<1x256xf32>
    %cst_21 = arith.constant 2.000000e+00 : f32
    %36 = vector.broadcast %cst_21 : f32 to vector<1x256xf32>
    %37 = arith.divf %35, %36 : vector<1x256xf32>
    %38 = vector.broadcast %37 : vector<1x256xf32> to vector<2x256xf32>
    %39 = arith.subf %31, %38 : vector<2x256xf32>
    %40 = arith.mulf %39, %39 : vector<2x256xf32>
    %cst_22 = arith.constant dense<0.000000e+00> : vector<256xf32>
    %41 = vector.multi_reduction <add>, %40, %cst_22 [0] : vector<2x256xf32> to vector<256xf32>
    %42 = vector.shape_cast %41 : vector<256xf32> to vector<1x256xf32>
    %cst_23 = arith.constant 2.000000e+00 : f32
    %43 = vector.broadcast %cst_23 : f32 to vector<1x256xf32>
    %44 = arith.divf %42, %43 : vector<1x256xf32>
    %45 = vector.broadcast %37 : vector<1x256xf32> to vector<2x256xf32>
    %46 = arith.subf %31, %45 : vector<2x256xf32>
    %cst_24 = arith.constant 9.99999974E-6 : f32
    %47 = vector.broadcast %cst_24 : f32 to vector<1x256xf32>
    %48 = arith.addf %44, %47 : vector<1x256xf32>
    %49 = math.rsqrt %48 : vector<1x256xf32>
    %50 = vector.broadcast %49 : vector<1x256xf32> to vector<2x256xf32>
    %51 = arith.mulf %46, %50 : vector<2x256xf32>
    %52 = vector.broadcast %32 : vector<1x256xf32> to vector<2x256xf32>
    %53 = arith.mulf %51, %52 : vector<2x256xf32>
    %54 = vector.broadcast %33 : vector<1x256xf32> to vector<2x256xf32>
    %55 = arith.addf %53, %54 : vector<2x256xf32>
    %cst_25 = arith.constant 2.000000e-01 : f32
    %56 = vector.broadcast %cst_25 : f32 to vector<2x256xf32>
    %57 = arith.mulf %56, %55 : vector<2x256xf32>
    %58 = arith.maximumf %55, %57 : vector<2x256xf32>
    %c0_26 = arith.constant 0 : index
    %c0_27 = arith.constant 0 : index
    %59 = vector.load %arg7[%c0_26, %c0_27] : memref<256x128xf32, #tpu.memory_space<vmem>>, vector<256x128xf32>
    %cst_28 = arith.constant dense<0.000000e+00> : vector<2x128xf32>
    %60 = tpu.matmul %58, %59, %cst_28 {dimension_numbers = #tpu.dot_dimension_numbers<[1], [0], [0], [1], [0, 0, 1, 1], [], []>} : vector<2x256xf32>, vector<256x128xf32>, vector<2x128xf32> -> vector<2x128xf32>
    %c0_29 = arith.constant 0 : index
    %c0_30 = arith.constant 0 : index
    %61 = vector.load %arg8[%c0_29, %c0_30] : memref<1x128xf32, #tpu.memory_space<vmem>>, vector<1x128xf32>
    %62 = vector.broadcast %61 : vector<1x128xf32> to vector<2x128xf32>
    %63 = arith.addf %60, %62 : vector<2x128xf32>
    %c0_31 = arith.constant 0 : index
    %c0_32 = arith.constant 0 : index
    %64 = vector.load %arg9[%c0_31, %c0_32] : memref<2x128xf32, #tpu.memory_space<vmem>>, vector<2x128xf32>
    tpu.vector_store %arg9[%c0_31, %c0_32], %63 {strides = array<i32>} : memref<2x128xf32, #tpu.memory_space<vmem>>, vector<2x128xf32>,
    return
  }
}

</mosaic_0001>

<llo_original>
// kernel: transform_net.3
$region0: #{transform_net.3}
  #allocation0 [shape = 'u32[]', space=smem, size = 0x4, offset = 0x4, fixed_abs, tag = 'smem constant byte address 0x4 - core index']
  #allocation1 [shape = 'u32[72,128]{1,0:T(1,128)}', space=vmem, size = 0x9000, scoped, tag = 'internal scratch']
  %s0 = inlined_call_operand.vmem [shape: bf16[8,32,8], index: 0, kind: input, shape index: {}]
  %s1 = inlined_call_operand.vmem [shape: bf16[8,64], index: 1, kind: input, shape index: {}]
  %s2 = inlined_call_operand.vmem [shape: f32[1,64], index: 2, kind: input, shape index: {}]
  %s3 = inlined_call_operand.vmem [shape: f32[1,64], index: 3, kind: input, shape index: {}]
  %s4 = inlined_call_operand.vmem [shape: bf16[64,128], index: 4, kind: input, shape index: {}]
  %s5 = inlined_call_operand.vmem [shape: f32[32,128], index: 5, kind: output, shape index: {0}]
  %s6 = inlined_call_operand.vmem [shape: f32[32,128], index: 6, kind: output, shape index: {1}]
  %s7 = inlined_call_operand.vmem [shape: f32[1,2,128], index: 7, kind: output, shape index: {2}]
  %8 = xla_tuple %s5, %s6, %s7
  %s9 = sld [smem:[#allocation0]]
  $region77: #{transform_net.3} parent=0
    _
  %s11 = ssub.s32 1, %s9
  %s12 = scalar_select 0, %s11, %s9
  loop: start=0, step=1, limit=10
  $region2: #{transform_net.3} parent=0 // loop_pre_header
    _
  $region3: #{transform_net.3} parent=0 // loop_header
    %s14 = sphi 0, %s18
    %p15 = scmp.ge.s32.totalorder %s14, 10
    %s21 = sphi 0, %s33
    %s22 = sphi 0, %s29
    %s23 = sphi 0, %s21
    %s24 = sphi 0, %s22
    %s25 = sphi 0, %s23
    %s26 = sphi 0, %s24
    %s38 = sphi 0, %s40
    %s41 = sphi 0, %s38
    %s42 = sphi 0, %s41
    %s58 = sphi 0, %s42
    %s62 = sphi 0, %s62
    %s64 = sphi 0, %s62
    %s65 = sphi 0, %s64
    %s79 = sphi 0, %s65
    %s83 = sphi 0, %s83
    %s85 = sphi 0, %s83
    %s86 = sphi 0, %s85
    %s100 = sphi 0, %s86
    %s104 = sphi 0, %s104
    %s106 = sphi 0, %s104
    %s107 = sphi 0, %s106
    %s121 = sphi 0, %s107
    %s125 = sphi 0, %s125
    %s127 = sphi 0, %s125
    %s128 = sphi 0, %s127
    %s142 = sphi 0, %s128
    %s148 = sphi 0, %s150
    %s151 = sphi 0, %s148
    %s152 = sphi 0, %s151
    %s168 = sphi 0, %s152
    %s174 = sphi 0, %s176
    %s177 = sphi 0, %s174
    %s178 = sphi 0, %s177
    %s194 = sphi 0, %s178
    %s200 = sphi 0, %s202
    %s203 = sphi 0, %s200
    %s204 = sphi 0, %s203
    %s220 = sphi 0, %s204
  $region4: #{transform_net.3} parent=0 // loop_header_branch
    %17 = sbr.rel (%p15) target = $region8
  $region5: #{transform_net.3} parent=0 // loop_body
    %s19 = ssub.s32 %s14, 1
    %s20 = ssub.s32 %s14, 2
    %s27 = sadd.s32 1, %s22
    %p28 = scmp.ge.s32.totalorder %s27, 8
    %s29 = scalar_select %p28, 0, %s27
    %s30 = sadd.s32 1, %s21
    %s31 = scalar_select %p28, %s30, %s21
    %p32 = scmp.ge.s32.totalorder %s31, 1
    %s33 = scalar_select %p32, 0, %s31
    %s34 = ssub.s32 %s22, %s29
    %s35 = ssub.s32 %s21, %s33
    %s36 = sor.u32 %s34, %s35
    %p37 = scmp.eq.s32.totalorder %s36, 0
    %s39 = sadd.s32 %s38, 1
    %s40 = scalar_select %p37, %s38, %s39
    %p43 = pneg %p37
    %p44 = scmp.eq.s32.totalorder %s14, 7
    %p45 = por %p43, %p44
    %p46 = scmp.ne.s32.totalorder %s38, %s41
    %p47 = scmp.eq.s32.totalorder %s14, 0
    %p48 = por %p46, %p47
    %p49 = scmp.ne.s32.totalorder %s38, %s41
    %p50 = scmp.eq.s32.totalorder %s19, 7
    %p51 = por %p49, %p50
    %p52 = scmp.ne.s32.totalorder %s41, %s42
    %p53 = scmp.eq.s32.totalorder %s19, 0
    %p54 = por %p52, %p53
    %p55 = scmp.ne.s32.totalorder %s41, %s42
    %p56 = scmp.eq.s32.totalorder %s20, 7
    %p57 = por %p55, %p56
    %p59 = scmp.ne.s32.totalorder %s42, %s58
    %p60 = scmp.eq.s32.totalorder %s20, 0
    %p61 = por %p59, %p60
    %s63 = sadd.s32 %s62, 1
    %p66 = scmp.eq.s32.totalorder %s14, 7
    %p67 = scmp.ne.s32.totalorder %s62, %s64
    %p68 = scmp.eq.s32.totalorder %s14, 0
    %p69 = por %p67, %p68
    %p70 = scmp.ne.s32.totalorder %s62, %s64
    %p71 = scmp.eq.s32.totalorder %s19, 7
    %p72 = por %p70, %p71
    %p73 = scmp.ne.s32.totalorder %s64, %s65
    %p74 = scmp.eq.s32.totalorder %s19, 0
    %p75 = por %p73, %p74
    %p76 = scmp.ne.s32.totalorder %s64, %s65
    %p77 = scmp.eq.s32.totalorder %s20, 7
    %p78 = por %p76, %p77
    %p80 = scmp.ne.s32.totalorder %s65, %s79
    %p81 = scmp.eq.s32.totalorder %s20, 0
    %p82 = por %p80, %p81
    %s84 = sadd.s32 %s83, 1
    %p87 = scmp.eq.s32.totalorder %s14, 7
    %p88 = scmp.ne.s32.totalorder %s83, %s85
    %p89 = scmp.eq.s32.totalorder %s14, 0
    %p90 = por %p88, %p89
    %p91 = scmp.ne.s32.totalorder %s83, %s85
    %p92 = scmp.eq.s32.totalorder %s19, 7
    %p93 = por %p91, %p92
    %p94 = scmp.ne.s32.totalorder %s85, %s86
    %p95 = scmp.eq.s32.totalorder %s19, 0
    %p96 = por %p94, %p95
    %p97 = scmp.ne.s32.totalorder %s85, %s86
    %p98 = scmp.eq.s32.totalorder %s20, 7
    %p99 = por %p97, %p98
    %p101 = scmp.ne.s32.totalorder %s86, %s100
    %p102 = scmp.eq.s32.totalorder %s20, 0
    %p103 = por %p101, %p102
    %s105 = sadd.s32 %s104, 1
    %p108 = scmp.eq.s32.totalorder %s14, 7
    %p109 = scmp.ne.s32.totalorder %s104, %s106
    %p110 = scmp.eq.s32.totalorder %s14, 0
    %p111 = por %p109, %p110
    %p112 = scmp.ne.s32.totalorder %s104, %s106
    %p113 = scmp.eq.s32.totalorder %s19, 7
    %p114 = por %p112, %p113
    %p115 = scmp.ne.s32.totalorder %s106, %s107
    %p116 = scmp.eq.s32.totalorder %s19, 0
    %p117 = por %p115, %p116
    %p118 = scmp.ne.s32.totalorder %s106, %s107
    %p119 = scmp.eq.s32.totalorder %s20, 7
    %p120 = por %p118, %p119
    %p122 = scmp.ne.s32.totalorder %s107, %s121
    %p123 = scmp.eq.s32.totalorder %s20, 0
    %p124 = por %p122, %p123
    %s126 = sadd.s32 %s125, 1
    %p129 = scmp.eq.s32.totalorder %s14, 7
    %p130 = scmp.ne.s32.totalorder %s125, %s127
    %p131 = scmp.eq.s32.totalorder %s14, 0
    %p132 = por %p130, %p131
    %p133 = scmp.ne.s32.totalorder %s125, %s127
    %p134 = scmp.eq.s32.totalorder %s19, 7
    %p135 = por %p133, %p134
    %p136 = scmp.ne.s32.totalorder %s127, %s128
    %p137 = scmp.eq.s32.totalorder %s19, 0
    %p138 = por %p136, %p137
    %p139 = scmp.ne.s32.totalorder %s127, %s128
    %p140 = scmp.eq.s32.totalorder %s20, 7
    %p141 = por %p139, %p140
    %p143 = scmp.ne.s32.totalorder %s128, %s142
    %p144 = scmp.eq.s32.totalorder %s20, 0
    %p145 = por %p143, %p144
    %s146 = ssub.s32 %s21, %s33
    %p147 = scmp.eq.s32.totalorder %s146, 0
    %s149 = sadd.s32 %s148, 1
    %s150 = scalar_select %p147, %s148, %s149
    %p153 = pneg %p147
    %p154 = scmp.eq.s32.totalorder %s14, 7
    %p155 = por %p153, %p154
    %p156 = scmp.ne.s32.totalorder %s148, %s151
    %p157 = scmp.eq.s32.totalorder %s14, 0
    %p158 = por %p156, %p157
    %p159 = scmp.ne.s32.totalorder %s148, %s151
    %p160 = scmp.eq.s32.totalorder %s19, 7
    %p161 = por %p159, %p160
    %p162 = scmp.ne.s32.totalorder %s151, %s152
    %p163 = scmp.eq.s32.totalorder %s19, 0
    %p164 = por %p162, %p163
    %p165 = scmp.ne.s32.totalorder %s151, %s152
    %p166 = scmp.eq.s32.totalorder %s20, 7
    %p167 = por %p165, %p166
    %p169 = scmp.ne.s32.totalorder %s152, %s168
    %p170 = scmp.eq.s32.totalorder %s20, 0
    %p171 = por %p169, %p170
    %s172 = ssub.s32 %s21, %s33
    %p173 = scmp.eq.s32.totalorder %s172, 0
    %s175 = sadd.s32 %s174, 1
    %s176 = scalar_select %p173, %s174, %s175
    %p179 = pneg %p173
    %p180 = scmp.eq.s32.totalorder %s14, 7
    %p181 = por %p179, %p180
    %p182 = scmp.ne.s32.totalorder %s174, %s177
    %p183 = scmp.eq.s32.totalorder %s14, 0
    %p184 = por %p182, %p183
    %p185 = scmp.ne.s32.totalorder %s174, %s177
    %p186 = scmp.eq.s32.totalorder %s19, 7
    %p187 = por %p185, %p186
    %p188 = scmp.ne.s32.totalorder %s177, %s178
    %p189 = scmp.eq.s32.totalorder %s19, 0
    %p190 = por %p188, %p189
    %p191 = scmp.ne.s32.totalorder %s177, %s178
    %p192 = scmp.eq.s32.totalorder %s20, 7
    %p193 = por %p191, %p192
    %p195 = scmp.ne.s32.totalorder %s178, %s194
    %p196 = scmp.eq.s32.totalorder %s20, 0
    %p197 = por %p195, %p196
    %s198 = ssub.s32 %s21, %s33
    %p199 = scmp.eq.s32.totalorder %s198, 0
    %s201 = sadd.s32 %s200, 1
    %s202 = scalar_select %p199, %s200, %s201
    %p205 = pneg %p199
    %p206 = scmp.eq.s32.totalorder %s14, 7
    %p207 = por %p205, %p206
    %p208 = scmp.ne.s32.totalorder %s200, %s203
    %p209 = scmp.eq.s32.totalorder %s14, 0
    %p210 = por %p208, %p209
    %p211 = scmp.ne.s32.totalorder %s200, %s203
    %p212 = scmp.eq.s32.totalorder %s19, 7
    %p213 = por %p211, %p212
    %p214 = scmp.ne.s32.totalorder %s203, %s204
    %p215 = scmp.eq.s32.totalorder %s19, 0
    %p216 = por %p214, %p215
    %p217 = scmp.ne.s32.totalorder %s203, %s204
    %p218 = scmp.eq.s32.totalorder %s20, 7
    %p219 = por %p217, %p218
    %p221 = scmp.ne.s32.totalorder %s204, %s220
    %p222 = scmp.eq.s32.totalorder %s20, 0
    %p223 = por %p221, %p222
    %p224 = scmp.le.s32.totalorder 1, %s14
    %p225 = scmp.lt.s32.totalorder %s14, 9
    %p226 = pnand %p224, %p225
    %p227 = pneg %p226
    // Predicated region
    $region9: #{transform_net.3} parent=5 // pred_check
      _
    $region10: #{transform_net.3} parent=5 // pred_check_branch
      %229 = sbr.rel (%p226) target = $region12
    $region11: #{transform_net.3} parent=5 // pred_region
      %s230 = ssub.s32 %s14, 1
      // Predicated region
      $region13: #{transform_net.3} parent=11 // pred_check
        %p231 = pneg %p75
      $region14: #{transform_net.3} parent=11 // pred_check_branch
        %233 = sbr.rel (%p231) target = $region16
      $region15: #{transform_net.3} parent=11 // pred_region
        _
      $region16: #{transform_net.3} parent=11 // pred_fallthru
        _
      // Predicated region
      $region17: #{transform_net.3} parent=11 // pred_check
        %p234 = pneg %p96
      $region18: #{transform_net.3} parent=11 // pred_check_branch
        %236 = sbr.rel (%p234) target = $region20
      $region19: #{transform_net.3} parent=11 // pred_region
        _
      $region20: #{transform_net.3} parent=11 // pred_fallthru
        _
      // Predicated region
      $region21: #{transform_net.3} parent=11 // pred_check
        %p237 = pneg %p117
      $region22: #{transform_net.3} parent=11 // pred_check_branch
        %239 = sbr.rel (%p237) target = $region24
      $region23: #{transform_net.3} parent=11 // pred_region
        _
      $region24: #{transform_net.3} parent=11 // pred_fallthru
        _
      // Predicated region
      $region25: #{transform_net.3} parent=11 // pred_check
        %p240 = pneg %p138
      $region26: #{transform_net.3} parent=11 // pred_check_branch
        %242 = sbr.rel (%p240) target = $region28
      $region27: #{transform_net.3} parent=11 // pred_region
        _
      $region28: #{transform_net.3} parent=11 // pred_fallthru
        _
    $region12: #{transform_net.3} parent=5 // pred_fallthru
      _
    %p243 = scmp.lt.s32.totalorder %s14, 8
    // Predicated region
    $region29: #{transform_net.3} parent=5 // pred_check
      %p244 = pneg %p243
    $region30: #{transform_net.3} parent=5 // pred_check_branch
      %246 = sbr.rel (%p244) target = $region32
    $region31: #{transform_net.3} parent=5 // pred_region
      // Predicated region
      $region33: #{transform_net.3} parent=31 // pred_check
        %p247 = pneg %p48
      $region34: #{transform_net.3} parent=31 // pred_check_branch
        %249 = sbr.rel (%p247) target = $region36
      $region35: #{transform_net.3} parent=31 // pred_region
        %s250 = smul.u32 4, %s21
        %p251 = scmp.lt.s32.totalorder %s22, 7
        %s252 = scalar_select %p251, %s22, 7
        %p253 = scmp.lt.s32.totalorder %s250, 3
        %s254 = scalar_select %p253, %s250, 3
        %s255 = smul.addr %s252, 4
        %s256 = sadd.s32 %s254, %s255
        %s257 = smul.addr %s256, 4
        %s258 = scalar_lea.vmem %s0, %s257
        %s259 = smul.u32 4, %s21
      $region36: #{transform_net.3} parent=31 // pred_fallthru
        _
    $region32: #{transform_net.3} parent=5 // pred_fallthru
      _
    %p260 = scmp.le.s32.totalorder 1, %s14
    %p261 = scmp.lt.s32.totalorder %s14, 9
    %p262 = pnand %p260, %p261
    %p263 = pneg %p262
    // Predicated region
    $region37: #{transform_net.3} parent=5 // pred_check
      _
    $region38: #{transform_net.3} parent=5 // pred_check_branch
      %265 = sbr.rel (%p262) target = $region40
    $region39: #{transform_net.3} parent=5 // pred_region
      %s266 = ssub.s32 %s14, 1
      %s267 = smul.u32 4, %s23
      %p268 = scmp.lt.s32.totalorder %s24, 7
      %s269 = scalar_select %p268, %s24, 7
      %p270 = scmp.lt.s32.totalorder %s267, 3
      %s271 = scalar_select %p270, %s267, 3
      %s272 = smul.addr %s269, 4
      %s273 = sadd.s32 %s271, %s272
      %s274 = smul.addr %s273, 4
      %s275 = scalar_lea.vmem %s0, %s274
      %p276 = pneg %p54
      %p277 = pneg %p51
      %p278 = pneg %p75
      %p279 = pneg %p72
      %p280 = pneg %p96
      %p281 = pneg %p93
      %p282 = pneg %p117
      %p283 = pneg %p114
      %p284 = pneg %p138
      %p285 = pneg %p135
      %p286 = pneg %p164
      %p287 = pneg %p161
      %s288 = smul.u32 4, %s23
      %p289 = scmp.lt.s32.totalorder %s288, 3
      %s290 = scalar_select %p289, %s288, 3
      %s291 = smul.addr %s290, 8
      %s292 = scalar_lea.vmem %s5, %s291
      %p293 = pneg %p190
      %p294 = pneg %p187
      %s295 = smul.u32 4, %s23
      %p296 = scmp.lt.s32.totalorder %s295, 3
      %s297 = scalar_select %p296, %s295, 3
      %s298 = smul.addr %s297, 8
      %s299 = scalar_lea.vmem %s6, %s298
      %p300 = pneg %p216
      %p301 = pneg %p213
      %p302 = scmp.lt.s32.totalorder %s23, 0
      %s303 = scalar_select %p302, %s23, 0
      %s304 = smul.addr %s303, 2
      %s305 = scalar_lea.vmem %s7, %s304
      %s306 = smul.u32 4, %s23
      %p307 = scmp.lt.s32.totalorder %s24, 7
      %s308 = scalar_select %p307, %s24, 7
      %p309 = scmp.lt.s32.totalorder %s306, 3
      %s310 = scalar_select %p309, %s306, 3
      %s311 = smul.addr %s308, 4
      %s312 = sadd.s32 %s310, %s311
      %s313 = smul.addr %s312, 4
      %s314 = scalar_lea.vmem %s0, %s313
      %s315 = smul.u32 4, %s23
      %s316 = smul.u32 4, %s23
      %p317 = scmp.lt.s32.totalorder %s316, 3
      %s318 = scalar_select %p317, %s316, 3
      %s319 = smul.addr %s318, 8
      %s320 = scalar_lea.vmem %s5, %s319
      %s321 = smul.u32 4, %s23
      %s322 = smul.u32 4, %s23
      %p323 = scmp.lt.s32.totalorder %s322, 3
      %s324 = scalar_select %p323, %s322, 3
      %s325 = smul.addr %s324, 8
      %s326 = scalar_lea.vmem %s6, %s325
      %s327 = smul.u32 4, %s23
      %p328 = scmp.lt.s32.totalorder %s23, 0
      %s329 = scalar_select %p328, %s23, 0
      %s330 = smul.addr %s329, 2
      %s331 = scalar_lea.vmem %s7, %s330
      %v333 = vld [vmem:[%s314] sm:$0xf]
      %v334 = vld [vmem:[%s314 + $0x4] sm:$0xf]
      %v335 = vld [vmem:[%s314 + $0x8] sm:$0xf]
      %v336 = vld [vmem:[%s314 + $0xc] sm:$0xf]
      %v337 = vld [vmem:[%s1] sm:$0xf]
      %v342 = vunpack.c.l.b16 %v333
      %v343 = vunpack.c.l.b16 %v334
      %v344 = vunpack.c.l.b16 %v335
      %v345 = vunpack.c.l.b16 %v336
      %v346 = vpack.c.b16 %v343, %v342
      %v347 = vpack.c.b16 %v345, %v344
      %vm348 = vcmask 64512
      %v350 = vsel %vm348, %v346, 0
      %v353 = vsel %vm348, %v347, 0
      %vm355 = vcmask 1043456
      %v357 = vsel %vm355, %v337, 0
      %359 = vmatpush.bf16.msra.mxu0 0
      %360 = vmatpush.bf16.msra.mxu0 0
      %361 = vmatpush.bf16.msra.mxu0 0
      %362 = vmatpush.bf16.msra.mxu0 0
      %363 = vmatpush.bf16.msra.mxu0 0
      %364 = vmatpush.bf16.msra.mxu0 0
      %365 = vmatpush.bf16.msra.mxu0 0
      %366 = vmatpush.bf16.msra.mxu0 %v357
      %367 = vmatmul.bf16.gmra.mxu0 %v350
      %v368 = vpop.f32.mrf.mxu0
      %v369 = vadd.f32 0.0, %v368
      %v370 = vpop.f32.mrf.mxu0
      %v371 = vadd.f32 0.0, %v370
      %372 = vmatmul.bf16.gmra.mxu0 %v353
      %v373 = vpop.f32.mrf.mxu0
      %v374 = vadd.f32 0.0, %v373
      %v375 = vpop.f32.mrf.mxu0
      %v376 = vadd.f32 0.0, %v375
      %377 = vdwg.mxu0
      %v378 = vld [vmem:[%s2] sm:$0x1]
      %v380 = vperm.slane %v378, 0
      %v382 = vmul.f32 %v369, %v380
      %v383 = vmul.f32 %v371, %v380
      %v384 = vmul.f32 %v374, %v380
      %v385 = vmul.f32 %v376, %v380
      %v386 = vld [vmem:[%s3] sm:$0x1]
      %v388 = vperm.slane %v386, 0
      %v390 = vadd.f32 %v382, %v388
      %v391 = vadd.f32 %v383, %v388
      %v392 = vadd.f32 %v384, %v388
      %v393 = vadd.f32 %v385, %v388
      %v394 = vmul.f32 %v390, 0.2
      %v395 = vmul.f32 %v391, 0.2
      %v396 = vmul.f32 %v392, 0.2
      %v397 = vmul.f32 %v393, 0.2
      %v398 = vmax.f32 %v390, %v394
      %v399 = vmax.f32 %v391, %v395
      %v400 = vmax.f32 %v392, %v396
      %v401 = vmax.f32 %v393, %v397
      %v402 = vpack.c.bf16 %v399, %v398
      %v403 = vpack.c.bf16 %v401, %v400
      %v404 = vld [vmem:[%s4] sm:$0xf]
      %v405 = vld [vmem:[%s4 + $0x4] sm:$0xf]
      %v406 = vld [vmem:[%s4 + $0x8] sm:$0xf]
      %v407 = vld [vmem:[%s4 + $0xc] sm:$0xf]
      %v408 = vld [vmem:[%s4 + $0x10] sm:$0xf]
      %v409 = vld [vmem:[%s4 + $0x14] sm:$0xf]
      %v410 = vld [vmem:[%s4 + $0x18] sm:$0xf]
      %v411 = vld [vmem:[%s4 + $0x1c] sm:$0xf]
      %v420 = vunpack.c.l.b16 %v404
      %v421 = vunpack.c.l.b16 %v405
      %v422 = vunpack.c.l.b16 %v406
      %v423 = vunpack.c.l.b16 %v407
      %v424 = vunpack.c.l.b16 %v408
      %v425 = vunpack.c.l.b16 %v409
      %v426 = vunpack.c.l.b16 %v410
      %v427 = vunpack.c.l.b16 %v411
      %v428 = vpack.c.b16 %v421, %v420
      %v429 = vpack.c.b16 %v423, %v422
      %v430 = vpack.c.b16 %v425, %v424
      %v431 = vpack.c.b16 %v427, %v426
      %vm436 = vcmask 523264
      %v438 = vsel %vm436, %v402, 0
      %v441 = vsel %vm436, %v403, 0
      %443 = vmatpush.bf16.msra.mxu0 0
      %444 = vmatpush.bf16.msra.mxu0 0
      %445 = vmatpush.bf16.msra.mxu0 0
      %446 = vmatpush.bf16.msra.mxu0 0
      %447 = vmatpush.bf16.msra.mxu0 %v431
      %448 = vmatpush.bf16.msra.mxu0 %v430
      %449 = vmatpush.bf16.msra.mxu0 %v429
      %450 = vmatpush.bf16.msra.mxu0 %v428
      %451 = vmatmul.bf16.gmra.mxu0 %v438
      %v452 = vpop.f32.mrf.mxu0
      %v453 = vadd.f32 0.0, %v452
      %v454 = vpop.f32.mrf.mxu0
      %v455 = vadd.f32 0.0, %v454
      %456 = vmatmul.bf16.gmra.mxu0 %v441
      %v457 = vpop.f32.mrf.mxu0
      %v458 = vadd.f32 0.0, %v457
      %v459 = vpop.f32.mrf.mxu0
      %v460 = vadd.f32 0.0, %v459
      %461 = vdwg.mxu0
      %v462 = vadd.f32 %v453, %v455
      %v463 = vadd.f32 %v462, %v458
      %v464 = vadd.f32 %v463, %v460
      %v465 = vrot.slane %v464, 4
      %v466 = vadd.f32 %v464, %v465
      %v467 = vrot.slane %v466, 2
      %v468 = vadd.f32 %v466, %v467
      %v469 = vrot.slane %v468, 1
      %v470 = vadd.f32 %v468, %v469
      %v471 = vmul.f32 %v453, %v453
      %v472 = vmul.f32 %v455, %v455
      %v473 = vmul.f32 %v458, %v458
      %v474 = vmul.f32 %v460, %v460
      %v475 = vadd.f32 %v471, %v472
      %v476 = vadd.f32 %v475, %v473
      %v477 = vadd.f32 %v476, %v474
      %v478 = vrot.slane %v477, 4
      %v479 = vadd.f32 %v477, %v478
      %v480 = vrot.slane %v479, 2
      %v481 = vadd.f32 %v479, %v480
      %v482 = vrot.slane %v481, 1
      %v483 = vadd.f32 %v481, %v482
      %vm484 = vcmask 1040384
      %v485 = vsel %vm484, %v470, %v483
      %p486 = scmp.eq.s32.totalorder %s24, 0
      // Predicated region
      $region41: #{transform_net.3} parent=39 // pred_check
        %p487 = pneg %p486
      $region42: #{transform_net.3} parent=39 // pred_check_branch
        %489 = sbr.rel (%p487) target = $region44
      $region43: #{transform_net.3} parent=39 // pred_region
        %490 = vst [vmem:[%s320] sm:$0xff] %v453
        %491 = vst [vmem:[%s320 + $0x8] sm:$0xff] %v455
        %492 = vst [vmem:[%s320 + $0x10] sm:$0xff] %v458
        %493 = vst [vmem:[%s320 + $0x18] sm:$0xff] %v460
        %494 = vst [vmem:[%s326] sm:$0xff] %v453
        %495 = vst [vmem:[%s326 + $0x8] sm:$0xff] %v455
        %496 = vst [vmem:[%s326 + $0x10] sm:$0xff] %v458
        %497 = vst [vmem:[%s326 + $0x18] sm:$0xff] %v460
        %498 = vst [vmem:[%s331] sm:$0x3] %v485
      $region44: #{transform_net.3} parent=39 // pred_fallthru
        _
      %p499 = scmp.gt.s32.totalorder %s24, 0
      // Predicated region
      $region45: #{transform_net.3} parent=39 // pred_check
        %p500 = pneg %p499
      $region46: #{transform_net.3} parent=39 // pred_check_branch
        %502 = sbr.rel (%p500) target = $region48
      $region47: #{transform_net.3} parent=39 // pred_region
        %v503 = vld [vmem:[%s320] sm:$0xff]
        %v504 = vld [vmem:[%s320 + $0x8] sm:$0xff]
        %v505 = vld [vmem:[%s320 + $0x10] sm:$0xff]
        %v506 = vld [vmem:[%s320 + $0x18] sm:$0xff]
        %v507 = vmax.f32 %v503, %v453
        %v508 = vmax.f32 %v504, %v455
        %v509 = vmax.f32 %v505, %v458
        %v510 = vmax.f32 %v506, %v460
        %511 = vst [vmem:[%s320] sm:$0xff] %v507
        %512 = vst [vmem:[%s320 + $0x8] sm:$0xff] %v508
        %513 = vst [vmem:[%s320 + $0x10] sm:$0xff] %v509
        %514 = vst [vmem:[%s320 + $0x18] sm:$0xff] %v510
        %v515 = vld [vmem:[%s326] sm:$0xff]
        %v516 = vld [vmem:[%s326 + $0x8] sm:$0xff]
        %v517 = vld [vmem:[%s326 + $0x10] sm:$0xff]
        %v518 = vld [vmem:[%s326 + $0x18] sm:$0xff]
        %v519 = vmin.f32 %v515, %v453
        %v520 = vmin.f32 %v516, %v455
        %v521 = vmin.f32 %v517, %v458
        %v522 = vmin.f32 %v518, %v460
        %523 = vst [vmem:[%s326] sm:$0xff] %v519
        %524 = vst [vmem:[%s326 + $0x8] sm:$0xff] %v520
        %525 = vst [vmem:[%s326 + $0x10] sm:$0xff] %v521
        %526 = vst [vmem:[%s326 + $0x18] sm:$0xff] %v522
        %v527 = vld [vmem:[%s331] sm:$0x3]
        %v528 = vadd.f32 %v527, %v485
        %529 = vst [vmem:[%s331] sm:$0x3] %v528
      $region48: #{transform_net.3} parent=39 // pred_fallthru
        _
      %s530 = smul.u32 4, %s23
      %p531 = scmp.lt.s32.totalorder %s530, 3
      %s532 = scalar_select %p531, %s530, 3
      %s533 = smul.addr %s532, 8
      %s534 = scalar_lea.vmem %s5, %s533
      %s535 = smul.u32 4, %s23
      %p536 = scmp.lt.s32.totalorder %s535, 3
      %s537 = scalar_select %p536, %s535, 3
      %s538 = smul.addr %s537, 8
      %s539 = scalar_lea.vmem %s6, %s538
      %p540 = scmp.lt.s32.totalorder %s23, 0
      %s541 = scalar_select %p540, %s23, 0
      %s542 = smul.addr %s541, 2
      %s543 = scalar_lea.vmem %s7, %s542
      // Predicated region
      $region49: #{transform_net.3} parent=39 // pred_check
        %p544 = pneg %p161
      $region50: #{transform_net.3} parent=39 // pred_check_branch
        %546 = sbr.rel (%p544) target = $region52
      $region51: #{transform_net.3} parent=39 // pred_region
        %s547 = smul.u32 4, %s23
      $region52: #{transform_net.3} parent=39 // pred_fallthru
        _
      // Predicated region
      $region53: #{transform_net.3} parent=39 // pred_check
        %p548 = pneg %p187
      $region54: #{transform_net.3} parent=39 // pred_check_branch
        %550 = sbr.rel (%p548) target = $region56
      $region55: #{transform_net.3} parent=39 // pred_region
        %s551 = smul.u32 4, %s23
      $region56: #{transform_net.3} parent=39 // pred_fallthru
        _
      // Predicated region
      $region57: #{transform_net.3} parent=39 // pred_check
        %p552 = pneg %p213
      $region58: #{transform_net.3} parent=39 // pred_check_branch
        %554 = sbr.rel (%p552) target = $region60
      $region59: #{transform_net.3} parent=39 // pred_region
        _
      $region60: #{transform_net.3} parent=39 // pred_fallthru
        _
      // Predicated region
      $region61: #{transform_net.3} parent=39 // pred_check
        %p555 = pneg %p161
      $region62: #{transform_net.3} parent=39 // pred_check_branch
        %557 = sbr.rel (%p555) target = $region64
      $region63: #{transform_net.3} parent=39 // pred_region
        %s558 = smul.u32 4, %s23
        %p559 = scmp.lt.s32.totalorder %s558, 3
        %s560 = scalar_select %p559, %s558, 3
        %s561 = smul.addr %s560, 8
        %s562 = scalar_lea.vmem %s5, %s561
      $region64: #{transform_net.3} parent=39 // pred_fallthru
        _
      // Predicated region
      $region65: #{transform_net.3} parent=39 // pred_check
        %p563 = pneg %p187
      $region66: #{transform_net.3} parent=39 // pred_check_branch
        %565 = sbr.rel (%p563) target = $region68
      $region67: #{transform_net.3} parent=39 // pred_region
        %s566 = smul.u32 4, %s23
        %p567 = scmp.lt.s32.totalorder %s566, 3
        %s568 = scalar_select %p567, %s566, 3
        %s569 = smul.addr %s568, 8
        %s570 = scalar_lea.vmem %s6, %s569
      $region68: #{transform_net.3} parent=39 // pred_fallthru
        _
      // Predicated region
      $region69: #{transform_net.3} parent=39 // pred_check
        %p571 = pneg %p213
      $region70: #{transform_net.3} parent=39 // pred_check_branch
        %573 = sbr.rel (%p571) target = $region72
      $region71: #{transform_net.3} parent=39 // pred_region
        %p574 = scmp.lt.s32.totalorder %s23, 0
        %s575 = scalar_select %p574, %s23, 0
        %s576 = smul.addr %s575, 2
        %s577 = scalar_lea.vmem %s7, %s576
      $region72: #{transform_net.3} parent=39 // pred_fallthru
        _
    $region40: #{transform_net.3} parent=5 // pred_fallthru
      _
    %p578 = scmp.le.s32.totalorder 2, %s14
    // Predicated region
    $region73: #{transform_net.3} parent=5 // pred_check
      %p579 = pneg %p578
    $region74: #{transform_net.3} parent=5 // pred_check_branch
      %581 = sbr.rel (%p579) target = $region76
    $region75: #{transform_net.3} parent=5 // pred_region
      %s582 = ssub.s32 %s14, 2
    $region76: #{transform_net.3} parent=5 // pred_fallthru
      _
  $region6: #{transform_net.3} parent=0 // loop_footer
    %s18 = sadd.s32 1, %s14
  $region7: #{transform_net.3} parent=0 // loop_footer_branch
    %13 = sbr.rel target = $region3
  $region8: #{transform_net.3} parent=0 // loop_exit
    _

// kernel: transform_net.4
$region0: #{transform_net.4}
  #allocation0 [shape = 'u32[]', space=smem, size = 0x4, offset = 0x4, fixed_abs, tag = 'smem constant byte address 0x4 - core index']
  #allocation1 [shape = 'u32[72,128]{1,0:T(1,128)}', space=vmem, size = 0x9000, scoped, tag = 'internal scratch']
  %s0 = inlined_call_operand.vmem [shape: f32[2,16,128], index: 0, kind: input, shape index: {}]
  %s1 = inlined_call_operand.vmem [shape: f32[2,16,128], index: 1, kind: input, shape index: {}]
  %s2 = inlined_call_operand.vmem [shape: f32[1,128], index: 2, kind: input, shape index: {}]
  %s3 = inlined_call_operand.vmem [shape: f32[1,128], index: 3, kind: input, shape index: {}]
  %s4 = inlined_call_operand.vmem [shape: bf16[128,1024], index: 4, kind: input, shape index: {}]
  %s5 = inlined_call_operand.vmem [shape: f32[2,1,1024], index: 5, kind: output, shape index: {0}]
  %s6 = inlined_call_operand.vmem [shape: f32[2,1,1024], index: 6, kind: output, shape index: {1}]
  %s7 = inlined_call_operand.vmem [shape: f32[2,2,1024], index: 7, kind: output, shape index: {2}]
  %8 = xla_tuple %s5, %s6, %s7
  %s9 = sld [smem:[#allocation0]]
  $region77: #{transform_net.4} parent=0
    _
  %s11 = ssub.s32 1, %s9
  %s12 = scalar_select 0, %s11, %s9
  loop: start=0, step=1, limit=4
  $region2: #{transform_net.4} parent=0 // loop_pre_header
    _
  $region3: #{transform_net.4} parent=0 // loop_header
    %s14 = sphi 0, %s18
    %p15 = scmp.ge.s32.totalorder %s14, 4
    %s21 = sphi 0, %s33
    %s22 = sphi 0, %s29
    %s23 = sphi 0, %s21
    %s24 = sphi 0, %s22
    %s25 = sphi 0, %s23
    %s26 = sphi 0, %s24
    %s38 = sphi 0, %s40
    %s41 = sphi 0, %s38
    %s42 = sphi 0, %s41
    %s58 = sphi 0, %s42
    %s66 = sphi 0, %s68
    %s69 = sphi 0, %s66
    %s70 = sphi 0, %s69
    %s86 = sphi 0, %s70
    %s90 = sphi 0, %s90
    %s92 = sphi 0, %s90
    %s93 = sphi 0, %s92
    %s107 = sphi 0, %s93
    %s111 = sphi 0, %s111
    %s113 = sphi 0, %s111
    %s114 = sphi 0, %s113
    %s128 = sphi 0, %s114
    %s132 = sphi 0, %s132
    %s134 = sphi 0, %s132
    %s135 = sphi 0, %s134
    %s149 = sphi 0, %s135
    %s155 = sphi 0, %s157
    %s158 = sphi 0, %s155
    %s159 = sphi 0, %s158
    %s175 = sphi 0, %s159
    %s181 = sphi 0, %s183
    %s184 = sphi 0, %s181
    %s185 = sphi 0, %s184
    %s201 = sphi 0, %s185
    %s207 = sphi 0, %s209
    %s210 = sphi 0, %s207
    %s211 = sphi 0, %s210
    %s227 = sphi 0, %s211
  $region4: #{transform_net.4} parent=0 // loop_header_branch
    %17 = sbr.rel (%p15) target = $region8
  $region5: #{transform_net.4} parent=0 // loop_body
    %s19 = ssub.s32 %s14, 1
    %s20 = ssub.s32 %s14, 2
    %s27 = sadd.s32 1, %s22
    %p28 = scmp.ge.s32.totalorder %s27, 1
    %s29 = scalar_select %p28, 0, %s27
    %s30 = sadd.s32 1, %s21
    %s31 = scalar_select %p28, %s30, %s21
    %p32 = scmp.ge.s32.totalorder %s31, 2
    %s33 = scalar_select %p32, 0, %s31
    %s34 = ssub.s32 %s21, %s33
    %s35 = ssub.s32 %s22, %s29
    %s36 = sor.u32 %s34, %s35
    %p37 = scmp.eq.s32.totalorder %s36, 0
    %s39 = sadd.s32 %s38, 1
    %s40 = scalar_select %p37, %s38, %s39
    %p43 = pneg %p37
    %p44 = scmp.eq.s32.totalorder %s14, 1
    %p45 = por %p43, %p44
    %p46 = scmp.ne.s32.totalorder %s38, %s41
    %p47 = scmp.eq.s32.totalorder %s14, 0
    %p48 = por %p46, %p47
    %p49 = scmp.ne.s32.totalorder %s38, %s41
    %p50 = scmp.eq.s32.totalorder %s19, 1
    %p51 = por %p49, %p50
    %p52 = scmp.ne.s32.totalorder %s41, %s42
    %p53 = scmp.eq.s32.totalorder %s19, 0
    %p54 = por %p52, %p53
    %p55 = scmp.ne.s32.totalorder %s41, %s42
    %p56 = scmp.eq.s32.totalorder %s20, 1
    %p57 = por %p55, %p56
    %p59 = scmp.ne.s32.totalorder %s42, %s58
    %p60 = scmp.eq.s32.totalorder %s20, 0
    %p61 = por %p59, %p60
    %s62 = ssub.s32 %s21, %s33
    %s63 = ssub.s32 %s22, %s29
    %s64 = sor.u32 %s62, %s63
    %p65 = scmp.eq.s32.totalorder %s64, 0
    %s67 = sadd.s32 %s66, 1
    %s68 = scalar_select %p65, %s66, %s67
    %p71 = pneg %p65
    %p72 = scmp.eq.s32.totalorder %s14, 1
    %p73 = por %p71, %p72
    %p74 = scmp.ne.s32.totalorder %s66, %s69
    %p75 = scmp.eq.s32.totalorder %s14, 0
    %p76 = por %p74, %p75
    %p77 = scmp.ne.s32.totalorder %s66, %s69
    %p78 = scmp.eq.s32.totalorder %s19, 1
    %p79 = por %p77, %p78
    %p80 = scmp.ne.s32.totalorder %s69, %s70
    %p81 = scmp.eq.s32.totalorder %s19, 0
    %p82 = por %p80, %p81
    %p83 = scmp.ne.s32.totalorder %s69, %s70
    %p84 = scmp.eq.s32.totalorder %s20, 1
    %p85 = por %p83, %p84
    %p87 = scmp.ne.s32.totalorder %s70, %s86
    %p88 = scmp.eq.s32.totalorder %s20, 0
    %p89 = por %p87, %p88
    %s91 = sadd.s32 %s90, 1
    %p94 = scmp.eq.s32.totalorder %s14, 1
    %p95 = scmp.ne.s32.totalorder %s90, %s92
    %p96 = scmp.eq.s32.totalorder %s14, 0
    %p97 = por %p95, %p96
    %p98 = scmp.ne.s32.totalorder %s90, %s92
    %p99 = scmp.eq.s32.totalorder %s19, 1
    %p100 = por %p98, %p99
    %p101 = scmp.ne.s32.totalorder %s92, %s93
    %p102 = scmp.eq.s32.totalorder %s19, 0
    %p103 = por %p101, %p102
    %p104 = scmp.ne.s32.totalorder %s92, %s93
    %p105 = scmp.eq.s32.totalorder %s20, 1
    %p106 = por %p104, %p105
    %p108 = scmp.ne.s32.totalorder %s93, %s107
    %p109 = scmp.eq.s32.totalorder %s20, 0
    %p110 = por %p108, %p109
    %s112 = sadd.s32 %s111, 1
    %p115 = scmp.eq.s32.totalorder %s14, 1
    %p116 = scmp.ne.s32.totalorder %s111, %s113
    %p117 = scmp.eq.s32.totalorder %s14, 0
    %p118 = por %p116, %p117
    %p119 = scmp.ne.s32.totalorder %s111, %s113
    %p120 = scmp.eq.s32.totalorder %s19, 1
    %p121 = por %p119, %p120
    %p122 = scmp.ne.s32.totalorder %s113, %s114
    %p123 = scmp.eq.s32.totalorder %s19, 0
    %p124 = por %p122, %p123
    %p125 = scmp.ne.s32.totalorder %s113, %s114
    %p126 = scmp.eq.s32.totalorder %s20, 1
    %p127 = por %p125, %p126
    %p129 = scmp.ne.s32.totalorder %s114, %s128
    %p130 = scmp.eq.s32.totalorder %s20, 0
    %p131 = por %p129, %p130
    %s133 = sadd.s32 %s132, 1
    %p136 = scmp.eq.s32.totalorder %s14, 1
    %p137 = scmp.ne.s32.totalorder %s132, %s134
    %p138 = scmp.eq.s32.totalorder %s14, 0
    %p139 = por %p137, %p138
    %p140 = scmp.ne.s32.totalorder %s132, %s134
    %p141 = scmp.eq.s32.totalorder %s19, 1
    %p142 = por %p140, %p141
    %p143 = scmp.ne.s32.totalorder %s134, %s135
    %p144 = scmp.eq.s32.totalorder %s19, 0
    %p145 = por %p143, %p144
    %p146 = scmp.ne.s32.totalorder %s134, %s135
    %p147 = scmp.eq.s32.totalorder %s20, 1
    %p148 = por %p146, %p147
    %p150 = scmp.ne.s32.totalorder %s135, %s149
    %p151 = scmp.eq.s32.totalorder %s20, 0
    %p152 = por %p150, %p151
    %s153 = ssub.s32 %s21, %s33
    %p154 = scmp.eq.s32.totalorder %s153, 0
    %s156 = sadd.s32 %s155, 1
    %s157 = scalar_select %p154, %s155, %s156
    %p160 = pneg %p154
    %p161 = scmp.eq.s32.totalorder %s14, 1
    %p162 = por %p160, %p161
    %p163 = scmp.ne.s32.totalorder %s155, %s158
    %p164 = scmp.eq.s32.totalorder %s14, 0
    %p165 = por %p163, %p164
    %p166 = scmp.ne.s32.totalorder %s155, %s158
    %p167 = scmp.eq.s32.totalorder %s19, 1
    %p168 = por %p166, %p167
    %p169 = scmp.ne.s32.totalorder %s158, %s159
    %p170 = scmp.eq.s32.totalorder %s19, 0
    %p171 = por %p169, %p170
    %p172 = scmp.ne.s32.totalorder %s158, %s159
    %p173 = scmp.eq.s32.totalorder %s20, 1
    %p174 = por %p172, %p173
    %p176 = scmp.ne.s32.totalorder %s159, %s175
    %p177 = scmp.eq.s32.totalorder %s20, 0
    %p178 = por %p176, %p177
    %s179 = ssub.s32 %s21, %s33
    %p180 = scmp.eq.s32.totalorder %s179, 0
    %s182 = sadd.s32 %s181, 1
    %s183 = scalar_select %p180, %s181, %s182
    %p186 = pneg %p180
    %p187 = scmp.eq.s32.totalorder %s14, 1
    %p188 = por %p186, %p187
    %p189 = scmp.ne.s32.totalorder %s181, %s184
    %p190 = scmp.eq.s32.totalorder %s14, 0
    %p191 = por %p189, %p190
    %p192 = scmp.ne.s32.totalorder %s181, %s184
    %p193 = scmp.eq.s32.totalorder %s19, 1
    %p194 = por %p192, %p193
    %p195 = scmp.ne.s32.totalorder %s184, %s185
    %p196 = scmp.eq.s32.totalorder %s19, 0
    %p197 = por %p195, %p196
    %p198 = scmp.ne.s32.totalorder %s184, %s185
    %p199 = scmp.eq.s32.totalorder %s20, 1
    %p200 = por %p198, %p199
    %p202 = scmp.ne.s32.totalorder %s185, %s201
    %p203 = scmp.eq.s32.totalorder %s20, 0
    %p204 = por %p202, %p203
    %s205 = ssub.s32 %s21, %s33
    %p206 = scmp.eq.s32.totalorder %s205, 0
    %s208 = sadd.s32 %s207, 1
    %s209 = scalar_select %p206, %s207, %s208
    %p212 = pneg %p206
    %p213 = scmp.eq.s32.totalorder %s14, 1
    %p214 = por %p212, %p213
    %p215 = scmp.ne.s32.totalorder %s207, %s210
    %p216 = scmp.eq.s32.totalorder %s14, 0
    %p217 = por %p215, %p216
    %p218 = scmp.ne.s32.totalorder %s207, %s210
    %p219 = scmp.eq.s32.totalorder %s19, 1
    %p220 = por %p218, %p219
    %p221 = scmp.ne.s32.totalorder %s210, %s211
    %p222 = scmp.eq.s32.totalorder %s19, 0
    %p223 = por %p221, %p222
    %p224 = scmp.ne.s32.totalorder %s210, %s211
    %p225 = scmp.eq.s32.totalorder %s20, 1
    %p226 = por %p224, %p225
    %p228 = scmp.ne.s32.totalorder %s211, %s227
    %p229 = scmp.eq.s32.totalorder %s20, 0
    %p230 = por %p228, %p229
    %p231 = scmp.le.s32.totalorder 1, %s14
    %p232 = scmp.lt.s32.totalorder %s14, 3
    %p233 = pnand %p231, %p232
    %p234 = pneg %p233
    // Predicated region
    $region9: #{transform_net.4} parent=5 // pred_check
      _
    $region10: #{transform_net.4} parent=5 // pred_check_branch
      %236 = sbr.rel (%p233) target = $region12
    $region11: #{transform_net.4} parent=5 // pred_region
      %s237 = ssub.s32 %s14, 1
      // Predicated region
      $region13: #{transform_net.4} parent=11 // pred_check
        %p238 = pneg %p103
      $region14: #{transform_net.4} parent=11 // pred_check_branch
        %240 = sbr.rel (%p238) target = $region16
      $region15: #{transform_net.4} parent=11 // pred_region
        _
      $region16: #{transform_net.4} parent=11 // pred_fallthru
        _
      // Predicated region
      $region17: #{transform_net.4} parent=11 // pred_check
        %p241 = pneg %p124
      $region18: #{transform_net.4} parent=11 // pred_check_branch
        %243 = sbr.rel (%p241) target = $region20
      $region19: #{transform_net.4} parent=11 // pred_region
        _
      $region20: #{transform_net.4} parent=11 // pred_fallthru
        _
      // Predicated region
      $region21: #{transform_net.4} parent=11 // pred_check
        %p244 = pneg %p145
      $region22: #{transform_net.4} parent=11 // pred_check_branch
        %246 = sbr.rel (%p244) target = $region24
      $region23: #{transform_net.4} parent=11 // pred_region
        _
      $region24: #{transform_net.4} parent=11 // pred_fallthru
        _
    $region12: #{transform_net.4} parent=5 // pred_fallthru
      _
    %p247 = scmp.lt.s32.totalorder %s14, 2
    // Predicated region
    $region25: #{transform_net.4} parent=5 // pred_check
      %p248 = pneg %p247
    $region26: #{transform_net.4} parent=5 // pred_check_branch
      %250 = sbr.rel (%p248) target = $region28
    $region27: #{transform_net.4} parent=5 // pred_region
      // Predicated region
      $region29: #{transform_net.4} parent=27 // pred_check
        %p251 = pneg %p48
      $region30: #{transform_net.4} parent=27 // pred_check_branch
        %253 = sbr.rel (%p251) target = $region32
      $region31: #{transform_net.4} parent=27 // pred_region
        %s254 = smul.u32 2, %s22
        %p255 = scmp.lt.s32.totalorder %s21, 1
        %s256 = scalar_select %p255, %s21, 1
        %p257 = scmp.lt.s32.totalorder %s254, 1
        %s258 = scalar_select %p257, %s254, 1
        %s259 = smul.addr %s256, 2
        %s260 = sadd.s32 %s258, %s259
        %s261 = smul.addr %s260, 8
        %s262 = scalar_lea.vmem %s0, %s261
        %s263 = smul.u32 2, %s22
      $region32: #{transform_net.4} parent=27 // pred_fallthru
        _
      // Predicated region
      $region33: #{transform_net.4} parent=27 // pred_check
        %p264 = pneg %p76
      $region34: #{transform_net.4} parent=27 // pred_check_branch
        %266 = sbr.rel (%p264) target = $region36
      $region35: #{transform_net.4} parent=27 // pred_region
        %s267 = smul.u32 2, %s22
        %p268 = scmp.lt.s32.totalorder %s21, 1
        %s269 = scalar_select %p268, %s21, 1
        %p270 = scmp.lt.s32.totalorder %s267, 1
        %s271 = scalar_select %p270, %s267, 1
        %s272 = smul.addr %s269, 2
        %s273 = sadd.s32 %s271, %s272
        %s274 = smul.addr %s273, 8
        %s275 = scalar_lea.vmem %s1, %s274
        %s276 = smul.u32 2, %s22
      $region36: #{transform_net.4} parent=27 // pred_fallthru
        _
    $region28: #{transform_net.4} parent=5 // pred_fallthru
      _
    %p277 = scmp.le.s32.totalorder 1, %s14
    %p278 = scmp.lt.s32.totalorder %s14, 3
    %p279 = pnand %p277, %p278
    %p280 = pneg %p279
    // Predicated region
    $region37: #{transform_net.4} parent=5 // pred_check
      _
    $region38: #{transform_net.4} parent=5 // pred_check_branch
      %282 = sbr.rel (%p279) target = $region40
    $region39: #{transform_net.4} parent=5 // pred_region
      %s283 = ssub.s32 %s14, 1
      %s284 = smul.u32 2, %s24
      %p285 = scmp.lt.s32.totalorder %s23, 1
      %s286 = scalar_select %p285, %s23, 1
      %p287 = scmp.lt.s32.totalorder %s284, 1
      %s288 = scalar_select %p287, %s284, 1
      %s289 = smul.addr %s286, 2
      %s290 = sadd.s32 %s288, %s289
      %s291 = smul.addr %s290, 8
      %s292 = scalar_lea.vmem %s0, %s291
      %p293 = pneg %p54
      %p294 = pneg %p51
      %s295 = smul.u32 2, %s24
      %p296 = scmp.lt.s32.totalorder %s23, 1
      %s297 = scalar_select %p296, %s23, 1
      %p298 = scmp.lt.s32.totalorder %s295, 1
      %s299 = scalar_select %p298, %s295, 1
      %s300 = smul.addr %s297, 2
      %s301 = sadd.s32 %s299, %s300
      %s302 = smul.addr %s301, 8
      %s303 = scalar_lea.vmem %s1, %s302
      %p304 = pneg %p82
      %p305 = pneg %p79
      %p306 = pneg %p103
      %p307 = pneg %p100
      %p308 = pneg %p124
      %p309 = pneg %p121
      %p310 = pneg %p145
      %p311 = pneg %p142
      %p312 = pneg %p171
      %p313 = pneg %p168
      %p314 = scmp.lt.s32.totalorder %s23, 1
      %s315 = scalar_select %p314, %s23, 1
      %s316 = smul.addr %s315, 8
      %s317 = scalar_lea.vmem %s5, %s316
      %p318 = pneg %p197
      %p319 = pneg %p194
      %p320 = scmp.lt.s32.totalorder %s23, 1
      %s321 = scalar_select %p320, %s23, 1
      %s322 = smul.addr %s321, 8
      %s323 = scalar_lea.vmem %s6, %s322
      %p324 = pneg %p223
      %p325 = pneg %p220
      %p326 = scmp.lt.s32.totalorder %s23, 1
      %s327 = scalar_select %p326, %s23, 1
      %s328 = smul.addr %s327, 8
      %s329 = smul.addr %s328, 2
      %s330 = scalar_lea.vmem %s7, %s329
      %s331 = smul.u32 2, %s24
      %p332 = scmp.lt.s32.totalorder %s23, 1
      %s333 = scalar_select %p332, %s23, 1
      %p334 = scmp.lt.s32.totalorder %s331, 1
      %s335 = scalar_select %p334, %s331, 1
      %s336 = smul.addr %s333, 2
      %s337 = sadd.s32 %s335, %s336
      %s338 = smul.addr %s337, 8
      %s339 = scalar_lea.vmem %s0, %s338
      %s340 = smul.u32 2, %s24
      %s341 = smul.u32 2, %s24
      %p342 = scmp.lt.s32.totalorder %s23, 1
      %s343 = scalar_select %p342, %s23, 1
      %p344 = scmp.lt.s32.totalorder %s341, 1
      %s345 = scalar_select %p344, %s341, 1
      %s346 = smul.addr %s343, 2
      %s347 = sadd.s32 %s345, %s346
      %s348 = smul.addr %s347, 8
      %s349 = scalar_lea.vmem %s1, %s348
      %s350 = smul.u32 2, %s24
      %p351 = scmp.lt.s32.totalorder %s23, 1
      %s352 = scalar_select %p351, %s23, 1
      %s353 = smul.addr %s352, 8
      %s354 = scalar_lea.vmem %s5, %s353
      %p355 = scmp.lt.s32.totalorder %s23, 1
      %s356 = scalar_select %p355, %s23, 1
      %s357 = smul.addr %s356, 8
      %s358 = scalar_lea.vmem %s6, %s357
      %p359 = scmp.lt.s32.totalorder %s23, 1
      %s360 = scalar_select %p359, %s23, 1
      %s361 = smul.addr %s360, 8
      %s362 = smul.addr %s361, 2
      %s363 = scalar_lea.vmem %s7, %s362
      %v364 = vld [vmem:[%s2] sm:$0x1]
      %vm365 = vcmp.ge.f32.partialorder %v364, 0.0
      %v366 = vld [vmem:[%s339] sm:$0xff]
      %v367 = vld [vmem:[%s339 + $0x8] sm:$0xff]
      %v368 = vld [vmem:[%s349] sm:$0xff]
      %v369 = vld [vmem:[%s349 + $0x8] sm:$0xff]
      %v370 = vsel %vm365, 1, 0
      %v371 = vperm.slane %v370, 0
      %vm372 = vcmp.eq.s32.totalorder %v371, 1
      %v373 = vsel %vm372, %v366, %v368
      %v374 = vsel %vm372, %v367, %v369
      %v376 = vperm.slane %v364, 0
      %v378 = vmul.f32 %v373, %v376
      %v379 = vmul.f32 %v374, %v376
      %v380 = vld [vmem:[%s3] sm:$0x1]
      %v382 = vperm.slane %v380, 0
      %v384 = vadd.f32 %v378, %v382
      %v385 = vadd.f32 %v379, %v382
      %v386 = vmul.f32 %v384, 0.2
      %v387 = vmul.f32 %v385, 0.2
      %v388 = vmax.f32 %v384, %v386
      %v389 = vmax.f32 %v385, %v387
      %v390 = vpack.c.bf16 %v389, %v388
      %v391 = vld [vmem:[%s4] sm:$0xff]
      %v392 = vld [vmem:[%s4 + $0x8] sm:$0xff]
      %v393 = vld [vmem:[%s4 + $0x10] sm:$0xff]
      %v394 = vld [vmem:[%s4 + $0x18] sm:$0xff]
      %v395 = vld [vmem:[%s4 + $0x20] sm:$0xff]
      %v396 = vld [vmem:[%s4 + $0x28] sm:$0xff]
      %v397 = vld [vmem:[%s4 + $0x30] sm:$0xff]
      %v398 = vld [vmem:[%s4 + $0x38] sm:$0xff]
      %v399 = vld [vmem:[%s4 + $0x40] sm:$0xff]
      %v400 = vld [vmem:[%s4 + $0x48] sm:$0xff]
      %v401 = vld [vmem:[%s4 + $0x50] sm:$0xff]
      %v402 = vld [vmem:[%s4 + $0x58] sm:$0xff]
      %v403 = vld [vmem:[%s4 + $0x60] sm:$0xff]
      %v404 = vld [vmem:[%s4 + $0x68] sm:$0xff]
      %v405 = vld [vmem:[%s4 + $0x70] sm:$0xff]
      %v406 = vld [vmem:[%s4 + $0x78] sm:$0xff]
      %v407 = vld [vmem:[%s4 + $0x80] sm:$0xff]
      %v408 = vld [vmem:[%s4 + $0x88] sm:$0xff]
      %v409 = vld [vmem:[%s4 + $0x90] sm:$0xff]
      %v410 = vld [vmem:[%s4 + $0x98] sm:$0xff]
      %v411 = vld [vmem:[%s4 + $0xa0] sm:$0xff]
      %v412 = vld [vmem:[%s4 + $0xa8] sm:$0xff]
      %v413 = vld [vmem:[%s4 + $0xb0] sm:$0xff]
      %v414 = vld [vmem:[%s4 + $0xb8] sm:$0xff]
      %v415 = vld [vmem:[%s4 + $0xc0] sm:$0xff]
      %v416 = vld [vmem:[%s4 + $0xc8] sm:$0xff]
      %v417 = vld [vmem:[%s4 + $0xd0] sm:$0xff]
      %v418 = vld [vmem:[%s4 + $0xd8] sm:$0xff]
      %v419 = vld [vmem:[%s4 + $0xe0] sm:$0xff]
      %v420 = vld [vmem:[%s4 + $0xe8] sm:$0xff]
      %v421 = vld [vmem:[%s4 + $0xf0] sm:$0xff]
      %v422 = vld [vmem:[%s4 + $0xf8] sm:$0xff]
      %v423 = vld [vmem:[%s4 + $0x100] sm:$0xff]
      %v424 = vld [vmem:[%s4 + $0x108] sm:$0xff]
      %v425 = vld [vmem:[%s4 + $0x110] sm:$0xff]
      %v426 = vld [vmem:[%s4 + $0x118] sm:$0xff]
      %v427 = vld [vmem:[%s4 + $0x120] sm:$0xff]
      %v428 = vld [vmem:[%s4 + $0x128] sm:$0xff]
      %v429 = vld [vmem:[%s4 + $0x130] sm:$0xff]
      %v430 = vld [vmem:[%s4 + $0x138] sm:$0xff]
      %v431 = vld [vmem:[%s4 + $0x140] sm:$0xff]
      %v432 = vld [vmem:[%s4 + $0x148] sm:$0xff]
      %v433 = vld [vmem:[%s4 + $0x150] sm:$0xff]
      %v434 = vld [vmem:[%s4 + $0x158] sm:$0xff]
      %v435 = vld [vmem:[%s4 + $0x160] sm:$0xff]
      %v436 = vld [vmem:[%s4 + $0x168] sm:$0xff]
      %v437 = vld [vmem:[%s4 + $0x170] sm:$0xff]
      %v438 = vld [vmem:[%s4 + $0x178] sm:$0xff]
      %v439 = vld [vmem:[%s4 + $0x180] sm:$0xff]
      %v440 = vld [vmem:[%s4 + $0x188] sm:$0xff]
      %v441 = vld [vmem:[%s4 + $0x190] sm:$0xff]
      %v442 = vld [vmem:[%s4 + $0x198] sm:$0xff]
      %v443 = vld [vmem:[%s4 + $0x1a0] sm:$0xff]
      %v444 = vld [vmem:[%s4 + $0x1a8] sm:$0xff]
      %v445 = vld [vmem:[%s4 + $0x1b0] sm:$0xff]
      %v446 = vld [vmem:[%s4 + $0x1b8] sm:$0xff]
      %v447 = vld [vmem:[%s4 + $0x1c0] sm:$0xff]
      %v448 = vld [vmem:[%s4 + $0x1c8] sm:$0xff]
      %v449 = vld [vmem:[%s4 + $0x1d0] sm:$0xff]
      %v450 = vld [vmem:[%s4 + $0x1d8] sm:$0xff]
      %v451 = vld [vmem:[%s4 + $0x1e0] sm:$0xff]
      %v452 = vld [vmem:[%s4 + $0x1e8] sm:$0xff]
      %v453 = vld [vmem:[%s4 + $0x1f0] sm:$0xff]
      %v454 = vld [vmem:[%s4 + $0x1f8] sm:$0xff]
      %v519 = vunpack.c.l.b16 %v391
      %v520 = vunpack.c.h.b16 %v391
      %v521 = vunpack.c.l.b16 %v392
      %v522 = vunpack.c.h.b16 %v392
      %v523 = vunpack.c.l.b16 %v393
      %v524 = vunpack.c.h.b16 %v393
      %v525 = vunpack.c.l.b16 %v394
      %v526 = vunpack.c.h.b16 %v394
      %v527 = vunpack.c.l.b16 %v395
      %v528 = vunpack.c.h.b16 %v395
      %v529 = vunpack.c.l.b16 %v396
      %v530 = vunpack.c.h.b16 %v396
      %v531 = vunpack.c.l.b16 %v397
      %v532 = vunpack.c.h.b16 %v397
      %v533 = vunpack.c.l.b16 %v398
      %v534 = vunpack.c.h.b16 %v398
      %v535 = vunpack.c.l.b16 %v399
      %v536 = vunpack.c.h.b16 %v399
      %v537 = vunpack.c.l.b16 %v400
      %v538 = vunpack.c.h.b16 %v400
      %v539 = vunpack.c.l.b16 %v401
      %v540 = vunpack.c.h.b16 %v401
      %v541 = vunpack.c.l.b16 %v402
      %v542 = vunpack.c.h.b16 %v402
      %v543 = vunpack.c.l.b16 %v403
      %v544 = vunpack.c.h.b16 %v403
      %v545 = vunpack.c.l.b16 %v404
      %v546 = vunpack.c.h.b16 %v404
      %v547 = vunpack.c.l.b16 %v405
      %v548 = vunpack.c.h.b16 %v405
      %v549 = vunpack.c.l.b16 %v406
      %v550 = vunpack.c.h.b16 %v406
      %v551 = vunpack.c.l.b16 %v407
      %v552 = vunpack.c.h.b16 %v407
      %v553 = vunpack.c.l.b16 %v408
      %v554 = vunpack.c.h.b16 %v408
      %v555 = vunpack.c.l.b16 %v409
      %v556 = vunpack.c.h.b16 %v409
      %v557 = vunpack.c.l.b16 %v410
      %v558 = vunpack.c.h.b16 %v410
      %v559 = vunpack.c.l.b16 %v411
      %v560 = vunpack.c.h.b16 %v411
      %v561 = vunpack.c.l.b16 %v412
      %v562 = vunpack.c.h.b16 %v412
      %v563 = vunpack.c.l.b16 %v413
      %v564 = vunpack.c.h.b16 %v413
      %v565 = vunpack.c.l.b16 %v414
      %v566 = vunpack.c.h.b16 %v414
      %v567 = vunpack.c.l.b16 %v415
      %v568 = vunpack.c.h.b16 %v415
      %v569 = vunpack.c.l.b16 %v416
      %v570 = vunpack.c.h.b16 %v416
      %v571 = vunpack.c.l.b16 %v417
      %v572 = vunpack.c.h.b16 %v417
      %v573 = vunpack.c.l.b16 %v418
      %v574 = vunpack.c.h.b16 %v418
      %v575 = vunpack.c.l.b16 %v419
      %v576 = vunpack.c.h.b16 %v419
      %v577 = vunpack.c.l.b16 %v420
      %v578 = vunpack.c.h.b16 %v420
      %v579 = vunpack.c.l.b16 %v421
      %v580 = vunpack.c.h.b16 %v421
      %v581 = vunpack.c.l.b16 %v422
      %v582 = vunpack.c.h.b16 %v422
      %v583 = vunpack.c.l.b16 %v423
      %v584 = vunpack.c.h.b16 %v423
      %v585 = vunpack.c.l.b16 %v424
      %v586 = vunpack.c.h.b16 %v424
      %v587 = vunpack.c.l.b16 %v425
      %v588 = vunpack.c.h.b16 %v425
      %v589 = vunpack.c.l.b16 %v426
      %v590 = vunpack.c.h.b16 %v426
      %v591 = vunpack.c.l.b16 %v427
      %v592 = vunpack.c.h.b16 %v427
      %v593 = vunpack.c.l.b16 %v428
      %v594 = vunpack.c.h.b16 %v428
      %v595 = vunpack.c.l.b16 %v429
      %v596 = vunpack.c.h.b16 %v429
      %v597 = vunpack.c.l.b16 %v430
      %v598 = vunpack.c.h.b16 %v430
      %v599 = vunpack.c.l.b16 %v431
      %v600 = vunpack.c.h.b16 %v431
      %v601 = vunpack.c.l.b16 %v432
      %v602 = vunpack.c.h.b16 %v432
      %v603 = vunpack.c.l.b16 %v433
      %v604 = vunpack.c.h.b16 %v433
      %v605 = vunpack.c.l.b16 %v434
      %v606 = vunpack.c.h.b16 %v434
      %v607 = vunpack.c.l.b16 %v435
      %v608 = vunpack.c.h.b16 %v435
      %v609 = vunpack.c.l.b16 %v436
      %v610 = vunpack.c.h.b16 %v436
      %v611 = vunpack.c.l.b16 %v437
      %v612 = vunpack.c.h.b16 %v437
      %v613 = vunpack.c.l.b16 %v438
      %v614 = vunpack.c.h.b16 %v438
      %v615 = vunpack.c.l.b16 %v439
      %v616 = vunpack.c.h.b16 %v439
      %v617 = vunpack.c.l.b16 %v440
      %v618 = vunpack.c.h.b16 %v440
      %v619 = vunpack.c.l.b16 %v441
      %v620 = vunpack.c.h.b16 %v441
      %v621 = vunpack.c.l.b16 %v442
      %v622 = vunpack.c.h.b16 %v442
      %v623 = vunpack.c.l.b16 %v443
      %v624 = vunpack.c.h.b16 %v443
      %v625 = vunpack.c.l.b16 %v444
      %v626 = vunpack.c.h.b16 %v444
      %v627 = vunpack.c.l.b16 %v445
      %v628 = vunpack.c.h.b16 %v445
      %v629 = vunpack.c.l.b16 %v446
      %v630 = vunpack.c.h.b16 %v446
      %v631 = vunpack.c.l.b16 %v447
      %v632 = vunpack.c.h.b16 %v447
      %v633 = vunpack.c.l.b16 %v448
      %v634 = vunpack.c.h.b16 %v448
      %v635 = vunpack.c.l.b16 %v449
      %v636 = vunpack.c.h.b16 %v449
      %v637 = vunpack.c.l.b16 %v450
      %v638 = vunpack.c.h.b16 %v450
      %v639 = vunpack.c.l.b16 %v451
      %v640 = vunpack.c.h.b16 %v451
      %v641 = vunpack.c.l.b16 %v452
      %v642 = vunpack.c.h.b16 %v452
      %v643 = vunpack.c.l.b16 %v453
      %v644 = vunpack.c.h.b16 %v453
      %v645 = vunpack.c.l.b16 %v454
      %v646 = vunpack.c.h.b16 %v454
      %v647 = vpack.c.b16 %v527, %v519
      %v648 = vpack.c.b16 %v528, %v520
      %v649 = vpack.c.b16 %v529, %v521
      %v650 = vpack.c.b16 %v530, %v522
      %v651 = vpack.c.b16 %v531, %v523
      %v652 = vpack.c.b16 %v532, %v524
      %v653 = vpack.c.b16 %v533, %v525
      %v654 = vpack.c.b16 %v534, %v526
      %v655 = vpack.c.b16 %v543, %v535
      %v656 = vpack.c.b16 %v544, %v536
      %v657 = vpack.c.b16 %v545, %v537
      %v658 = vpack.c.b16 %v546, %v538
      %v659 = vpack.c.b16 %v547, %v539
      %v660 = vpack.c.b16 %v548, %v540
      %v661 = vpack.c.b16 %v549, %v541
      %v662 = vpack.c.b16 %v550, %v542
      %v663 = vpack.c.b16 %v559, %v551
      %v664 = vpack.c.b16 %v560, %v552
      %v665 = vpack.c.b16 %v561, %v553
      %v666 = vpack.c.b16 %v562, %v554
      %v667 = vpack.c.b16 %v563, %v555
      %v668 = vpack.c.b16 %v564, %v556
      %v669 = vpack.c.b16 %v565, %v557
      %v670 = vpack.c.b16 %v566, %v558
      %v671 = vpack.c.b16 %v575, %v567
      %v672 = vpack.c.b16 %v576, %v568
      %v673 = vpack.c.b16 %v577, %v569
      %v674 = vpack.c.b16 %v578, %v570
      %v675 = vpack.c.b16 %v579, %v571
      %v676 = vpack.c.b16 %v580, %v572
      %v677 = vpack.c.b16 %v581, %v573
      %v678 = vpack.c.b16 %v582, %v574
      %v679 = vpack.c.b16 %v591, %v583
      %v680 = vpack.c.b16 %v592, %v584
      %v681 = vpack.c.b16 %v593, %v585
      %v682 = vpack.c.b16 %v594, %v586
      %v683 = vpack.c.b16 %v595, %v587
      %v684 = vpack.c.b16 %v596, %v588
      %v685 = vpack.c.b16 %v597, %v589
      %v686 = vpack.c.b16 %v598, %v590
      %v687 = vpack.c.b16 %v607, %v599
      %v688 = vpack.c.b16 %v608, %v600
      %v689 = vpack.c.b16 %v609, %v601
      %v690 = vpack.c.b16 %v610, %v602
      %v691 = vpack.c.b16 %v611, %v603
      %v692 = vpack.c.b16 %v612, %v604
      %v693 = vpack.c.b16 %v613, %v605
      %v694 = vpack.c.b16 %v614, %v606
      %v695 = vpack.c.b16 %v623, %v615
      %v696 = vpack.c.b16 %v624, %v616
      %v697 = vpack.c.b16 %v625, %v617
      %v698 = vpack.c.b16 %v626, %v618
      %v699 = vpack.c.b16 %v627, %v619
      %v700 = vpack.c.b16 %v628, %v620
      %v701 = vpack.c.b16 %v629, %v621
      %v702 = vpack.c.b16 %v630, %v622
      %v703 = vpack.c.b16 %v639, %v631
      %v704 = vpack.c.b16 %v640, %v632
      %v705 = vpack.c.b16 %v641, %v633
      %v706 = vpack.c.b16 %v642, %v634
      %v707 = vpack.c.b16 %v643, %v635
      %v708 = vpack.c.b16 %v644, %v636
      %v709 = vpack.c.b16 %v645, %v637
      %v710 = vpack.c.b16 %v646, %v638
      %775 = vmatpush.bf16.msra.mxu0 %v703
      %776 = vmatpush.bf16.msra.mxu0 %v695
      %777 = vmatpush.bf16.msra.mxu0 %v687
      %778 = vmatpush.bf16.msra.mxu0 %v679
      %779 = vmatpush.bf16.msra.mxu0 %v671
      %780 = vmatpush.bf16.msra.mxu0 %v663
      %781 = vmatpush.bf16.msra.mxu0 %v655
      %782 = vmatpush.bf16.msra.mxu0 %v647
      %783 = vmatmul.bf16.gmra.mxu0 %v390
      %v784 = vpop.f32.mrf.mxu0
      %v785 = vadd.f32 0.0, %v784
      %v786 = vpop.f32.mrf.mxu0
      %v787 = vadd.f32 0.0, %v786
      %788 = vdwg.mxu0
      %789 = vmatpush.bf16.msra.mxu0 %v704
      %790 = vmatpush.bf16.msra.mxu0 %v696
      %791 = vmatpush.bf16.msra.mxu0 %v688
      %792 = vmatpush.bf16.msra.mxu0 %v680
      %793 = vmatpush.bf16.msra.mxu0 %v672
      %794 = vmatpush.bf16.msra.mxu0 %v664
      %795 = vmatpush.bf16.msra.mxu0 %v656
      %796 = vmatpush.bf16.msra.mxu0 %v648
      %797 = vmatmul.bf16.gmra.mxu0 %v390
      %v798 = vpop.f32.mrf.mxu0
      %v799 = vadd.f32 0.0, %v798
      %v800 = vpop.f32.mrf.mxu0
      %v801 = vadd.f32 0.0, %v800
      %802 = vdwg.mxu0
      %803 = vmatpush.bf16.msra.mxu0 %v705
      %804 = vmatpush.bf16.msra.mxu0 %v697
      %805 = vmatpush.bf16.msra.mxu0 %v689
      %806 = vmatpush.bf16.msra.mxu0 %v681
      %807 = vmatpush.bf16.msra.mxu0 %v673
      %808 = vmatpush.bf16.msra.mxu0 %v665
      %809 = vmatpush.bf16.msra.mxu0 %v657
      %810 = vmatpush.bf16.msra.mxu0 %v649
      %811 = vmatmul.bf16.gmra.mxu0 %v390
      %v812 = vpop.f32.mrf.mxu0
      %v813 = vadd.f32 0.0, %v812
      %v814 = vpop.f32.mrf.mxu0
      %v815 = vadd.f32 0.0, %v814
      %816 = vdwg.mxu0
      %817 = vmatpush.bf16.msra.mxu0 %v706
      %818 = vmatpush.bf16.msra.mxu0 %v698
      %819 = vmatpush.bf16.msra.mxu0 %v690
      %820 = vmatpush.bf16.msra.mxu0 %v682
      %821 = vmatpush.bf16.msra.mxu0 %v674
      %822 = vmatpush.bf16.msra.mxu0 %v666
      %823 = vmatpush.bf16.msra.mxu0 %v658
      %824 = vmatpush.bf16.msra.mxu0 %v650
      %825 = vmatmul.bf16.gmra.mxu0 %v390
      %v826 = vpop.f32.mrf.mxu0
      %v827 = vadd.f32 0.0, %v826
      %v828 = vpop.f32.mrf.mxu0
      %v829 = vadd.f32 0.0, %v828
      %830 = vdwg.mxu0
      %831 = vmatpush.bf16.msra.mxu0 %v707
      %832 = vmatpush.bf16.msra.mxu0 %v699
      %833 = vmatpush.bf16.msra.mxu0 %v691
      %834 = vmatpush.bf16.msra.mxu0 %v683
      %835 = vmatpush.bf16.msra.mxu0 %v675
      %836 = vmatpush.bf16.msra.mxu0 %v667
      %837 = vmatpush.bf16.msra.mxu0 %v659
      %838 = vmatpush.bf16.msra.mxu0 %v651
      %839 = vmatmul.bf16.gmra.mxu0 %v390
      %v840 = vpop.f32.mrf.mxu0
      %v841 = vadd.f32 0.0, %v840
      %v842 = vpop.f32.mrf.mxu0
      %v843 = vadd.f32 0.0, %v842
      %844 = vdwg.mxu0
      %845 = vmatpush.bf16.msra.mxu0 %v708
      %846 = vmatpush.bf16.msra.mxu0 %v700
      %847 = vmatpush.bf16.msra.mxu0 %v692
      %848 = vmatpush.bf16.msra.mxu0 %v684
      %849 = vmatpush.bf16.msra.mxu0 %v676
      %850 = vmatpush.bf16.msra.mxu0 %v668
      %851 = vmatpush.bf16.msra.mxu0 %v660
      %852 = vmatpush.bf16.msra.mxu0 %v652
      %853 = vmatmul.bf16.gmra.mxu0 %v390
      %v854 = vpop.f32.mrf.mxu0
      %v855 = vadd.f32 0.0, %v854
      %v856 = vpop.f32.mrf.mxu0
      %v857 = vadd.f32 0.0, %v856
      %858 = vdwg.mxu0
      %859 = vmatpush.bf16.msra.mxu0 %v709
      %860 = vmatpush.bf16.msra.mxu0 %v701
      %861 = vmatpush.bf16.msra.mxu0 %v693
      %862 = vmatpush.bf16.msra.mxu0 %v685
      %863 = vmatpush.bf16.msra.mxu0 %v677
      %864 = vmatpush.bf16.msra.mxu0 %v669
      %865 = vmatpush.bf16.msra.mxu0 %v661
      %866 = vmatpush.bf16.msra.mxu0 %v653
      %867 = vmatmul.bf16.gmra.mxu0 %v390
      %v868 = vpop.f32.mrf.mxu0
      %v869 = vadd.f32 0.0, %v868
      %v870 = vpop.f32.mrf.mxu0
      %v871 = vadd.f32 0.0, %v870
      %872 = vdwg.mxu0
      %873 = vmatpush.bf16.msra.mxu0 %v710
      %874 = vmatpush.bf16.msra.mxu0 %v702
      %875 = vmatpush.bf16.msra.mxu0 %v694
      %876 = vmatpush.bf16.msra.mxu0 %v686
      %877 = vmatpush.bf16.msra.mxu0 %v678
      %878 = vmatpush.bf16.msra.mxu0 %v670
      %879 = vmatpush.bf16.msra.mxu0 %v662
      %880 = vmatpush.bf16.msra.mxu0 %v654
      %881 = vmatmul.bf16.gmra.mxu0 %v390
      %v882 = vpop.f32.mrf.mxu0
      %v883 = vadd.f32 0.0, %v882
      %v884 = vpop.f32.mrf.mxu0
      %v885 = vadd.f32 0.0, %v884
      %886 = vdwg.mxu0
      %v887 = vmax.f32 %v785, %v787
      %v888 = vrot.slane %v887, 4
      %v889 = vmax.f32 %v887, %v888
      %v890 = vrot.slane %v889, 2
      %v891 = vmax.f32 %v889, %v890
      %v892 = vrot.slane %v891, 1
      %v893 = vmax.f32 %v891, %v892
      %v894 = vmax.f32 %v799, %v801
      %v895 = vrot.slane %v894, 4
      %v896 = vmax.f32 %v894, %v895
      %v897 = vrot.slane %v896, 2
      %v898 = vmax.f32 %v896, %v897
      %v899 = vrot.slane %v898, 1
      %v900 = vmax.f32 %v898, %v899
      %v901 = vmax.f32 %v813, %v815
      %v902 = vrot.slane %v901, 4
      %v903 = vmax.f32 %v901, %v902
      %v904 = vrot.slane %v903, 2
      %v905 = vmax.f32 %v903, %v904
      %v906 = vrot.slane %v905, 1
      %v907 = vmax.f32 %v905, %v906
      %v908 = vmax.f32 %v827, %v829
      %v909 = vrot.slane %v908, 4
      %v910 = vmax.f32 %v908, %v909
      %v911 = vrot.slane %v910, 2
      %v912 = vmax.f32 %v910, %v911
      %v913 = vrot.slane %v912, 1
      %v914 = vmax.f32 %v912, %v913
      %v915 = vmax.f32 %v841, %v843
      %v916 = vrot.slane %v915, 4
      %v917 = vmax.f32 %v915, %v916
      %v918 = vrot.slane %v917, 2
      %v919 = vmax.f32 %v917, %v918
      %v920 = vrot.slane %v919, 1
      %v921 = vmax.f32 %v919, %v920
      %v922 = vmax.f32 %v855, %v857
      %v923 = vrot.slane %v922, 4
      %v924 = vmax.f32 %v922, %v923
      %v925 = vrot.slane %v924, 2
      %v926 = vmax.f32 %v924, %v925
      %v927 = vrot.slane %v926, 1
      %v928 = vmax.f32 %v926, %v927
      %v929 = vmax.f32 %v869, %v871
      %v930 = vrot.slane %v929, 4
      %v931 = vmax.f32 %v929, %v930
      %v932 = vrot.slane %v931, 2
      %v933 = vmax.f32 %v931, %v932
      %v934 = vrot.slane %v933, 1
      %v935 = vmax.f32 %v933, %v934
      %v936 = vmax.f32 %v883, %v885
      %v937 = vrot.slane %v936, 4
      %v938 = vmax.f32 %v936, %v937
      %v939 = vrot.slane %v938, 2
      %v940 = vmax.f32 %v938, %v939
      %v941 = vrot.slane %v940, 1
      %v942 = vmax.f32 %v940, %v941
      %v943 = vmin.f32 %v785, %v787
      %v944 = vrot.slane %v943, 4
      %v945 = vmin.f32 %v943, %v944
      %v946 = vrot.slane %v945, 2
      %v947 = vmin.f32 %v945, %v946
      %v948 = vrot.slane %v947, 1
      %v949 = vmin.f32 %v947, %v948
      %v950 = vmin.f32 %v799, %v801
      %v951 = vrot.slane %v950, 4
      %v952 = vmin.f32 %v950, %v951
      %v953 = vrot.slane %v952, 2
      %v954 = vmin.f32 %v952, %v953
      %v955 = vrot.slane %v954, 1
      %v956 = vmin.f32 %v954, %v955
      %v957 = vmin.f32 %v813, %v815
      %v958 = vrot.slane %v957, 4
      %v959 = vmin.f32 %v957, %v958
      %v960 = vrot.slane %v959, 2
      %v961 = vmin.f32 %v959, %v960
      %v962 = vrot.slane %v961, 1
      %v963 = vmin.f32 %v961, %v962
      %v964 = vmin.f32 %v827, %v829
      %v965 = vrot.slane %v964, 4
      %v966 = vmin.f32 %v964, %v965
      %v967 = vrot.slane %v966, 2
      %v968 = vmin.f32 %v966, %v967
      %v969 = vrot.slane %v968, 1
      %v970 = vmin.f32 %v968, %v969
      %v971 = vmin.f32 %v841, %v843
      %v972 = vrot.slane %v971, 4
      %v973 = vmin.f32 %v971, %v972
      %v974 = vrot.slane %v973, 2
      %v975 = vmin.f32 %v973, %v974
      %v976 = vrot.slane %v975, 1
      %v977 = vmin.f32 %v975, %v976
      %v978 = vmin.f32 %v855, %v857
      %v979 = vrot.slane %v978, 4
      %v980 = vmin.f32 %v978, %v979
      %v981 = vrot.slane %v980, 2
      %v982 = vmin.f32 %v980, %v981
      %v983 = vrot.slane %v982, 1
      %v984 = vmin.f32 %v982, %v983
      %v985 = vmin.f32 %v869, %v871
      %v986 = vrot.slane %v985, 4
      %v987 = vmin.f32 %v985, %v986
      %v988 = vrot.slane %v987, 2
      %v989 = vmin.f32 %v987, %v988
      %v990 = vrot.slane %v989, 1
      %v991 = vmin.f32 %v989, %v990
      %v992 = vmin.f32 %v883, %v885
      %v993 = vrot.slane %v992, 4
      %v994 = vmin.f32 %v992, %v993
      %v995 = vrot.slane %v994, 2
      %v996 = vmin.f32 %v994, %v995
      %v997 = vrot.slane %v996, 1
      %v998 = vmin.f32 %v996, %v997
      %v999 = vadd.f32 %v785, %v787
      %v1000 = vrot.slane %v999, 4
      %v1001 = vadd.f32 %v999, %v1000
      %v1002 = vrot.slane %v1001, 2
      %v1003 = vadd.f32 %v1001, %v1002
      %v1004 = vrot.slane %v1003, 1
      %v1005 = vadd.f32 %v1003, %v1004
      %v1006 = vadd.f32 %v799, %v801
      %v1007 = vrot.slane %v1006, 4
      %v1008 = vadd.f32 %v1006, %v1007
      %v1009 = vrot.slane %v1008, 2
      %v1010 = vadd.f32 %v1008, %v1009
      %v1011 = vrot.slane %v1010, 1
      %v1012 = vadd.f32 %v1010, %v1011
      %v1013 = vadd.f32 %v813, %v815
      %v1014 = vrot.slane %v1013, 4
      %v1015 = vadd.f32 %v1013, %v1014
      %v1016 = vrot.slane %v1015, 2
      %v1017 = vadd.f32 %v1015, %v1016
      %v1018 = vrot.slane %v1017, 1
      %v1019 = vadd.f32 %v1017, %v1018
      %v1020 = vadd.f32 %v827, %v829
      %v1021 = vrot.slane %v1020, 4
      %v1022 = vadd.f32 %v1020, %v1021
      %v1023 = vrot.slane %v1022, 2
      %v1024 = vadd.f32 %v1022, %v1023
      %v1025 = vrot.slane %v1024, 1
      %v1026 = vadd.f32 %v1024, %v1025
      %v1027 = vadd.f32 %v841, %v843
      %v1028 = vrot.slane %v1027, 4
      %v1029 = vadd.f32 %v1027, %v1028
      %v1030 = vrot.slane %v1029, 2
      %v1031 = vadd.f32 %v1029, %v1030
      %v1032 = vrot.slane %v1031, 1
      %v1033 = vadd.f32 %v1031, %v1032
      %v1034 = vadd.f32 %v855, %v857
      %v1035 = vrot.slane %v1034, 4
      %v1036 = vadd.f32 %v1034, %v1035
      %v1037 = vrot.slane %v1036, 2
      %v1038 = vadd.f32 %v1036, %v1037
      %v1039 = vrot.slane %v1038, 1
      %v1040 = vadd.f32 %v1038, %v1039
      %v1041 = vadd.f32 %v869, %v871
      %v1042 = vrot.slane %v1041, 4
      %v1043 = vadd.f32 %v1041, %v1042
      %v1044 = vrot.slane %v1043, 2
      %v1045 = vadd.f32 %v1043, %v1044
      %v1046 = vrot.slane %v1045, 1
      %v1047 = vadd.f32 %v1045, %v1046
      %v1048 = vadd.f32 %v883, %v885
      %v1049 = vrot.slane %v1048, 4
      %v1050 = vadd.f32 %v1048, %v1049
      %v1051 = vrot.slane %v1050, 2
      %v1052 = vadd.f32 %v1050, %v1051
      %v1053 = vrot.slane %v1052, 1
      %v1054 = vadd.f32 %v1052, %v1053
      %v1055 = vmul.f32 %v785, %v785
      %v1056 = vmul.f32 %v799, %v799
      %v1057 = vmul.f32 %v813, %v813
      %v1058 = vmul.f32 %v827, %v827
      %v1059 = vmul.f32 %v841, %v841
      %v1060 = vmul.f32 %v855, %v855
      %v1061 = vmul.f32 %v869, %v869
      %v1062 = vmul.f32 %v883, %v883
      %v1063 = vmul.f32 %v787, %v787
      %v1064 = vmul.f32 %v801, %v801
      %v1065 = vmul.f32 %v815, %v815
      %v1066 = vmul.f32 %v829, %v829
      %v1067 = vmul.f32 %v843, %v843
      %v1068 = vmul.f32 %v857, %v857
      %v1069 = vmul.f32 %v871, %v871
      %v1070 = vmul.f32 %v885, %v885
      %v1071 = vadd.f32 %v1055, %v1063
      %v1072 = vrot.slane %v1071, 4
      %v1073 = vadd.f32 %v1071, %v1072
      %v1074 = vrot.slane %v1073, 2
      %v1075 = vadd.f32 %v1073, %v1074
      %v1076 = vrot.slane %v1075, 1
      %v1077 = vadd.f32 %v1075, %v1076
      %v1078 = vadd.f32 %v1056, %v1064
      %v1079 = vrot.slane %v1078, 4
      %v1080 = vadd.f32 %v1078, %v1079
      %v1081 = vrot.slane %v1080, 2
      %v1082 = vadd.f32 %v1080, %v1081
      %v1083 = vrot.slane %v1082, 1
      %v1084 = vadd.f32 %v1082, %v1083
      %v1085 = vadd.f32 %v1057, %v1065
      %v1086 = vrot.slane %v1085, 4
      %v1087 = vadd.f32 %v1085, %v1086
      %v1088 = vrot.slane %v1087, 2
      %v1089 = vadd.f32 %v1087, %v1088
      %v1090 = vrot.slane %v1089, 1
      %v1091 = vadd.f32 %v1089, %v1090
      %v1092 = vadd.f32 %v1058, %v1066
      %v1093 = vrot.slane %v1092, 4
      %v1094 = vadd.f32 %v1092, %v1093
      %v1095 = vrot.slane %v1094, 2
      %v1096 = vadd.f32 %v1094, %v1095
      %v1097 = vrot.slane %v1096, 1
      %v1098 = vadd.f32 %v1096, %v1097
      %v1099 = vadd.f32 %v1059, %v1067
      %v1100 = vrot.slane %v1099, 4
      %v1101 = vadd.f32 %v1099, %v1100
      %v1102 = vrot.slane %v1101, 2
      %v1103 = vadd.f32 %v1101, %v1102
      %v1104 = vrot.slane %v1103, 1
      %v1105 = vadd.f32 %v1103, %v1104
      %v1106 = vadd.f32 %v1060, %v1068
      %v1107 = vrot.slane %v1106, 4
      %v1108 = vadd.f32 %v1106, %v1107
      %v1109 = vrot.slane %v1108, 2
      %v1110 = vadd.f32 %v1108, %v1109
      %v1111 = vrot.slane %v1110, 1
      %v1112 = vadd.f32 %v1110, %v1111
      %v1113 = vadd.f32 %v1061, %v1069
      %v1114 = vrot.slane %v1113, 4
      %v1115 = vadd.f32 %v1113, %v1114
      %v1116 = vrot.slane %v1115, 2
      %v1117 = vadd.f32 %v1115, %v1116
      %v1118 = vrot.slane %v1117, 1
      %v1119 = vadd.f32 %v1117, %v1118
      %v1120 = vadd.f32 %v1062, %v1070
      %v1121 = vrot.slane %v1120, 4
      %v1122 = vadd.f32 %v1120, %v1121
      %v1123 = vrot.slane %v1122, 2
      %v1124 = vadd.f32 %v1122, %v1123
      %v1125 = vrot.slane %v1124, 1
      %v1126 = vadd.f32 %v1124, %v1125
      %vm1127 = vcmask 1040384
      %v1128 = vsel %vm1127, %v1005, %v1077
      %v1129 = vsel %vm1127, %v1012, %v1084
      %v1130 = vsel %vm1127, %v1019, %v1091
      %v1131 = vsel %vm1127, %v1026, %v1098
      %v1132 = vsel %vm1127, %v1033, %v1105
      %v1133 = vsel %vm1127, %v1040, %v1112
      %v1134 = vsel %vm1127, %v1047, %v1119
      %v1135 = vsel %vm1127, %v1054, %v1126
      %p1136 = scmp.eq.s32.totalorder %s24, 0
      // Predicated region
      $region41: #{transform_net.4} parent=39 // pred_check
        %p1137 = pneg %p1136
      $region42: #{transform_net.4} parent=39 // pred_check_branch
        %1139 = sbr.rel (%p1137) target = $region44
      $region43: #{transform_net.4} parent=39 // pred_region
        %v1148 = vrot.slane %v900, 7
        %v1149 = vrot.slane %v907, 6
        %v1150 = vrot.slane %v914, 5
        %v1151 = vrot.slane %v921, 4
        %v1152 = vrot.slane %v928, 3
        %v1153 = vrot.slane %v935, 2
        %v1154 = vrot.slane %v942, 1
        %v1155 = vsel %vm1127, %v893, %v1148
        %vm1156 = vcmask 1042434
        %v1157 = vsel %vm1156, %v1149, %v1150
        %vm1158 = vcmask 1041408
        %v1159 = vsel %vm1158, %v1155, %v1157
        %vm1160 = vcmask 1044484
        %v1161 = vsel %vm1160, %v1151, %v1152
        %vm1162 = vcmask 1046534
        %v1163 = vsel %vm1162, %v1153, %v1154
        %vm1164 = vcmask 1045508
        %v1165 = vsel %vm1164, %v1161, %v1163
        %vm1166 = vcmask 1043456
        %v1167 = vsel %vm1166, %v1159, %v1165
        %1169 = vst [vmem:[%s354] sm:$0xff] %v1167
        %v1178 = vrot.slane %v956, 7
        %v1179 = vrot.slane %v963, 6
        %v1180 = vrot.slane %v970, 5
        %v1181 = vrot.slane %v977, 4
        %v1182 = vrot.slane %v984, 3
        %v1183 = vrot.slane %v991, 2
        %v1184 = vrot.slane %v998, 1
        %v1185 = vsel %vm1127, %v949, %v1178
        %v1186 = vsel %vm1156, %v1179, %v1180
        %v1187 = vsel %vm1158, %v1185, %v1186
        %v1188 = vsel %vm1160, %v1181, %v1182
        %v1189 = vsel %vm1162, %v1183, %v1184
        %v1190 = vsel %vm1164, %v1188, %v1189
        %v1191 = vsel %vm1166, %v1187, %v1190
        %1193 = vst [vmem:[%s358] sm:$0xff] %v1191
        %v1202 = vrot.slane %v1129, 6
        %v1203 = vrot.slane %v1130, 4
        %v1204 = vrot.slane %v1131, 2
        %v1205 = vrot.slane %v1133, 6
        %v1206 = vrot.slane %v1134, 4
        %v1207 = vrot.slane %v1135, 2
        %v1208 = vsel %vm1158, %v1128, %v1202
        %v1209 = vsel %vm1164, %v1203, %v1204
        %v1210 = vsel %vm1166, %v1208, %v1209
        %v1211 = vsel %vm1158, %v1132, %v1205
        %v1212 = vsel %vm1164, %v1206, %v1207
        %v1213 = vsel %vm1166, %v1211, %v1212
        %1216 = vst [vmem:[%s363] sm:$0xff] %v1210
        %1217 = vst [vmem:[%s363 + $0x8] sm:$0xff] %v1213
      $region44: #{transform_net.4} parent=39 // pred_fallthru
        _
      %p1218 = scmp.gt.s32.totalorder %s24, 0
      // Predicated region
      $region45: #{transform_net.4} parent=39 // pred_check
        %p1219 = pneg %p1218
      $region46: #{transform_net.4} parent=39 // pred_check_branch
        %1221 = sbr.rel (%p1219) target = $region48
      $region47: #{transform_net.4} parent=39 // pred_region
        %v1222 = vld [vmem:[%s354] sm:$0xff]
        %v1231 = vrot.slane %v900, 7
        %v1232 = vrot.slane %v907, 6
        %v1233 = vrot.slane %v914, 5
        %v1234 = vrot.slane %v921, 4
        %v1235 = vrot.slane %v928, 3
        %v1236 = vrot.slane %v935, 2
        %v1237 = vrot.slane %v942, 1
        %v1238 = vsel %vm1127, %v893, %v1231
        %vm1239 = vcmask 1042434
        %v1240 = vsel %vm1239, %v1232, %v1233
        %vm1241 = vcmask 1041408
        %v1242 = vsel %vm1241, %v1238, %v1240
        %vm1243 = vcmask 1044484
        %v1244 = vsel %vm1243, %v1234, %v1235
        %vm1245 = vcmask 1046534
        %v1246 = vsel %vm1245, %v1236, %v1237
        %vm1247 = vcmask 1045508
        %v1248 = vsel %vm1247, %v1244, %v1246
        %vm1249 = vcmask 1043456
        %v1250 = vsel %vm1249, %v1242, %v1248
        %v1252 = vmax.f32 %v1222, %v1250
        %1253 = vst [vmem:[%s354] sm:$0xff] %v1252
        %v1254 = vld [vmem:[%s358] sm:$0xff]
        %v1263 = vrot.slane %v956, 7
        %v1264 = vrot.slane %v963, 6
        %v1265 = vrot.slane %v970, 5
        %v1266 = vrot.slane %v977, 4
        %v1267 = vrot.slane %v984, 3
        %v1268 = vrot.slane %v991, 2
        %v1269 = vrot.slane %v998, 1
        %v1270 = vsel %vm1127, %v949, %v1263
        %v1271 = vsel %vm1239, %v1264, %v1265
        %v1272 = vsel %vm1241, %v1270, %v1271
        %v1273 = vsel %vm1243, %v1266, %v1267
        %v1274 = vsel %vm1245, %v1268, %v1269
        %v1275 = vsel %vm1247, %v1273, %v1274
        %v1276 = vsel %vm1249, %v1272, %v1275
        %v1278 = vmin.f32 %v1254, %v1276
        %1279 = vst [vmem:[%s358] sm:$0xff] %v1278
        %v1280 = vld [vmem:[%s363] sm:$0xff]
        %v1281 = vld [vmem:[%s363 + $0x8] sm:$0xff]
        %v1290 = vrot.slane %v1129, 6
        %v1291 = vrot.slane %v1130, 4
        %v1292 = vrot.slane %v1131, 2
        %v1293 = vrot.slane %v1133, 6
        %v1294 = vrot.slane %v1134, 4
        %v1295 = vrot.slane %v1135, 2
        %v1296 = vsel %vm1241, %v1128, %v1290
        %v1297 = vsel %vm1247, %v1291, %v1292
        %v1298 = vsel %vm1249, %v1296, %v1297
        %v1299 = vsel %vm1241, %v1132, %v1293
        %v1300 = vsel %vm1247, %v1294, %v1295
        %v1301 = vsel %vm1249, %v1299, %v1300
        %v1304 = vadd.f32 %v1280, %v1298
        %v1305 = vadd.f32 %v1281, %v1301
        %1306 = vst [vmem:[%s363] sm:$0xff] %v1304
        %1307 = vst [vmem:[%s363 + $0x8] sm:$0xff] %v1305
      $region48: #{transform_net.4} parent=39 // pred_fallthru
        _
      %p1308 = scmp.lt.s32.totalorder %s23, 1
      %s1309 = scalar_select %p1308, %s23, 1
      %s1310 = smul.addr %s1309, 8
      %s1311 = scalar_lea.vmem %s5, %s1310
      %p1312 = scmp.lt.s32.totalorder %s23, 1
      %s1313 = scalar_select %p1312, %s23, 1
      %s1314 = smul.addr %s1313, 8
      %s1315 = scalar_lea.vmem %s6, %s1314
      %p1316 = scmp.lt.s32.totalorder %s23, 1
      %s1317 = scalar_select %p1316, %s23, 1
      %s1318 = smul.addr %s1317, 8
      %s1319 = smul.addr %s1318, 2
      %s1320 = scalar_lea.vmem %s7, %s1319
      // Predicated region
      $region49: #{transform_net.4} parent=39 // pred_check
        %p1321 = pneg %p168
      $region50: #{transform_net.4} parent=39 // pred_check_branch
        %1323 = sbr.rel (%p1321) target = $region52
      $region51: #{transform_net.4} parent=39 // pred_region
        _
      $region52: #{transform_net.4} parent=39 // pred_fallthru
        _
      // Predicated region
      $region53: #{transform_net.4} parent=39 // pred_check
        %p1324 = pneg %p194
      $region54: #{transform_net.4} parent=39 // pred_check_branch
        %1326 = sbr.rel (%p1324) target = $region56
      $region55: #{transform_net.4} parent=39 // pred_region
        _
      $region56: #{transform_net.4} parent=39 // pred_fallthru
        _
      // Predicated region
      $region57: #{transform_net.4} parent=39 // pred_check
        %p1327 = pneg %p220
      $region58: #{transform_net.4} parent=39 // pred_check_branch
        %1329 = sbr.rel (%p1327) target = $region60
      $region59: #{transform_net.4} parent=39 // pred_region
        _
      $region60: #{transform_net.4} parent=39 // pred_fallthru
        _
    $region40: #{transform_net.4} parent=5 // pred_fallthru
      _
    %p1330 = scmp.le.s32.totalorder 2, %s14
    // Predicated region
    $region61: #{transform_net.4} parent=5 // pred_check
      %p1331 = pneg %p1330
    $region62: #{transform_net.4} parent=5 // pred_check_branch
      %1333 = sbr.rel (%p1331) target = $region64
    $region63: #{transform_net.4} parent=5 // pred_region
      %s1334 = ssub.s32 %s14, 2
      // Predicated region
      $region65: #{transform_net.4} parent=63 // pred_check
        %p1335 = pneg %p174
      $region66: #{transform_net.4} parent=63 // pred_check_branch
        %1337 = sbr.rel (%p1335) target = $region68
      $region67: #{transform_net.4} parent=63 // pred_region
        %p1338 = scmp.lt.s32.totalorder %s25, 1
        %s1339 = scalar_select %p1338, %s25, 1
        %s1340 = smul.addr %s1339, 8
        %s1341 = scalar_lea.vmem %s5, %s1340
      $region68: #{transform_net.4} parent=63 // pred_fallthru
        _
      // Predicated region
      $region69: #{transform_net.4} parent=63 // pred_check
        %p1342 = pneg %p200
      $region70: #{transform_net.4} parent=63 // pred_check_branch
        %1344 = sbr.rel (%p1342) target = $region72
      $region71: #{transform_net.4} parent=63 // pred_region
        %p1345 = scmp.lt.s32.totalorder %s25, 1
        %s1346 = scalar_select %p1345, %s25, 1
        %s1347 = smul.addr %s1346, 8
        %s1348 = scalar_lea.vmem %s6, %s1347
      $region72: #{transform_net.4} parent=63 // pred_fallthru
        _
      // Predicated region
      $region73: #{transform_net.4} parent=63 // pred_check
        %p1349 = pneg %p226
      $region74: #{transform_net.4} parent=63 // pred_check_branch
        %1351 = sbr.rel (%p1349) target = $region76
      $region75: #{transform_net.4} parent=63 // pred_region
        %p1352 = scmp.lt.s32.totalorder %s25, 1
        %s1353 = scalar_select %p1352, %s25, 1
        %s1354 = smul.addr %s1353, 8
        %s1355 = smul.addr %s1354, 2
        %s1356 = scalar_lea.vmem %s7, %s1355
      $region76: #{transform_net.4} parent=63 // pred_fallthru
        _
    $region64: #{transform_net.4} parent=5 // pred_fallthru
      _
  $region6: #{transform_net.4} parent=0 // loop_footer
    %s18 = sadd.s32 1, %s14
  $region7: #{transform_net.4} parent=0 // loop_footer_branch
    %13 = sbr.rel target = $region3
  $region8: #{transform_net.4} parent=0 // loop_exit
    _

// kernel: transform_net.5
$region0: #{transform_net.5}
  #allocation0 [shape = 'u32[]', space=smem, size = 0x4, offset = 0x4, fixed_abs, tag = 'smem constant byte address 0x4 - core index']
  #allocation1 [shape = 'u32[72,128]{1,0:T(1,128)}', space=vmem, size = 0x9000, scoped, tag = 'internal scratch']
  %s0 = inlined_call_operand.vmem [shape: f32[2,1024], index: 0, kind: input, shape index: {}]
  %s1 = inlined_call_operand.hbm [shape: f32[1024,512], index: 1, kind: input, shape index: {}]
  %s2 = inlined_call_operand.hbm [shape: f32[1,512], index: 2, kind: input, shape index: {}]
  %s3 = inlined_call_operand.hbm [shape: f32[1,512], index: 3, kind: input, shape index: {}]
  %s4 = inlined_call_operand.hbm [shape: f32[512,256], index: 4, kind: input, shape index: {}]
  %s5 = inlined_call_operand.hbm [shape: f32[1,256], index: 5, kind: input, shape index: {}]
  %s6 = inlined_call_operand.hbm [shape: f32[1,256], index: 6, kind: input, shape index: {}]
  %s7 = inlined_call_operand.vmem [shape: f32[256,128], index: 7, kind: input, shape index: {}]
  %s8 = inlined_call_operand.vmem [shape: f32[1,128], index: 8, kind: input, shape index: {}]
  %s9 = inlined_call_operand.vmem [shape: f32[2,128], index: 9, kind: output, shape index: {}]
  %s10 = sld [smem:[#allocation0]]
  $region70: #{transform_net.5} parent=0
    _
  %s12 = ssub.s32 1, %s10
  %s13 = scalar_select 0, %s12, %s10
  $region1: #{transform_net.5} parent=0
    #allocation2 [shape = 'u8[2097152]{0}', space=vmem, size = 0x200000, scoped, tag = 'input window, operand 1, single buffered']
    #allocation3 [shape = 's32[1]{0}', space=sflag, size = 0x4, scoped, tag = 'scoped memory for transform_net.5']
    #allocation4 [shape = 'u8[2048]{0}', space=vmem, size = 0x800, scoped, tag = 'input window, operand 2, single buffered']
    #allocation5 [shape = 's32[1]{0}', space=sflag, size = 0x4, scoped, tag = 'scoped memory for transform_net.5']
    #allocation6 [shape = 'u8[2048]{0}', space=vmem, size = 0x800, scoped, tag = 'input window, operand 3, single buffered']
    #allocation7 [shape = 'u8[524288]{0}', space=vmem, size = 0x80000, scoped, tag = 'input window, operand 4, single buffered']
    #allocation8 [shape = 's32[1]{0}', space=sflag, size = 0x4, scoped, tag = 'scoped memory for transform_net.5']
    #allocation9 [shape = 'u8[1024]{0}', space=vmem, size = 0x400, scoped, tag = 'input window, operand 5, single buffered']
    #allocation10 [shape = 'u8[1024]{0}', space=vmem, size = 0x400, scoped, tag = 'input window, operand 6, single buffered']
    #allocation11 [shape = 's32[1]{0}', space=sflag, size = 0x4, scoped, tag = 'scoped memory for transform_net.5']
    %14 = vsyncpa [#allocation3], 0
    %15 = vsyncpa [#allocation5], 0
    %16 = vsyncpa [#allocation8], 0
    %17 = vsyncpa [#allocation11], 0
    // Predicated region
    $region2: #{transform_net.5} parent=1 // pred_check
      _
    $region3: #{transform_net.5} parent=1 // pred_check_branch
      %19 = sbr.rel (0) target = $region5
    $region4: #{transform_net.5} parent=1 // pred_region
      _
    $region5: #{transform_net.5} parent=1 // pred_fallthru
      _
    // Predicated region
    $region6: #{transform_net.5} parent=1 // pred_check
      _
    $region7: #{transform_net.5} parent=1 // pred_check_branch
      %21 = sbr.rel (0) target = $region9
    $region8: #{transform_net.5} parent=1 // pred_region
      %23 = vsyncadd [#allocation3], 0
      %s24 = sshll.u32 %s1, 4
      %s25 = int_to_ptr.hbm [resolvable:$true] %s24
      %s26 = sshll.u32 [#allocation2], 4
      %s27 = int_to_ptr.vmem [resolvable:$true] %s26
      %32 = dma.hbm_to_vmem [thread:$0]  %s25, 65536, %s27, [#allocation3], 512, 512, 32
    $region9: #{transform_net.5} parent=1 // pred_fallthru
      _
    // Predicated region
    $region10: #{transform_net.5} parent=1 // pred_check
      _
    $region11: #{transform_net.5} parent=1 // pred_check_branch
      %34 = sbr.rel (0) target = $region13
    $region12: #{transform_net.5} parent=1 // pred_region
      %36 = vsyncadd [#allocation5], 0
      %s38 = sshll.u32 %s2, 4
      %s39 = int_to_ptr.hbm [resolvable:$true] %s38
      %s40 = sshll.u32 [#allocation4], 4
      %s41 = int_to_ptr.vmem [resolvable:$true] %s40
      %43 = dma.hbm_to_vmem [thread:$0]  %s39, 64, %s41, [#allocation5]
    $region13: #{transform_net.5} parent=1 // pred_fallthru
      _
    // Predicated region
    $region14: #{transform_net.5} parent=1 // pred_check
      _
    $region15: #{transform_net.5} parent=1 // pred_check_branch
      %45 = sbr.rel (0) target = $region17
    $region16: #{transform_net.5} parent=1 // pred_region
      %47 = vsyncadd [#allocation5], 0
      %s49 = sshll.u32 %s3, 4
      %s50 = int_to_ptr.hbm [resolvable:$true] %s49
      %s51 = sshll.u32 [#allocation6], 4
      %s52 = int_to_ptr.vmem [resolvable:$true] %s51
      %54 = dma.hbm_to_vmem [thread:$0]  %s50, 64, %s52, [#allocation5]
    $region17: #{transform_net.5} parent=1 // pred_fallthru
      _
    // Predicated region
    $region18: #{transform_net.5} parent=1 // pred_check
      _
    $region19: #{transform_net.5} parent=1 // pred_check_branch
      %56 = sbr.rel (0) target = $region21
    $region20: #{transform_net.5} parent=1 // pred_region
      %58 = vsyncadd [#allocation8], 0
      %s59 = sshll.u32 %s4, 4
      %s60 = int_to_ptr.hbm [resolvable:$true] %s59
      %s61 = sshll.u32 [#allocation7], 4
      %s62 = int_to_ptr.vmem [resolvable:$true] %s61
      %67 = dma.hbm_to_vmem [thread:$0]  %s60, 16384, %s62, [#allocation8], 256, 256, 16
    $region21: #{transform_net.5} parent=1 // pred_fallthru
      _
    // Predicated region
    $region22: #{transform_net.5} parent=1 // pred_check
      _
    $region23: #{transform_net.5} parent=1 // pred_check_branch
      %69 = sbr.rel (0) target = $region25
    $region24: #{transform_net.5} parent=1 // pred_region
      %71 = vsyncadd [#allocation8], 0
      %s73 = sshll.u32 %s5, 4
      %s74 = int_to_ptr.hbm [resolvable:$true] %s73
      %s75 = sshll.u32 [#allocation9], 4
      %s76 = int_to_ptr.vmem [resolvable:$true] %s75
      %78 = dma.hbm_to_vmem [thread:$0]  %s74, 32, %s76, [#allocation8]
    $region25: #{transform_net.5} parent=1 // pred_fallthru
      _
    // Predicated region
    $region26: #{transform_net.5} parent=1 // pred_check
      _
    $region27: #{transform_net.5} parent=1 // pred_check_branch
      %80 = sbr.rel (0) target = $region29
    $region28: #{transform_net.5} parent=1 // pred_region
      %82 = vsyncadd [#allocation11], 0
      %s84 = sshll.u32 %s6, 4
      %s85 = int_to_ptr.hbm [resolvable:$true] %s84
      %s86 = sshll.u32 [#allocation10], 4
      %s87 = int_to_ptr.vmem [resolvable:$true] %s86
      %89 = dma.hbm_to_vmem [thread:$0]  %s85, 32, %s87, [#allocation11]
    $region29: #{transform_net.5} parent=1 // pred_fallthru
      _
    // Predicated region
    $region30: #{transform_net.5} parent=1 // pred_check
      _
    $region31: #{transform_net.5} parent=1 // pred_check_branch
      %91 = sbr.rel (0) target = $region33
    $region32: #{transform_net.5} parent=1 // pred_region
      _
    $region33: #{transform_net.5} parent=1 // pred_fallthru
      _
    // Predicated region
    $region34: #{transform_net.5} parent=1 // pred_check
      _
    $region35: #{transform_net.5} parent=1 // pred_check_branch
      %93 = sbr.rel (0) target = $region37
    $region36: #{transform_net.5} parent=1 // pred_region
      _
    $region37: #{transform_net.5} parent=1 // pred_fallthru
      _
    // Predicated region
    $region38: #{transform_net.5} parent=1 // pred_check
      _
    $region39: #{transform_net.5} parent=1 // pred_check_branch
      %95 = sbr.rel (0) target = $region41
    $region40: #{transform_net.5} parent=1 // pred_region
      %97 = dma.done [#allocation3], 65536
    $region41: #{transform_net.5} parent=1 // pred_fallthru
      _
    // Predicated region
    $region42: #{transform_net.5} parent=1 // pred_check
      _
    $region43: #{transform_net.5} parent=1 // pred_check_branch
      %99 = sbr.rel (0) target = $region45
    $region44: #{transform_net.5} parent=1 // pred_region
      %101 = dma.done [#allocation5], 64
    $region45: #{transform_net.5} parent=1 // pred_fallthru
      _
    // Predicated region
    $region46: #{transform_net.5} parent=1 // pred_check
      _
    $region47: #{transform_net.5} parent=1 // pred_check_branch
      %103 = sbr.rel (0) target = $region49
    $region48: #{transform_net.5} parent=1 // pred_region
      %105 = dma.done [#allocation5], 64
    $region49: #{transform_net.5} parent=1 // pred_fallthru
      _
    // Predicated region
    $region50: #{transform_net.5} parent=1 // pred_check
      _
    $region51: #{transform_net.5} parent=1 // pred_check_branch
      %107 = sbr.rel (0) target = $region53
    $region52: #{transform_net.5} parent=1 // pred_region
      %109 = dma.done [#allocation8], 16384
    $region53: #{transform_net.5} parent=1 // pred_fallthru
      _
    // Predicated region
    $region54: #{transform_net.5} parent=1 // pred_check
      _
    $region55: #{transform_net.5} parent=1 // pred_check_branch
      %111 = sbr.rel (0) target = $region57
    $region56: #{transform_net.5} parent=1 // pred_region
      %113 = dma.done [#allocation8], 32
    $region57: #{transform_net.5} parent=1 // pred_fallthru
      _
    // Predicated region
    $region58: #{transform_net.5} parent=1 // pred_check
      _
    $region59: #{transform_net.5} parent=1 // pred_check_branch
      %115 = sbr.rel (0) target = $region61
    $region60: #{transform_net.5} parent=1 // pred_region
      %117 = dma.done [#allocation11], 32
    $region61: #{transform_net.5} parent=1 // pred_fallthru
      _
    %v118 = vld [vmem:[%s0] sm:$0xff]
    %v119 = vld [vmem:[%s0 + $0x8] sm:$0xff]
    %v120 = vld [vmem:[#allocation2] sm:$0xff]
    %v121 = vld [vmem:[#allocation2 + $0x8] sm:$0xff]
    %v122 = vld [vmem:[#allocation2 + $0x10] sm:$0xff]
    %v123 = vld [vmem:[#allocation2 + $0x18] sm:$0xff]
    %v124 = vld [vmem:[#allocation2 + $0x20] sm:$0xff]
    %v125 = vld [vmem:[#allocation2 + $0x28] sm:$0xff]
    %v126 = vld [vmem:[#allocation2 + $0x30] sm:$0xff]
    %v127 = vld [vmem:[#allocation2 + $0x38] sm:$0xff]
    %v128 = vld [vmem:[#allocation2 + $0x40] sm:$0xff]
    %v129 = vld [vmem:[#allocation2 + $0x48] sm:$0xff]
    %v130 = vld [vmem:[#allocation2 + $0x50] sm:$0xff]
    %v131 = vld [vmem:[#allocation2 + $0x58] sm:$0xff]
    %v132 = vld [vmem:[#allocation2 + $0x60] sm:$0xff]
    %v133 = vld [vmem:[#allocation2 + $0x68] sm:$0xff]
    %v134 = vld [vmem:[#allocation2 + $0x70] sm:$0xff]
    %v135 = vld [vmem:[#allocation2 + $0x78] sm:$0xff]
    %v136 = vld [vmem:[#allocation2 + $0x80] sm:$0xff]
    %v137 = vld [vmem:[#allocation2 + $0x88] sm:$0xff]
    %v138 = vld [vmem:[#allocation2 + $0x90] sm:$0xff]
    %v139 = vld [vmem:[#allocation2 + $0x98] sm:$0xff]
    %v140 = vld [vmem:[#allocation2 + $0xa0] sm:$0xff]
    %v141 = vld [vmem:[#allocation2 + $0xa8] sm:$0xff]
    %v142 = vld [vmem:[#allocation2 + $0xb0] sm:$0xff]
    %v143 = vld [vmem:[#allocation2 + $0xb8] sm:$0xff]
    %v144 = vld [vmem:[#allocation2 + $0xc0] sm:$0xff]
    %v145 = vld [vmem:[#allocation2 + $0xc8] sm:$0xff]
    %v146 = vld [vmem:[#allocation2 + $0xd0] sm:$0xff]
    %v147 = vld [vmem:[#allocation2 + $0xd8] sm:$0xff]
    %v148 = vld [vmem:[#allocation2 + $0xe0] sm:$0xff]
    %v149 = vld [vmem:[#allocation2 + $0xe8] sm:$0xff]
    %v150 = vld [vmem:[#allocation2 + $0xf0] sm:$0xff]
    %v151 = vld [vmem:[#allocation2 + $0xf8] sm:$0xff]
    %v152 = vld [vmem:[#allocation2 + $0x100] sm:$0xff]
    %v153 = vld [vmem:[#allocation2 + $0x108] sm:$0xff]
    %v154 = vld [vmem:[#allocation2 + $0x110] sm:$0xff]
    %v155 = vld [vmem:[#allocation2 + $0x118] sm:$0xff]
    %v156 = vld [vmem:[#allocation2 + $0x120] sm:$0xff]
    %v157 = vld [vmem:[#allocation2 + $0x128] sm:$0xff]
    %v158 = vld [vmem:[#allocation2 + $0x130] sm:$0xff]
    %v159 = vld [vmem:[#allocation2 + $0x138] sm:$0xff]
    %v160 = vld [vmem:[#allocation2 + $0x140] sm:$0xff]
    %v161 = vld [vmem:[#allocation2 + $0x148] sm:$0xff]
    %v162 = vld [vmem:[#allocation2 + $0x150] sm:$0xff]
    %v163 = vld [vmem:[#allocation2 + $0x158] sm:$0xff]
    %v164 = vld [vmem:[#allocation2 + $0x160] sm:$0xff]
    %v165 = vld [vmem:[#allocation2 + $0x168] sm:$0xff]
    %v166 = vld [vmem:[#allocation2 + $0x170] sm:$0xff]
    %v167 = vld [vmem:[#allocation2 + $0x178] sm:$0xff]
    %v168 = vld [vmem:[#allocation2 + $0x180] sm:$0xff]
    %v169 = vld [vmem:[#allocation2 + $0x188] sm:$0xff]
    %v170 = vld [vmem:[#allocation2 + $0x190] sm:$0xff]
    %v171 = vld [vmem:[#allocation2 + $0x198] sm:$0xff]
    %v172 = vld [vmem:[#allocation2 + $0x1a0] sm:$0xff]
    %v173 = vld [vmem:[#allocation2 + $0x1a8] sm:$0xff]
    %v174 = vld [vmem:[#allocation2 + $0x1b0] sm:$0xff]
    %v175 = vld [vmem:[#allocation2 + $0x1b8] sm:$0xff]
    %v176 = vld [vmem:[#allocation2 + $0x1c0] sm:$0xff]
    %v177 = vld [vmem:[#allocation2 + $0x1c8] sm:$0xff]
    %v178 = vld [vmem:[#allocation2 + $0x1d0] sm:$0xff]
    %v179 = vld [vmem:[#allocation2 + $0x1d8] sm:$0xff]
    %v180 = vld [vmem:[#allocation2 + $0x1e0] sm:$0xff]
    %v181 = vld [vmem:[#allocation2 + $0x1e8] sm:$0xff]
    %v182 = vld [vmem:[#allocation2 + $0x1f0] sm:$0xff]
    %v183 = vld [vmem:[#allocation2 + $0x1f8] sm:$0xff]
    %v184 = vld [vmem:[#allocation2 + $0x200] sm:$0xff]
    %v185 = vld [vmem:[#allocation2 + $0x208] sm:$0xff]
    %v186 = vld [vmem:[#allocation2 + $0x210] sm:$0xff]
    %v187 = vld [vmem:[#allocation2 + $0x218] sm:$0xff]
    %v188 = vld [vmem:[#allocation2 + $0x220] sm:$0xff]
    %v189 = vld [vmem:[#allocation2 + $0x228] sm:$0xff]
    %v190 = vld [vmem:[#allocation2 + $0x230] sm:$0xff]
    %v191 = vld [vmem:[#allocation2 + $0x238] sm:$0xff]
    %v192 = vld [vmem:[#allocation2 + $0x240] sm:$0xff]
    %v193 = vld [vmem:[#allocation2 + $0x248] sm:$0xff]
    %v194 = vld [vmem:[#allocation2 + $0x250] sm:$0xff]
    %v195 = vld [vmem:[#allocation2 + $0x258] sm:$0xff]
    %v196 = vld [vmem:[#allocation2 + $0x260] sm:$0xff]
    %v197 = vld [vmem:[#allocation2 + $0x268] sm:$0xff]
    %v198 = vld [vmem:[#allocation2 + $0x270] sm:$0xff]
    %v199 = vld [vmem:[#allocation2 + $0x278] sm:$0xff]
    %v200 = vld [vmem:[#allocation2 + $0x280] sm:$0xff]
    %v201 = vld [vmem:[#allocation2 + $0x288] sm:$0xff]
    %v202 = vld [vmem:[#allocation2 + $0x290] sm:$0xff]
    %v203 = vld [vmem:[#allocation2 + $0x298] sm:$0xff]
    %v204 = vld [vmem:[#allocation2 + $0x2a0] sm:$0xff]
    %v205 = vld [vmem:[#allocation2 + $0x2a8] sm:$0xff]
    %v206 = vld [vmem:[#allocation2 + $0x2b0] sm:$0xff]
    %v207 = vld [vmem:[#allocation2 + $0x2b8] sm:$0xff]
    %v208 = vld [vmem:[#allocation2 + $0x2c0] sm:$0xff]
    %v209 = vld [vmem:[#allocation2 + $0x2c8] sm:$0xff]
    %v210 = vld [vmem:[#allocation2 + $0x2d0] sm:$0xff]
    %v211 = vld [vmem:[#allocation2 + $0x2d8] sm:$0xff]
    %v212 = vld [vmem:[#allocation2 + $0x2e0] sm:$0xff]
    %v213 = vld [vmem:[#allocation2 + $0x2e8] sm:$0xff]
    %v214 = vld [vmem:[#allocation2 + $0x2f0] sm:$0xff]
    %v215 = vld [vmem:[#allocation2 + $0x2f8] sm:$0xff]
    %v216 = vld [vmem:[#allocation2 + $0x300] sm:$0xff]
    %v217 = vld [vmem:[#allocation2 + $0x308] sm:$0xff]
    %v218 = vld [vmem:[#allocation2 + $0x310] sm:$0xff]
    %v219 = vld [vmem:[#allocation2 + $0x318] sm:$0xff]
    %v220 = vld [vmem:[#allocation2 + $0x320] sm:$0xff]
    %v221 = vld [vmem:[#allocation2 + $0x328] sm:$0xff]
    %v222 = vld [vmem:[#allocation2 + $0x330] sm:$0xff]
    %v223 = vld [vmem:[#allocation2 + $0x338] sm:$0xff]
    %v224 = vld [vmem:[#allocation2 + $0x340] sm:$0xff]
    %v225 = vld [vmem:[#allocation2 + $0x348] sm:$0xff]
    %v226 = vld [vmem:[#allocation2 + $0x350] sm:$0xff]
    %v227 = vld [vmem:[#allocation2 + $0x358] sm:$0xff]
    %v228 = vld [vmem:[#allocation2 + $0x360] sm:$0xff]
    %v229 = vld [vmem:[#allocation2 + $0x368] sm:$0xff]
    %v230 = vld [vmem:[#allocation2 + $0x370] sm:$0xff]
    %v231 = vld [vmem:[#allocation2 + $0x378] sm:$0xff]
    %v232 = vld [vmem:[#allocation2 + $0x380] sm:$0xff]
    %v233 = vld [vmem:[#allocation2 + $0x388] sm:$0xff]
    %v234 = vld [vmem:[#allocation2 + $0x390] sm:$0xff]
    %v235 = vld [vmem:[#allocation2 + $0x398] sm:$0xff]
    %v236 = vld [vmem:[#allocation2 + $0x3a0] sm:$0xff]
    %v237 = vld [vmem:[#allocation2 + $0x3a8] sm:$0xff]
    %v238 = vld [vmem:[#allocation2 + $0x3b0] sm:$0xff]
    %v239 = vld [vmem:[#allocation2 + $0x3b8] sm:$0xff]
    %v240 = vld [vmem:[#allocation2 + $0x3c0] sm:$0xff]
    %v241 = vld [vmem:[#allocation2 + $0x3c8] sm:$0xff]
    %v242 = vld [vmem:[#allocation2 + $0x3d0] sm:$0xff]
    %v243 = vld [vmem:[#allocation2 + $0x3d8] sm:$0xff]
    %v244 = vld [vmem:[#allocation2 + $0x3e0] sm:$0xff]
    %v245 = vld [vmem:[#allocation2 + $0x3e8] sm:$0xff]
    %v246 = vld [vmem:[#allocation2 + $0x3f0] sm:$0xff]
    %v247 = vld [vmem:[#allocation2 + $0x3f8] sm:$0xff]
    %v248 = vld [vmem:[#allocation2 + $0x400] sm:$0xff]
    %v249 = vld [vmem:[#allocation2 + $0x408] sm:$0xff]
    %v250 = vld [vmem:[#allocation2 + $0x410] sm:$0xff]
    %v251 = vld [vmem:[#allocation2 + $0x418] sm:$0xff]
    %v252 = vld [vmem:[#allocation2 + $0x420] sm:$0xff]
    %v253 = vld [vmem:[#allocation2 + $0x428] sm:$0xff]
    %v254 = vld [vmem:[#allocation2 + $0x430] sm:$0xff]
    %v255 = vld [vmem:[#allocation2 + $0x438] sm:$0xff]
    %v256 = vld [vmem:[#allocation2 + $0x440] sm:$0xff]
    %v257 = vld [vmem:[#allocation2 + $0x448] sm:$0xff]
    %v258 = vld [vmem:[#allocation2 + $0x450] sm:$0xff]
    %v259 = vld [vmem:[#allocation2 + $0x458] sm:$0xff]
    %v260 = vld [vmem:[#allocation2 + $0x460] sm:$0xff]
    %v261 = vld [vmem:[#allocation2 + $0x468] sm:$0xff]
    %v262 = vld [vmem:[#allocation2 + $0x470] sm:$0xff]
    %v263 = vld [vmem:[#allocation2 + $0x478] sm:$0xff]
    %v264 = vld [vmem:[#allocation2 + $0x480] sm:$0xff]
    %v265 = vld [vmem:[#allocation2 + $0x488] sm:$0xff]
    %v266 = vld [vmem:[#allocation2 + $0x490] sm:$0xff]
    %v267 = vld [vmem:[#allocation2 + $0x498] sm:$0xff]
    %v268 = vld [vmem:[#allocation2 + $0x4a0] sm:$0xff]
    %v269 = vld [vmem:[#allocation2 + $0x4a8] sm:$0xff]
    %v270 = vld [vmem:[#allocation2 + $0x4b0] sm:$0xff]
    %v271 = vld [vmem:[#allocation2 + $0x4b8] sm:$0xff]
    %v272 = vld [vmem:[#allocation2 + $0x4c0] sm:$0xff]
    %v273 = vld [vmem:[#allocation2 + $0x4c8] sm:$0xff]
    %v274 = vld [vmem:[#allocation2 + $0x4d0] sm:$0xff]
    %v275 = vld [vmem:[#allocation2 + $0x4d8] sm:$0xff]
    %v276 = vld [vmem:[#allocation2 + $0x4e0] sm:$0xff]
    %v277 = vld [vmem:[#allocation2 + $0x4e8] sm:$0xff]
    %v278 = vld [vmem:[#allocation2 + $0x4f0] sm:$0xff]
    %v279 = vld [vmem:[#allocation2 + $0x4f8] sm:$0xff]
    %v280 = vld [vmem:[#allocation2 + $0x500] sm:$0xff]
    %v281 = vld [vmem:[#allocation2 + $0x508] sm:$0xff]
    %v282 = vld [vmem:[#allocation2 + $0x510] sm:$0xff]
    %v283 = vld [vmem:[#allocation2 + $0x518] sm:$0xff]
    %v284 = vld [vmem:[#allocation2 + $0x520] sm:$0xff]
    %v285 = vld [vmem:[#allocation2 + $0x528] sm:$0xff]
    %v286 = vld [vmem:[#allocation2 + $0x530] sm:$0xff]
    %v287 = vld [vmem:[#allocation2 + $0x538] sm:$0xff]
    %v288 = vld [vmem:[#allocation2 + $0x540] sm:$0xff]
    %v289 = vld [vmem:[#allocation2 + $0x548] sm:$0xff]
    %v290 = vld [vmem:[#allocation2 + $0x550] sm:$0xff]
    %v291 = vld [vmem:[#allocation2 + $0x558] sm:$0xff]
    %v292 = vld [vmem:[#allocation2 + $0x560] sm:$0xff]
    %v293 = vld [vmem:[#allocation2 + $0x568] sm:$0xff]
    %v294 = vld [vmem:[#allocation2 + $0x570] sm:$0xff]
    %v295 = vld [vmem:[#allocation2 + $0x578] sm:$0xff]
    %v296 = vld [vmem:[#allocation2 + $0x580] sm:$0xff]
    %v297 = vld [vmem:[#allocation2 + $0x588] sm:$0xff]
    %v298 = vld [vmem:[#allocation2 + $0x590] sm:$0xff]
    %v299 = vld [vmem:[#allocation2 + $0x598] sm:$0xff]
    %v300 = vld [vmem:[#allocation2 + $0x5a0] sm:$0xff]
    %v301 = vld [vmem:[#allocation2 + $0x5a8] sm:$0xff]
    %v302 = vld [vmem:[#allocation2 + $0x5b0] sm:$0xff]
    %v303 = vld [vmem:[#allocation2 + $0x5b8] sm:$0xff]
    %v304 = vld [vmem:[#allocation2 + $0x5c0] sm:$0xff]
    %v305 = vld [vmem:[#allocation2 + $0x5c8] sm:$0xff]
    %v306 = vld [vmem:[#allocation2 + $0x5d0] sm:$0xff]
    %v307 = vld [vmem:[#allocation2 + $0x5d8] sm:$0xff]
    %v308 = vld [vmem:[#allocation2 + $0x5e0] sm:$0xff]
    %v309 = vld [vmem:[#allocation2 + $0x5e8] sm:$0xff]
    %v310 = vld [vmem:[#allocation2 + $0x5f0] sm:$0xff]
    %v311 = vld [vmem:[#allocation2 + $0x5f8] sm:$0xff]
    %v312 = vld [vmem:[#allocation2 + $0x600] sm:$0xff]
    %v313 = vld [vmem:[#allocation2 + $0x608] sm:$0xff]
    %v314 = vld [vmem:[#allocation2 + $0x610] sm:$0xff]
    %v315 = vld [vmem:[#allocation2 + $0x618] sm:$0xff]
    %v316 = vld [vmem:[#allocation2 + $0x620] sm:$0xff]
    %v317 = vld [vmem:[#allocation2 + $0x628] sm:$0xff]
    %v318 = vld [vmem:[#allocation2 + $0x630] sm:$0xff]
    %v319 = vld [vmem:[#allocation2 + $0x638] sm:$0xff]
    %v320 = vld [vmem:[#allocation2 + $0x640] sm:$0xff]
    %v321 = vld [vmem:[#allocation2 + $0x648] sm:$0xff]
    %v322 = vld [vmem:[#allocation2 + $0x650] sm:$0xff]
    %v323 = vld [vmem:[#allocation2 + $0x658] sm:$0xff]
    %v324 = vld [vmem:[#allocation2 + $0x660] sm:$0xff]
    %v325 = vld [vmem:[#allocation2 + $0x668] sm:$0xff]
    %v326 = vld [vmem:[#allocation2 + $0x670] sm:$0xff]
    %v327 = vld [vmem:[#allocation2 + $0x678] sm:$0xff]
    %v328 = vld [vmem:[#allocation2 + $0x680] sm:$0xff]
    %v329 = vld [vmem:[#allocation2 + $0x688] sm:$0xff]
    %v330 = vld [vmem:[#allocation2 + $0x690] sm:$0xff]
    %v331 = vld [vmem:[#allocation2 + $0x698] sm:$0xff]
    %v332 = vld [vmem:[#allocation2 + $0x6a0] sm:$0xff]
    %v333 = vld [vmem:[#allocation2 + $0x6a8] sm:$0xff]
    %v334 = vld [vmem:[#allocation2 + $0x6b0] sm:$0xff]
    %v335 = vld [vmem:[#allocation2 + $0x6b8] sm:$0xff]
    %v336 = vld [vmem:[#allocation2 + $0x6c0] sm:$0xff]
    %v337 = vld [vmem:[#allocation2 + $0x6c8] sm:$0xff]
    %v338 = vld [vmem:[#allocation2 + $0x6d0] sm:$0xff]
    %v339 = vld [vmem:[#allocation2 + $0x6d8] sm:$0xff]
    %v340 = vld [vmem:[#allocation2 + $0x6e0] sm:$0xff]
    %v341 = vld [vmem:[#allocation2 + $0x6e8] sm:$0xff]
    %v342 = vld [vmem:[#allocation2 + $0x6f0] sm:$0xff]
    %v343 = vld [vmem:[#allocation2 + $0x6f8] sm:$0xff]
    %v344 = vld [vmem:[#allocation2 + $0x700] sm:$0xff]
    %v345 = vld [vmem:[#allocation2 + $0x708] sm:$0xff]
    %v346 = vld [vmem:[#allocation2 + $0x710] sm:$0xff]
    %v347 = vld [vmem:[#allocation2 + $0x718] sm:$0xff]
    %v348 = vld [vmem:[#allocation2 + $0x720] sm:$0xff]
    %v349 = vld [vmem:[#allocation2 + $0x728] sm:$0xff]
    %v350 = vld [vmem:[#allocation2 + $0x730] sm:$0xff]
    %v351 = vld [vmem:[#allocation2 + $0x738] sm:$0xff]
    %v352 = vld [vmem:[#allocation2 + $0x740] sm:$0xff]
    %v353 = vld [vmem:[#allocation2 + $0x748] sm:$0xff]
    %v354 = vld [vmem:[#allocation2 + $0x750] sm:$0xff]
    %v355 = vld [vmem:[#allocation2 + $0x758] sm:$0xff]
    %v356 = vld [vmem:[#allocation2 + $0x760] sm:$0xff]
    %v357 = vld [vmem:[#allocation2 + $0x768] sm:$0xff]
    %v358 = vld [vmem:[#allocation2 + $0x770] sm:$0xff]
    %v359 = vld [vmem:[#allocation2 + $0x778] sm:$0xff]
    %v360 = vld [vmem:[#allocation2 + $0x780] sm:$0xff]
    %v361 = vld [vmem:[#allocation2 + $0x788] sm:$0xff]
    %v362 = vld [vmem:[#allocation2 + $0x790] sm:$0xff]
    %v363 = vld [vmem:[#allocation2 + $0x798] sm:$0xff]
    %v364 = vld [vmem:[#allocation2 + $0x7a0] sm:$0xff]
    %v365 = vld [vmem:[#allocation2 + $0x7a8] sm:$0xff]
    %v366 = vld [vmem:[#allocation2 + $0x7b0] sm:$0xff]
    %v367 = vld [vmem:[#allocation2 + $0x7b8] sm:$0xff]
    %v368 = vld [vmem:[#allocation2 + $0x7c0] sm:$0xff]
    %v369 = vld [vmem:[#allocation2 + $0x7c8] sm:$0xff]
    %v370 = vld [vmem:[#allocation2 + $0x7d0] sm:$0xff]
    %v371 = vld [vmem:[#allocation2 + $0x7d8] sm:$0xff]
    %v372 = vld [vmem:[#allocation2 + $0x7e0] sm:$0xff]
    %v373 = vld [vmem:[#allocation2 + $0x7e8] sm:$0xff]
    %v374 = vld [vmem:[#allocation2 + $0x7f0] sm:$0xff]
    %v375 = vld [vmem:[#allocation2 + $0x7f8] sm:$0xff]
    %v376 = vld [vmem:[#allocation2 + $0x800] sm:$0xff]
    %v377 = vld [vmem:[#allocation2 + $0x808] sm:$0xff]
    %v378 = vld [vmem:[#allocation2 + $0x810] sm:$0xff]
    %v379 = vld [vmem:[#allocation2 + $0x818] sm:$0xff]
    %v380 = vld [vmem:[#allocation2 + $0x820] sm:$0xff]
    %v381 = vld [vmem:[#allocation2 + $0x828] sm:$0xff]
    %v382 = vld [vmem:[#allocation2 + $0x830] sm:$0xff]
    %v383 = vld [vmem:[#allocation2 + $0x838] sm:$0xff]
    %v384 = vld [vmem:[#allocation2 + $0x840] sm:$0xff]
    %v385 = vld [vmem:[#allocation2 + $0x848] sm:$0xff]
    %v386 = vld [vmem:[#allocation2 + $0x850] sm:$0xff]
    %v387 = vld [vmem:[#allocation2 + $0x858] sm:$0xff]
    %v388 = vld [vmem:[#allocation2 + $0x860] sm:$0xff]
    %v389 = vld [vmem:[#allocation2 + $0x868] sm:$0xff]
    %v390 = vld [vmem:[#allocation2 + $0x870] sm:$0xff]
    %v391 = vld [vmem:[#allocation2 + $0x878] sm:$0xff]
    %v392 = vld [vmem:[#allocation2 + $0x880] sm:$0xff]
    %v393 = vld [vmem:[#allocation2 + $0x888] sm:$0xff]
    %v394 = vld [vmem:[#allocation2 + $0x890] sm:$0xff]
    %v395 = vld [vmem:[#allocation2 + $0x898] sm:$0xff]
    %v396 = vld [vmem:[#allocation2 + $0x8a0] sm:$0xff]
    %v397 = vld [vmem:[#allocation2 + $0x8a8] sm:$0xff]
    %v398 = vld [vmem:[#allocation2 + $0x8b0] sm:$0xff]
    %v399 = vld [vmem:[#allocation2 + $0x8b8] sm:$0xff]
    %v400 = vld [vmem:[#allocation2 + $0x8c0] sm:$0xff]
    %v401 = vld [vmem:[#allocation2 + $0x8c8] sm:$0xff]
    %v402 = vld [vmem:[#allocation2 + $0x8d0] sm:$0xff]
    %v403 = vld [vmem:[#allocation2 + $0x8d8] sm:$0xff]
    %v404 = vld [vmem:[#allocation2 + $0x8e0] sm:$0xff]
    %v405 = vld [vmem:[#allocation2 + $0x8e8] sm:$0xff]
    %v406 = vld [vmem:[#allocation2 + $0x8f0] sm:$0xff]
    %v407 = vld [vmem:[#allocation2 + $0x8f8] sm:$0xff]
    %v408 = vld [vmem:[#allocation2 + $0x900] sm:$0xff]
    %v409 = vld [vmem:[#allocation2 + $0x908] sm:$0xff]
    %v410 = vld [vmem:[#allocation2 + $0x910] sm:$0xff]
    %v411 = vld [vmem:[#allocation2 + $0x918] sm:$0xff]
    %v412 = vld [vmem:[#allocation2 + $0x920] sm:$0xff]
    %v413 = vld [vmem:[#allocation2 + $0x928] sm:$0xff]
    %v414 = vld [vmem:[#allocation2 + $0x930] sm:$0xff]
    %v415 = vld [vmem:[#allocation2 + $0x938] sm:$0xff]
    %v416 = vld [vmem:[#allocation2 + $0x940] sm:$0xff]
    %v417 = vld [vmem:[#allocation2 + $0x948] sm:$0xff]
    %v418 = vld [vmem:[#allocation2 + $0x950] sm:$0xff]
    %v419 = vld [vmem:[#allocation2 + $0x958] sm:$0xff]
    %v420 = vld [vmem:[#allocation2 + $0x960] sm:$0xff]
    %v421 = vld [vmem:[#allocation2 + $0x968] sm:$0xff]
    %v422 = vld [vmem:[#allocation2 + $0x970] sm:$0xff]
    %v423 = vld [vmem:[#allocation2 + $0x978] sm:$0xff]
    %v424 = vld [vmem:[#allocation2 + $0x980] sm:$0xff]
    %v425 = vld [vmem:[#allocation2 + $0x988] sm:$0xff]
    %v426 = vld [vmem:[#allocation2 + $0x990] sm:$0xff]
    %v427 = vld [vmem:[#allocation2 + $0x998] sm:$0xff]
    %v428 = vld [vmem:[#allocation2 + $0x9a0] sm:$0xff]
    %v429 = vld [vmem:[#allocation2 + $0x9a8] sm:$0xff]
    %v430 = vld [vmem:[#allocation2 + $0x9b0] sm:$0xff]
    %v431 = vld [vmem:[#allocation2 + $0x9b8] sm:$0xff]
    %v432 = vld [vmem:[#allocation2 + $0x9c0] sm:$0xff]
    %v433 = vld [vmem:[#allocation2 + $0x9c8] sm:$0xff]
    %v434 = vld [vmem:[#allocation2 + $0x9d0] sm:$0xff]
    %v435 = vld [vmem:[#allocation2 + $0x9d8] sm:$0xff]
    %v436 = vld [vmem:[#allocation2 + $0x9e0] sm:$0xff]
    %v437 = vld [vmem:[#allocation2 + $0x9e8] sm:$0xff]
    %v438 = vld [vmem:[#allocation2 + $0x9f0] sm:$0xff]
    %v439 = vld [vmem:[#allocation2 + $0x9f8] sm:$0xff]
    %v440 = vld [vmem:[#allocation2 + $0xa00] sm:$0xff]
    %v441 = vld [vmem:[#allocation2 + $0xa08] sm:$0xff]
    %v442 = vld [vmem:[#allocation2 + $0xa10] sm:$0xff]
    %v443 = vld [vmem:[#allocation2 + $0xa18] sm:$0xff]
    %v444 = vld [vmem:[#allocation2 + $0xa20] sm:$0xff]
    %v445 = vld [vmem:[#allocation2 + $0xa28] sm:$0xff]
    %v446 = vld [vmem:[#allocation2 + $0xa30] sm:$0xff]
    %v447 = vld [vmem:[#allocation2 + $0xa38] sm:$0xff]
    %v448 = vld [vmem:[#allocation2 + $0xa40] sm:$0xff]
    %v449 = vld [vmem:[#allocation2 + $0xa48] sm:$0xff]
    %v450 = vld [vmem:[#allocation2 + $0xa50] sm:$0xff]
    %v451 = vld [vmem:[#allocation2 + $0xa58] sm:$0xff]
    %v452 = vld [vmem:[#allocation2 + $0xa60] sm:$0xff]
    %v453 = vld [vmem:[#allocation2 + $0xa68] sm:$0xff]
    %v454 = vld [vmem:[#allocation2 + $0xa70] sm:$0xff]
    %v455 = vld [vmem:[#allocation2 + $0xa78] sm:$0xff]
    %v456 = vld [vmem:[#allocation2 + $0xa80] sm:$0xff]
    %v457 = vld [vmem:[#allocation2 + $0xa88] sm:$0xff]
    %v458 = vld [vmem:[#allocation2 + $0xa90] sm:$0xff]
    %v459 = vld [vmem:[#allocation2 + $0xa98] sm:$0xff]
    %v460 = vld [vmem:[#allocation2 + $0xaa0] sm:$0xff]
    %v461 = vld [vmem:[#allocation2 + $0xaa8] sm:$0xff]
    %v462 = vld [vmem:[#allocation2 + $0xab0] sm:$0xff]
    %v463 = vld [vmem:[#allocation2 + $0xab8] sm:$0xff]
    %v464 = vld [vmem:[#allocation2 + $0xac0] sm:$0xff]
    %v465 = vld [vmem:[#allocation2 + $0xac8] sm:$0xff]
    %v466 = vld [vmem:[#allocation2 + $0xad0] sm:$0xff]
    %v467 = vld [vmem:[#allocation2 + $0xad8] sm:$0xff]
    %v468 = vld [vmem:[#allocation2 + $0xae0] sm:$0xff]
    %v469 = vld [vmem:[#allocation2 + $0xae8] sm:$0xff]
    %v470 = vld [vmem:[#allocation2 + $0xaf0] sm:$0xff]
    %v471 = vld [vmem:[#allocation2 + $0xaf8] sm:$0xff]
    %v472 = vld [vmem:[#allocation2 + $0xb00] sm:$0xff]
    %v473 = vld [vmem:[#allocation2 + $0xb08] sm:$0xff]
    %v474 = vld [vmem:[#allocation2 + $0xb10] sm:$0xff]
    %v475 = vld [vmem:[#allocation2 + $0xb18] sm:$0xff]
    %v476 = vld [vmem:[#allocation2 + $0xb20] sm:$0xff]
    %v477 = vld [vmem:[#allocation2 + $0xb28] sm:$0xff]
    %v478 = vld [vmem:[#allocation2 + $0xb30] sm:$0xff]
    %v479 = vld [vmem:[#allocation2 + $0xb38] sm:$0xff]
    %v480 = vld [vmem:[#allocation2 + $0xb40] sm:$0xff]
    %v481 = vld [vmem:[#allocation2 + $0xb48] sm:$0xff]
    %v482 = vld [vmem:[#allocation2 + $0xb50] sm:$0xff]
    %v483 = vld [vmem:[#allocation2 + $0xb58] sm:$0xff]
    %v484 = vld [vmem:[#allocation2 + $0xb60] sm:$0xff]
    %v485 = vld [vmem:[#allocation2 + $0xb68] sm:$0xff]
    %v486 = vld [vmem:[#allocation2 + $0xb70] sm:$0xff]
    %v487 = vld [vmem:[#allocation2 + $0xb78] sm:$0xff]
    %v488 = vld [vmem:[#allocation2 + $0xb80] sm:$0xff]
    %v489 = vld [vmem:[#allocation2 + $0xb88] sm:$0xff]
    %v490 = vld [vmem:[#allocation2 + $0xb90] sm:$0xff]
    %v491 = vld [vmem:[#allocation2 + $0xb98] sm:$0xff]
    %v492 = vld [vmem:[#allocation2 + $0xba0] sm:$0xff]
    %v493 = vld [vmem:[#allocation2 + $0xba8] sm:$0xff]
    %v494 = vld [vmem:[#allocation2 + $0xbb0] sm:$0xff]
    %v495 = vld [vmem:[#allocation2 + $0xbb8] sm:$0xff]
    %v496 = vld [vmem:[#allocation2 + $0xbc0] sm:$0xff]
    %v497 = vld [vmem:[#allocation2 + $0xbc8] sm:$0xff]
    %v498 = vld [vmem:[#allocation2 + $0xbd0] sm:$0xff]
    %v499 = vld [vmem:[#allocation2 + $0xbd8] sm:$0xff]
    %v500 = vld [vmem:[#allocation2 + $0xbe0] sm:$0xff]
    %v501 = vld [vmem:[#allocation2 + $0xbe8] sm:$0xff]
    %v502 = vld [vmem:[#allocation2 + $0xbf0] sm:$0xff]
    %v503 = vld [vmem:[#allocation2 + $0xbf8] sm:$0xff]
    %v504 = vld [vmem:[#allocation2 + $0xc00] sm:$0xff]
    %v505 = vld [vmem:[#allocation2 + $0xc08] sm:$0xff]
    %v506 = vld [vmem:[#allocation2 + $0xc10] sm:$0xff]
    %v507 = vld [vmem:[#allocation2 + $0xc18] sm:$0xff]
    %v508 = vld [vmem:[#allocation2 + $0xc20] sm:$0xff]
    %v509 = vld [vmem:[#allocation2 + $0xc28] sm:$0xff]
    %v510 = vld [vmem:[#allocation2 + $0xc30] sm:$0xff]
    %v511 = vld [vmem:[#allocation2 + $0xc38] sm:$0xff]
    %v512 = vld [vmem:[#allocation2 + $0xc40] sm:$0xff]
    %v513 = vld [vmem:[#allocation2 + $0xc48] sm:$0xff]
    %v514 = vld [vmem:[#allocation2 + $0xc50] sm:$0xff]
    %v515 = vld [vmem:[#allocation2 + $0xc58] sm:$0xff]
    %v516 = vld [vmem:[#allocation2 + $0xc60] sm:$0xff]
    %v517 = vld [vmem:[#allocation2 + $0xc68] sm:$0xff]
    %v518 = vld [vmem:[#allocation2 + $0xc70] sm:$0xff]
    %v519 = vld [vmem:[#allocation2 + $0xc78] sm:$0xff]
    %v520 = vld [vmem:[#allocation2 + $0xc80] sm:$0xff]
    %v521 = vld [vmem:[#allocation2 + $0xc88] sm:$0xff]
    %v522 = vld [vmem:[#allocation2 + $0xc90] sm:$0xff]
    %v523 = vld [vmem:[#allocation2 + $0xc98] sm:$0xff]
    %v524 = vld [vmem:[#allocation2 + $0xca0] sm:$0xff]
    %v525 = vld [vmem:[#allocation2 + $0xca8] sm:$0xff]
    %v526 = vld [vmem:[#allocation2 + $0xcb0] sm:$0xff]
    %v527 = vld [vmem:[#allocation2 + $0xcb8] sm:$0xff]
    %v528 = vld [vmem:[#allocation2 + $0xcc0] sm:$0xff]
    %v529 = vld [vmem:[#allocation2 + $0xcc8] sm:$0xff]
    %v530 = vld [vmem:[#allocation2 + $0xcd0] sm:$0xff]
    %v531 = vld [vmem:[#allocation2 + $0xcd8] sm:$0xff]
    %v532 = vld [vmem:[#allocation2 + $0xce0] sm:$0xff]
    %v533 = vld [vmem:[#allocation2 + $0xce8] sm:$0xff]
    %v534 = vld [vmem:[#allocation2 + $0xcf0] sm:$0xff]
    %v535 = vld [vmem:[#allocation2 + $0xcf8] sm:$0xff]
    %v536 = vld [vmem:[#allocation2 + $0xd00] sm:$0xff]
    %v537 = vld [vmem:[#allocation2 + $0xd08] sm:$0xff]
    %v538 = vld [vmem:[#allocation2 + $0xd10] sm:$0xff]
    %v539 = vld [vmem:[#allocation2 + $0xd18] sm:$0xff]
    %v540 = vld [vmem:[#allocation2 + $0xd20] sm:$0xff]
    %v541 = vld [vmem:[#allocation2 + $0xd28] sm:$0xff]
    %v542 = vld [vmem:[#allocation2 + $0xd30] sm:$0xff]
    %v543 = vld [vmem:[#allocation2 + $0xd38] sm:$0xff]
    %v544 = vld [vmem:[#allocation2 + $0xd40] sm:$0xff]
    %v545 = vld [vmem:[#allocation2 + $0xd48] sm:$0xff]
    %v546 = vld [vmem:[#allocation2 + $0xd50] sm:$0xff]
    %v547 = vld [vmem:[#allocation2 + $0xd58] sm:$0xff]
    %v548 = vld [vmem:[#allocation2 + $0xd60] sm:$0xff]
    %v549 = vld [vmem:[#allocation2 + $0xd68] sm:$0xff]
    %v550 = vld [vmem:[#allocation2 + $0xd70] sm:$0xff]
    %v551 = vld [vmem:[#allocation2 + $0xd78] sm:$0xff]
    %v552 = vld [vmem:[#allocation2 + $0xd80] sm:$0xff]
    %v553 = vld [vmem:[#allocation2 + $0xd88] sm:$0xff]
    %v554 = vld [vmem:[#allocation2 + $0xd90] sm:$0xff]
    %v555 = vld [vmem:[#allocation2 + $0xd98] sm:$0xff]
    %v556 = vld [vmem:[#allocation2 + $0xda0] sm:$0xff]
    %v557 = vld [vmem:[#allocation2 + $0xda8] sm:$0xff]
    %v558 = vld [vmem:[#allocation2 + $0xdb0] sm:$0xff]
    %v559 = vld [vmem:[#allocation2 + $0xdb8] sm:$0xff]
    %v560 = vld [vmem:[#allocation2 + $0xdc0] sm:$0xff]
    %v561 = vld [vmem:[#allocation2 + $0xdc8] sm:$0xff]
    %v562 = vld [vmem:[#allocation2 + $0xdd0] sm:$0xff]
    %v563 = vld [vmem:[#allocation2 + $0xdd8] sm:$0xff]
    %v564 = vld [vmem:[#allocation2 + $0xde0] sm:$0xff]
    %v565 = vld [vmem:[#allocation2 + $0xde8] sm:$0xff]
    %v566 = vld [vmem:[#allocation2 + $0xdf0] sm:$0xff]
    %v567 = vld [vmem:[#allocation2 + $0xdf8] sm:$0xff]
    %v568 = vld [vmem:[#allocation2 + $0xe00] sm:$0xff]
    %v569 = vld [vmem:[#allocation2 + $0xe08] sm:$0xff]
    %v570 = vld [vmem:[#allocation2 + $0xe10] sm:$0xff]
    %v571 = vld [vmem:[#allocation2 + $0xe18] sm:$0xff]
    %v572 = vld [vmem:[#allocation2 + $0xe20] sm:$0xff]
    %v573 = vld [vmem:[#allocation2 + $0xe28] sm:$0xff]
    %v574 = vld [vmem:[#allocation2 + $0xe30] sm:$0xff]
    %v575 = vld [vmem:[#allocation2 + $0xe38] sm:$0xff]
    %v576 = vld [vmem:[#allocation2 + $0xe40] sm:$0xff]
    %v577 = vld [vmem:[#allocation2 + $0xe48] sm:$0xff]
    %v578 = vld [vmem:[#allocation2 + $0xe50] sm:$0xff]
    %v579 = vld [vmem:[#allocation2 + $0xe58] sm:$0xff]
    %v580 = vld [vmem:[#allocation2 + $0xe60] sm:$0xff]
    %v581 = vld [vmem:[#allocation2 + $0xe68] sm:$0xff]
    %v582 = vld [vmem:[#allocation2 + $0xe70] sm:$0xff]
    %v583 = vld [vmem:[#allocation2 + $0xe78] sm:$0xff]
    %v584 = vld [vmem:[#allocation2 + $0xe80] sm:$0xff]
    %v585 = vld [vmem:[#allocation2 + $0xe88] sm:$0xff]
    %v586 = vld [vmem:[#allocation2 + $0xe90] sm:$0xff]
    %v587 = vld [vmem:[#allocation2 + $0xe98] sm:$0xff]
    %v588 = vld [vmem:[#allocation2 + $0xea0] sm:$0xff]
    %v589 = vld [vmem:[#allocation2 + $0xea8] sm:$0xff]
    %v590 = vld [vmem:[#allocation2 + $0xeb0] sm:$0xff]
    %v591 = vld [vmem:[#allocation2 + $0xeb8] sm:$0xff]
    %v592 = vld [vmem:[#allocation2 + $0xec0] sm:$0xff]
    %v593 = vld [vmem:[#allocation2 + $0xec8] sm:$0xff]
    %v594 = vld [vmem:[#allocation2 + $0xed0] sm:$0xff]
    %v595 = vld [vmem:[#allocation2 + $0xed8] sm:$0xff]
    %v596 = vld [vmem:[#allocation2 + $0xee0] sm:$0xff]
    %v597 = vld [vmem:[#allocation2 + $0xee8] sm:$0xff]
    %v598 = vld [vmem:[#allocation2 + $0xef0] sm:$0xff]
    %v599 = vld [vmem:[#allocation2 + $0xef8] sm:$0xff]
    %v600 = vld [vmem:[#allocation2 + $0xf00] sm:$0xff]
    %v601 = vld [vmem:[#allocation2 + $0xf08] sm:$0xff]
    %v602 = vld [vmem:[#allocation2 + $0xf10] sm:$0xff]
    %v603 = vld [vmem:[#allocation2 + $0xf18] sm:$0xff]
    %v604 = vld [vmem:[#allocation2 + $0xf20] sm:$0xff]
    %v605 = vld [vmem:[#allocation2 + $0xf28] sm:$0xff]
    %v606 = vld [vmem:[#allocation2 + $0xf30] sm:$0xff]
    %v607 = vld [vmem:[#allocation2 + $0xf38] sm:$0xff]
    %v608 = vld [vmem:[#allocation2 + $0xf40] sm:$0xff]
    %v609 = vld [vmem:[#allocation2 + $0xf48] sm:$0xff]
    %v610 = vld [vmem:[#allocation2 + $0xf50] sm:$0xff]
    %v611 = vld [vmem:[#allocation2 + $0xf58] sm:$0xff]
    %v612 = vld [vmem:[#allocation2 + $0xf60] sm:$0xff]
    %v613 = vld [vmem:[#allocation2 + $0xf68] sm:$0xff]
    %v614 = vld [vmem:[#allocation2 + $0xf70] sm:$0xff]
    %v615 = vld [vmem:[#allocation2 + $0xf78] sm:$0xff]
    %v616 = vld [vmem:[#allocation2 + $0xf80] sm:$0xff]
    %v617 = vld [vmem:[#allocation2 + $0xf88] sm:$0xff]
    %v618 = vld [vmem:[#allocation2 + $0xf90] sm:$0xff]
    %v619 = vld [vmem:[#allocation2 + $0xf98] sm:$0xff]
    %v620 = vld [vmem:[#allocation2 + $0xfa0] sm:$0xff]
    %v621 = vld [vmem:[#allocation2 + $0xfa8] sm:$0xff]
    %v622 = vld [vmem:[#allocation2 + $0xfb0] sm:$0xff]
    %v623 = vld [vmem:[#allocation2 + $0xfb8] sm:$0xff]
    %v624 = vld [vmem:[#allocation2 + $0xfc0] sm:$0xff]
    %v625 = vld [vmem:[#allocation2 + $0xfc8] sm:$0xff]
    %v626 = vld [vmem:[#allocation2 + $0xfd0] sm:$0xff]
    %v627 = vld [vmem:[#allocation2 + $0xfd8] sm:$0xff]
    %v628 = vld [vmem:[#allocation2 + $0xfe0] sm:$0xff]
    %v629 = vld [vmem:[#allocation2 + $0xfe8] sm:$0xff]
    %v630 = vld [vmem:[#allocation2 + $0xff0] sm:$0xff]
    %v631 = vld [vmem:[#allocation2 + $0xff8] sm:$0xff]
    %634 = vst [vmem:[#allocation1] ss:$4 sm:$0xff] %v118
    %s635 = scalar_lea.vmem [#allocation1], 32
    %636 = vst [vmem:[%s635] ss:$4 sm:$0xff] %v119
    %v637 = vld.sshfl [vmem:[#allocation1] sm:$0xff pattern:$0x73625140]
    %v638 = vld.sshfl [vmem:[#allocation1 + $0x8] sm:$0xff pattern:$0x73625140]
    %v639 = vld.sshfl [vmem:[#allocation1 + $0x10] sm:$0xff pattern:$0x73625140]
    %v640 = vld.sshfl [vmem:[#allocation1 + $0x18] sm:$0xff pattern:$0x73625140]
    %v641 = vld.sshfl [vmem:[#allocation1 + $0x20] sm:$0xff pattern:$0x73625140]
    %v642 = vld.sshfl [vmem:[#allocation1 + $0x28] sm:$0xff pattern:$0x73625140]
    %v643 = vld.sshfl [vmem:[#allocation1 + $0x30] sm:$0xff pattern:$0x73625140]
    %v644 = vld.sshfl [vmem:[#allocation1 + $0x38] sm:$0xff pattern:$0x73625140]
    %653 = vmatpush.msra.mxu0 %v180
    %654 = vmatpush.msra.mxu0 %v176
    %655 = vmatpush.msra.mxu0 %v172
    %656 = vmatpush.msra.mxu0 %v168
    %657 = vmatpush.msra.mxu0 %v164
    %658 = vmatpush.msra.mxu0 %v160
    %659 = vmatpush.msra.mxu0 %v156
    %660 = vmatpush.msra.mxu0 %v152
    %661 = vmatpush.msra.mxu0 %v148
    %662 = vmatpush.msra.mxu0 %v144
    %663 = vmatpush.msra.mxu0 %v140
    %664 = vmatpush.msra.mxu0 %v136
    %665 = vmatpush.msra.mxu0 %v132
    %666 = vmatpush.msra.mxu0 %v128
    %667 = vmatpush.msra.mxu0 %v124
    %668 = vmatpush.msra.mxu0 %v120
    %669 = vmatmul.f32.gmra.mxu0 %v637
    %v670 = vpop.f32.mrf.mxu0
    %v671 = vadd.f32 0.0, %v670
    %672 = vdwg.mxu0
    %673 = vmatpush.msra.mxu0 %v244
    %674 = vmatpush.msra.mxu0 %v240
    %675 = vmatpush.msra.mxu0 %v236
    %676 = vmatpush.msra.mxu0 %v232
    %677 = vmatpush.msra.mxu0 %v228
    %678 = vmatpush.msra.mxu0 %v224
    %679 = vmatpush.msra.mxu0 %v220
    %680 = vmatpush.msra.mxu0 %v216
    %681 = vmatpush.msra.mxu0 %v212
    %682 = vmatpush.msra.mxu0 %v208
    %683 = vmatpush.msra.mxu0 %v204
    %684 = vmatpush.msra.mxu0 %v200
    %685 = vmatpush.msra.mxu0 %v196
    %686 = vmatpush.msra.mxu0 %v192
    %687 = vmatpush.msra.mxu0 %v188
    %688 = vmatpush.msra.mxu0 %v184
    %689 = vmatmul.f32.gmra.mxu0 %v638
    %v690 = vpop.f32.mrf.mxu0
    %v691 = vadd.f32 %v671, %v690
    %692 = vdwg.mxu0
    %693 = vmatpush.msra.mxu0 %v308
    %694 = vmatpush.msra.mxu0 %v304
    %695 = vmatpush.msra.mxu0 %v300
    %696 = vmatpush.msra.mxu0 %v296
    %697 = vmatpush.msra.mxu0 %v292
    %698 = vmatpush.msra.mxu0 %v288
    %699 = vmatpush.msra.mxu0 %v284
    %700 = vmatpush.msra.mxu0 %v280
    %701 = vmatpush.msra.mxu0 %v276
    %702 = vmatpush.msra.mxu0 %v272
    %703 = vmatpush.msra.mxu0 %v268
    %704 = vmatpush.msra.mxu0 %v264
    %705 = vmatpush.msra.mxu0 %v260
    %706 = vmatpush.msra.mxu0 %v256
    %707 = vmatpush.msra.mxu0 %v252
    %708 = vmatpush.msra.mxu0 %v248
    %709 = vmatmul.f32.gmra.mxu0 %v639
    %v710 = vpop.f32.mrf.mxu0
    %v711 = vadd.f32 %v691, %v710
    %712 = vdwg.mxu0
    %713 = vmatpush.msra.mxu0 %v372
    %714 = vmatpush.msra.mxu0 %v368
    %715 = vmatpush.msra.mxu0 %v364
    %716 = vmatpush.msra.mxu0 %v360
    %717 = vmatpush.msra.mxu0 %v356
    %718 = vmatpush.msra.mxu0 %v352
    %719 = vmatpush.msra.mxu0 %v348
    %720 = vmatpush.msra.mxu0 %v344
    %721 = vmatpush.msra.mxu0 %v340
    %722 = vmatpush.msra.mxu0 %v336
    %723 = vmatpush.msra.mxu0 %v332
    %724 = vmatpush.msra.mxu0 %v328
    %725 = vmatpush.msra.mxu0 %v324
    %726 = vmatpush.msra.mxu0 %v320
    %727 = vmatpush.msra.mxu0 %v316
    %728 = vmatpush.msra.mxu0 %v312
    %729 = vmatmul.f32.gmra.mxu0 %v640
    %v730 = vpop.f32.mrf.mxu0
    %v731 = vadd.f32 %v711, %v730
    %732 = vdwg.mxu0
    %733 = vmatpush.msra.mxu0 %v436
    %734 = vmatpush.msra.mxu0 %v432
    %735 = vmatpush.msra.mxu0 %v428
    %736 = vmatpush.msra.mxu0 %v424
    %737 = vmatpush.msra.mxu0 %v420
    %738 = vmatpush.msra.mxu0 %v416
    %739 = vmatpush.msra.mxu0 %v412
    %740 = vmatpush.msra.mxu0 %v408
    %741 = vmatpush.msra.mxu0 %v404
    %742 = vmatpush.msra.mxu0 %v400
    %743 = vmatpush.msra.mxu0 %v396
    %744 = vmatpush.msra.mxu0 %v392
    %745 = vmatpush.msra.mxu0 %v388
    %746 = vmatpush.msra.mxu0 %v384
    %747 = vmatpush.msra.mxu0 %v380
    %748 = vmatpush.msra.mxu0 %v376
    %749 = vmatmul.f32.gmra.mxu0 %v641
    %v750 = vpop.f32.mrf.mxu0
    %v751 = vadd.f32 %v731, %v750
    %752 = vdwg.mxu0
    %753 = vmatpush.msra.mxu0 %v500
    %754 = vmatpush.msra.mxu0 %v496
    %755 = vmatpush.msra.mxu0 %v492
    %756 = vmatpush.msra.mxu0 %v488
    %757 = vmatpush.msra.mxu0 %v484
    %758 = vmatpush.msra.mxu0 %v480
    %759 = vmatpush.msra.mxu0 %v476
    %760 = vmatpush.msra.mxu0 %v472
    %761 = vmatpush.msra.mxu0 %v468
    %762 = vmatpush.msra.mxu0 %v464
    %763 = vmatpush.msra.mxu0 %v460
    %764 = vmatpush.msra.mxu0 %v456
    %765 = vmatpush.msra.mxu0 %v452
    %766 = vmatpush.msra.mxu0 %v448
    %767 = vmatpush.msra.mxu0 %v444
    %768 = vmatpush.msra.mxu0 %v440
    %769 = vmatmul.f32.gmra.mxu0 %v642
    %v770 = vpop.f32.mrf.mxu0
    %v771 = vadd.f32 %v751, %v770
    %772 = vdwg.mxu0
    %773 = vmatpush.msra.mxu0 %v564
    %774 = vmatpush.msra.mxu0 %v560
    %775 = vmatpush.msra.mxu0 %v556
    %776 = vmatpush.msra.mxu0 %v552
    %777 = vmatpush.msra.mxu0 %v548
    %778 = vmatpush.msra.mxu0 %v544
    %779 = vmatpush.msra.mxu0 %v540
    %780 = vmatpush.msra.mxu0 %v536
    %781 = vmatpush.msra.mxu0 %v532
    %782 = vmatpush.msra.mxu0 %v528
    %783 = vmatpush.msra.mxu0 %v524
    %784 = vmatpush.msra.mxu0 %v520
    %785 = vmatpush.msra.mxu0 %v516
    %786 = vmatpush.msra.mxu0 %v512
    %787 = vmatpush.msra.mxu0 %v508
    %788 = vmatpush.msra.mxu0 %v504
    %789 = vmatmul.f32.gmra.mxu0 %v643
    %v790 = vpop.f32.mrf.mxu0
    %v791 = vadd.f32 %v771, %v790
    %792 = vdwg.mxu0
    %793 = vmatpush.msra.mxu0 %v628
    %794 = vmatpush.msra.mxu0 %v624
    %795 = vmatpush.msra.mxu0 %v620
    %796 = vmatpush.msra.mxu0 %v616
    %797 = vmatpush.msra.mxu0 %v612
    %798 = vmatpush.msra.mxu0 %v608
    %799 = vmatpush.msra.mxu0 %v604
    %800 = vmatpush.msra.mxu0 %v600
    %801 = vmatpush.msra.mxu0 %v596
    %802 = vmatpush.msra.mxu0 %v592
    %803 = vmatpush.msra.mxu0 %v588
    %804 = vmatpush.msra.mxu0 %v584
    %805 = vmatpush.msra.mxu0 %v580
    %806 = vmatpush.msra.mxu0 %v576
    %807 = vmatpush.msra.mxu0 %v572
    %808 = vmatpush.msra.mxu0 %v568
    %809 = vmatmul.f32.gmra.mxu0 %v644
    %v810 = vpop.f32.mrf.mxu0
    %v811 = vadd.f32 %v791, %v810
    %812 = vdwg.mxu0
    %813 = vmatpush.msra.mxu0 %v181
    %814 = vmatpush.msra.mxu0 %v177
    %815 = vmatpush.msra.mxu0 %v173
    %816 = vmatpush.msra.mxu0 %v169
    %817 = vmatpush.msra.mxu0 %v165
    %818 = vmatpush.msra.mxu0 %v161
    %819 = vmatpush.msra.mxu0 %v157
    %820 = vmatpush.msra.mxu0 %v153
    %821 = vmatpush.msra.mxu0 %v149
    %822 = vmatpush.msra.mxu0 %v145
    %823 = vmatpush.msra.mxu0 %v141
    %824 = vmatpush.msra.mxu0 %v137
    %825 = vmatpush.msra.mxu0 %v133
    %826 = vmatpush.msra.mxu0 %v129
    %827 = vmatpush.msra.mxu0 %v125
    %828 = vmatpush.msra.mxu0 %v121
    %829 = vmatmul.f32.gmra.mxu0 %v637
    %v830 = vpop.f32.mrf.mxu0
    %v831 = vadd.f32 0.0, %v830
    %832 = vdwg.mxu0
    %833 = vmatpush.msra.mxu0 %v245
    %834 = vmatpush.msra.mxu0 %v241
    %835 = vmatpush.msra.mxu0 %v237
    %836 = vmatpush.msra.mxu0 %v233
    %837 = vmatpush.msra.mxu0 %v229
    %838 = vmatpush.msra.mxu0 %v225
    %839 = vmatpush.msra.mxu0 %v221
    %840 = vmatpush.msra.mxu0 %v217
    %841 = vmatpush.msra.mxu0 %v213
    %842 = vmatpush.msra.mxu0 %v209
    %843 = vmatpush.msra.mxu0 %v205
    %844 = vmatpush.msra.mxu0 %v201
    %845 = vmatpush.msra.mxu0 %v197
    %846 = vmatpush.msra.mxu0 %v193
    %847 = vmatpush.msra.mxu0 %v189
    %848 = vmatpush.msra.mxu0 %v185
    %849 = vmatmul.f32.gmra.mxu0 %v638
    %v850 = vpop.f32.mrf.mxu0
    %v851 = vadd.f32 %v831, %v850
    %852 = vdwg.mxu0
    %853 = vmatpush.msra.mxu0 %v309
    %854 = vmatpush.msra.mxu0 %v305
    %855 = vmatpush.msra.mxu0 %v301
    %856 = vmatpush.msra.mxu0 %v297
    %857 = vmatpush.msra.mxu0 %v293
    %858 = vmatpush.msra.mxu0 %v289
    %859 = vmatpush.msra.mxu0 %v285
    %860 = vmatpush.msra.mxu0 %v281
    %861 = vmatpush.msra.mxu0 %v277
    %862 = vmatpush.msra.mxu0 %v273
    %863 = vmatpush.msra.mxu0 %v269
    %864 = vmatpush.msra.mxu0 %v265
    %865 = vmatpush.msra.mxu0 %v261
    %866 = vmatpush.msra.mxu0 %v257
    %867 = vmatpush.msra.mxu0 %v253
    %868 = vmatpush.msra.mxu0 %v249
    %869 = vmatmul.f32.gmra.mxu0 %v639
    %v870 = vpop.f32.mrf.mxu0
    %v871 = vadd.f32 %v851, %v870
    %872 = vdwg.mxu0
    %873 = vmatpush.msra.mxu0 %v373
    %874 = vmatpush.msra.mxu0 %v369
    %875 = vmatpush.msra.mxu0 %v365
    %876 = vmatpush.msra.mxu0 %v361
    %877 = vmatpush.msra.mxu0 %v357
    %878 = vmatpush.msra.mxu0 %v353
    %879 = vmatpush.msra.mxu0 %v349
    %880 = vmatpush.msra.mxu0 %v345
    %881 = vmatpush.msra.mxu0 %v341
    %882 = vmatpush.msra.mxu0 %v337
    %883 = vmatpush.msra.mxu0 %v333
    %884 = vmatpush.msra.mxu0 %v329
    %885 = vmatpush.msra.mxu0 %v325
    %886 = vmatpush.msra.mxu0 %v321
    %887 = vmatpush.msra.mxu0 %v317
    %888 = vmatpush.msra.mxu0 %v313
    %889 = vmatmul.f32.gmra.mxu0 %v640
    %v890 = vpop.f32.mrf.mxu0
    %v891 = vadd.f32 %v871, %v890
    %892 = vdwg.mxu0
    %893 = vmatpush.msra.mxu0 %v437
    %894 = vmatpush.msra.mxu0 %v433
    %895 = vmatpush.msra.mxu0 %v429
    %896 = vmatpush.msra.mxu0 %v425
    %897 = vmatpush.msra.mxu0 %v421
    %898 = vmatpush.msra.mxu0 %v417
    %899 = vmatpush.msra.mxu0 %v413
    %900 = vmatpush.msra.mxu0 %v409
    %901 = vmatpush.msra.mxu0 %v405
    %902 = vmatpush.msra.mxu0 %v401
    %903 = vmatpush.msra.mxu0 %v397
    %904 = vmatpush.msra.mxu0 %v393
    %905 = vmatpush.msra.mxu0 %v389
    %906 = vmatpush.msra.mxu0 %v385
    %907 = vmatpush.msra.mxu0 %v381
    %908 = vmatpush.msra.mxu0 %v377
    %909 = vmatmul.f32.gmra.mxu0 %v641
    %v910 = vpop.f32.mrf.mxu0
    %v911 = vadd.f32 %v891, %v910
    %912 = vdwg.mxu0
    %913 = vmatpush.msra.mxu0 %v501
    %914 = vmatpush.msra.mxu0 %v497
    %915 = vmatpush.msra.mxu0 %v493
    %916 = vmatpush.msra.mxu0 %v489
    %917 = vmatpush.msra.mxu0 %v485
    %918 = vmatpush.msra.mxu0 %v481
    %919 = vmatpush.msra.mxu0 %v477
    %920 = vmatpush.msra.mxu0 %v473
    %921 = vmatpush.msra.mxu0 %v469
    %922 = vmatpush.msra.mxu0 %v465
    %923 = vmatpush.msra.mxu0 %v461
    %924 = vmatpush.msra.mxu0 %v457
    %925 = vmatpush.msra.mxu0 %v453
    %926 = vmatpush.msra.mxu0 %v449
    %927 = vmatpush.msra.mxu0 %v445
    %928 = vmatpush.msra.mxu0 %v441
    %929 = vmatmul.f32.gmra.mxu0 %v642
    %v930 = vpop.f32.mrf.mxu0
    %v931 = vadd.f32 %v911, %v930
    %932 = vdwg.mxu0
    %933 = vmatpush.msra.mxu0 %v565
    %934 = vmatpush.msra.mxu0 %v561
    %935 = vmatpush.msra.mxu0 %v557
    %936 = vmatpush.msra.mxu0 %v553
    %937 = vmatpush.msra.mxu0 %v549
    %938 = vmatpush.msra.mxu0 %v545
    %939 = vmatpush.msra.mxu0 %v541
    %940 = vmatpush.msra.mxu0 %v537
    %941 = vmatpush.msra.mxu0 %v533
    %942 = vmatpush.msra.mxu0 %v529
    %943 = vmatpush.msra.mxu0 %v525
    %944 = vmatpush.msra.mxu0 %v521
    %945 = vmatpush.msra.mxu0 %v517
    %946 = vmatpush.msra.mxu0 %v513
    %947 = vmatpush.msra.mxu0 %v509
    %948 = vmatpush.msra.mxu0 %v505
    %949 = vmatmul.f32.gmra.mxu0 %v643
    %v950 = vpop.f32.mrf.mxu0
    %v951 = vadd.f32 %v931, %v950
    %952 = vdwg.mxu0
    %953 = vmatpush.msra.mxu0 %v629
    %954 = vmatpush.msra.mxu0 %v625
    %955 = vmatpush.msra.mxu0 %v621
    %956 = vmatpush.msra.mxu0 %v617
    %957 = vmatpush.msra.mxu0 %v613
    %958 = vmatpush.msra.mxu0 %v609
    %959 = vmatpush.msra.mxu0 %v605
    %960 = vmatpush.msra.mxu0 %v601
    %961 = vmatpush.msra.mxu0 %v597
    %962 = vmatpush.msra.mxu0 %v593
    %963 = vmatpush.msra.mxu0 %v589
    %964 = vmatpush.msra.mxu0 %v585
    %965 = vmatpush.msra.mxu0 %v581
    %966 = vmatpush.msra.mxu0 %v577
    %967 = vmatpush.msra.mxu0 %v573
    %968 = vmatpush.msra.mxu0 %v569
    %969 = vmatmul.f32.gmra.mxu0 %v644
    %v970 = vpop.f32.mrf.mxu0
    %v971 = vadd.f32 %v951, %v970
    %972 = vdwg.mxu0
    %973 = vmatpush.msra.mxu0 %v182
    %974 = vmatpush.msra.mxu0 %v178
    %975 = vmatpush.msra.mxu0 %v174
    %976 = vmatpush.msra.mxu0 %v170
    %977 = vmatpush.msra.mxu0 %v166
    %978 = vmatpush.msra.mxu0 %v162
    %979 = vmatpush.msra.mxu0 %v158
    %980 = vmatpush.msra.mxu0 %v154
    %981 = vmatpush.msra.mxu0 %v150
    %982 = vmatpush.msra.mxu0 %v146
    %983 = vmatpush.msra.mxu0 %v142
    %984 = vmatpush.msra.mxu0 %v138
    %985 = vmatpush.msra.mxu0 %v134
    %986 = vmatpush.msra.mxu0 %v130
    %987 = vmatpush.msra.mxu0 %v126
    %988 = vmatpush.msra.mxu0 %v122
    %989 = vmatmul.f32.gmra.mxu0 %v637
    %v990 = vpop.f32.mrf.mxu0
    %v991 = vadd.f32 0.0, %v990
    %992 = vdwg.mxu0
    %993 = vmatpush.msra.mxu0 %v246
    %994 = vmatpush.msra.mxu0 %v242
    %995 = vmatpush.msra.mxu0 %v238
    %996 = vmatpush.msra.mxu0 %v234
    %997 = vmatpush.msra.mxu0 %v230
    %998 = vmatpush.msra.mxu0 %v226
    %999 = vmatpush.msra.mxu0 %v222
    %1000 = vmatpush.msra.mxu0 %v218
    %1001 = vmatpush.msra.mxu0 %v214
    %1002 = vmatpush.msra.mxu0 %v210
    %1003 = vmatpush.msra.mxu0 %v206
    %1004 = vmatpush.msra.mxu0 %v202
    %1005 = vmatpush.msra.mxu0 %v198
    %1006 = vmatpush.msra.mxu0 %v194
    %1007 = vmatpush.msra.mxu0 %v190
    %1008 = vmatpush.msra.mxu0 %v186
    %1009 = vmatmul.f32.gmra.mxu0 %v638
    %v1010 = vpop.f32.mrf.mxu0
    %v1011 = vadd.f32 %v991, %v1010
    %1012 = vdwg.mxu0
    %1013 = vmatpush.msra.mxu0 %v310
    %1014 = vmatpush.msra.mxu0 %v306
    %1015 = vmatpush.msra.mxu0 %v302
    %1016 = vmatpush.msra.mxu0 %v298
    %1017 = vmatpush.msra.mxu0 %v294
    %1018 = vmatpush.msra.mxu0 %v290
    %1019 = vmatpush.msra.mxu0 %v286
    %1020 = vmatpush.msra.mxu0 %v282
    %1021 = vmatpush.msra.mxu0 %v278
    %1022 = vmatpush.msra.mxu0 %v274
    %1023 = vmatpush.msra.mxu0 %v270
    %1024 = vmatpush.msra.mxu0 %v266
    %1025 = vmatpush.msra.mxu0 %v262
    %1026 = vmatpush.msra.mxu0 %v258
    %1027 = vmatpush.msra.mxu0 %v254
    %1028 = vmatpush.msra.mxu0 %v250
    %1029 = vmatmul.f32.gmra.mxu0 %v639
    %v1030 = vpop.f32.mrf.mxu0
    %v1031 = vadd.f32 %v1011, %v1030
    %1032 = vdwg.mxu0
    %1033 = vmatpush.msra.mxu0 %v374
    %1034 = vmatpush.msra.mxu0 %v370
    %1035 = vmatpush.msra.mxu0 %v366
    %1036 = vmatpush.msra.mxu0 %v362
    %1037 = vmatpush.msra.mxu0 %v358
    %1038 = vmatpush.msra.mxu0 %v354
    %1039 = vmatpush.msra.mxu0 %v350
    %1040 = vmatpush.msra.mxu0 %v346
    %1041 = vmatpush.msra.mxu0 %v342
    %1042 = vmatpush.msra.mxu0 %v338
    %1043 = vmatpush.msra.mxu0 %v334
    %1044 = vmatpush.msra.mxu0 %v330
    %1045 = vmatpush.msra.mxu0 %v326
    %1046 = vmatpush.msra.mxu0 %v322
    %1047 = vmatpush.msra.mxu0 %v318
    %1048 = vmatpush.msra.mxu0 %v314
    %1049 = vmatmul.f32.gmra.mxu0 %v640
    %v1050 = vpop.f32.mrf.mxu0
    %v1051 = vadd.f32 %v1031, %v1050
    %1052 = vdwg.mxu0
    %1053 = vmatpush.msra.mxu0 %v438
    %1054 = vmatpush.msra.mxu0 %v434
    %1055 = vmatpush.msra.mxu0 %v430
    %1056 = vmatpush.msra.mxu0 %v426
    %1057 = vmatpush.msra.mxu0 %v422
    %1058 = vmatpush.msra.mxu0 %v418
    %1059 = vmatpush.msra.mxu0 %v414
    %1060 = vmatpush.msra.mxu0 %v410
    %1061 = vmatpush.msra.mxu0 %v406
    %1062 = vmatpush.msra.mxu0 %v402
    %1063 = vmatpush.msra.mxu0 %v398
    %1064 = vmatpush.msra.mxu0 %v394
    %1065 = vmatpush.msra.mxu0 %v390
    %1066 = vmatpush.msra.mxu0 %v386
    %1067 = vmatpush.msra.mxu0 %v382
    %1068 = vmatpush.msra.mxu0 %v378
    %1069 = vmatmul.f32.gmra.mxu0 %v641
    %v1070 = vpop.f32.mrf.mxu0
    %v1071 = vadd.f32 %v1051, %v1070
    %1072 = vdwg.mxu0
    %1073 = vmatpush.msra.mxu0 %v502
    %1074 = vmatpush.msra.mxu0 %v498
    %1075 = vmatpush.msra.mxu0 %v494
    %1076 = vmatpush.msra.mxu0 %v490
    %1077 = vmatpush.msra.mxu0 %v486
    %1078 = vmatpush.msra.mxu0 %v482
    %1079 = vmatpush.msra.mxu0 %v478
    %1080 = vmatpush.msra.mxu0 %v474
    %1081 = vmatpush.msra.mxu0 %v470
    %1082 = vmatpush.msra.mxu0 %v466
    %1083 = vmatpush.msra.mxu0 %v462
    %1084 = vmatpush.msra.mxu0 %v458
    %1085 = vmatpush.msra.mxu0 %v454
    %1086 = vmatpush.msra.mxu0 %v450
    %1087 = vmatpush.msra.mxu0 %v446
    %1088 = vmatpush.msra.mxu0 %v442
    %1089 = vmatmul.f32.gmra.mxu0 %v642
    %v1090 = vpop.f32.mrf.mxu0
    %v1091 = vadd.f32 %v1071, %v1090
    %1092 = vdwg.mxu0
    %1093 = vmatpush.msra.mxu0 %v566
    %1094 = vmatpush.msra.mxu0 %v562
    %1095 = vmatpush.msra.mxu0 %v558
    %1096 = vmatpush.msra.mxu0 %v554
    %1097 = vmatpush.msra.mxu0 %v550
    %1098 = vmatpush.msra.mxu0 %v546
    %1099 = vmatpush.msra.mxu0 %v542
    %1100 = vmatpush.msra.mxu0 %v538
    %1101 = vmatpush.msra.mxu0 %v534
    %1102 = vmatpush.msra.mxu0 %v530
    %1103 = vmatpush.msra.mxu0 %v526
    %1104 = vmatpush.msra.mxu0 %v522
    %1105 = vmatpush.msra.mxu0 %v518
    %1106 = vmatpush.msra.mxu0 %v514
    %1107 = vmatpush.msra.mxu0 %v510
    %1108 = vmatpush.msra.mxu0 %v506
    %1109 = vmatmul.f32.gmra.mxu0 %v643
    %v1110 = vpop.f32.mrf.mxu0
    %v1111 = vadd.f32 %v1091, %v1110
    %1112 = vdwg.mxu0
    %1113 = vmatpush.msra.mxu0 %v630
    %1114 = vmatpush.msra.mxu0 %v626
    %1115 = vmatpush.msra.mxu0 %v622
    %1116 = vmatpush.msra.mxu0 %v618
    %1117 = vmatpush.msra.mxu0 %v614
    %1118 = vmatpush.msra.mxu0 %v610
    %1119 = vmatpush.msra.mxu0 %v606
    %1120 = vmatpush.msra.mxu0 %v602
    %1121 = vmatpush.msra.mxu0 %v598
    %1122 = vmatpush.msra.mxu0 %v594
    %1123 = vmatpush.msra.mxu0 %v590
    %1124 = vmatpush.msra.mxu0 %v586
    %1125 = vmatpush.msra.mxu0 %v582
    %1126 = vmatpush.msra.mxu0 %v578
    %1127 = vmatpush.msra.mxu0 %v574
    %1128 = vmatpush.msra.mxu0 %v570
    %1129 = vmatmul.f32.gmra.mxu0 %v644
    %v1130 = vpop.f32.mrf.mxu0
    %v1131 = vadd.f32 %v1111, %v1130
    %1132 = vdwg.mxu0
    %1133 = vmatpush.msra.mxu0 %v183
    %1134 = vmatpush.msra.mxu0 %v179
    %1135 = vmatpush.msra.mxu0 %v175
    %1136 = vmatpush.msra.mxu0 %v171
    %1137 = vmatpush.msra.mxu0 %v167
    %1138 = vmatpush.msra.mxu0 %v163
    %1139 = vmatpush.msra.mxu0 %v159
    %1140 = vmatpush.msra.mxu0 %v155
    %1141 = vmatpush.msra.mxu0 %v151
    %1142 = vmatpush.msra.mxu0 %v147
    %1143 = vmatpush.msra.mxu0 %v143
    %1144 = vmatpush.msra.mxu0 %v139
    %1145 = vmatpush.msra.mxu0 %v135
    %1146 = vmatpush.msra.mxu0 %v131
    %1147 = vmatpush.msra.mxu0 %v127
    %1148 = vmatpush.msra.mxu0 %v123
    %1149 = vmatmul.f32.gmra.mxu0 %v637
    %v1150 = vpop.f32.mrf.mxu0
    %v1151 = vadd.f32 0.0, %v1150
    %1152 = vdwg.mxu0
    %1153 = vmatpush.msra.mxu0 %v247
    %1154 = vmatpush.msra.mxu0 %v243
    %1155 = vmatpush.msra.mxu0 %v239
    %1156 = vmatpush.msra.mxu0 %v235
    %1157 = vmatpush.msra.mxu0 %v231
    %1158 = vmatpush.msra.mxu0 %v227
    %1159 = vmatpush.msra.mxu0 %v223
    %1160 = vmatpush.msra.mxu0 %v219
    %1161 = vmatpush.msra.mxu0 %v215
    %1162 = vmatpush.msra.mxu0 %v211
    %1163 = vmatpush.msra.mxu0 %v207
    %1164 = vmatpush.msra.mxu0 %v203
    %1165 = vmatpush.msra.mxu0 %v199
    %1166 = vmatpush.msra.mxu0 %v195
    %1167 = vmatpush.msra.mxu0 %v191
    %1168 = vmatpush.msra.mxu0 %v187
    %1169 = vmatmul.f32.gmra.mxu0 %v638
    %v1170 = vpop.f32.mrf.mxu0
    %v1171 = vadd.f32 %v1151, %v1170
    %1172 = vdwg.mxu0
    %1173 = vmatpush.msra.mxu0 %v311
    %1174 = vmatpush.msra.mxu0 %v307
    %1175 = vmatpush.msra.mxu0 %v303
    %1176 = vmatpush.msra.mxu0 %v299
    %1177 = vmatpush.msra.mxu0 %v295
    %1178 = vmatpush.msra.mxu0 %v291
    %1179 = vmatpush.msra.mxu0 %v287
    %1180 = vmatpush.msra.mxu0 %v283
    %1181 = vmatpush.msra.mxu0 %v279
    %1182 = vmatpush.msra.mxu0 %v275
    %1183 = vmatpush.msra.mxu0 %v271
    %1184 = vmatpush.msra.mxu0 %v267
    %1185 = vmatpush.msra.mxu0 %v263
    %1186 = vmatpush.msra.mxu0 %v259
    %1187 = vmatpush.msra.mxu0 %v255
    %1188 = vmatpush.msra.mxu0 %v251
    %1189 = vmatmul.f32.gmra.mxu0 %v639
    %v1190 = vpop.f32.mrf.mxu0
    %v1191 = vadd.f32 %v1171, %v1190
    %1192 = vdwg.mxu0
    %1193 = vmatpush.msra.mxu0 %v375
    %1194 = vmatpush.msra.mxu0 %v371
    %1195 = vmatpush.msra.mxu0 %v367
    %1196 = vmatpush.msra.mxu0 %v363
    %1197 = vmatpush.msra.mxu0 %v359
    %1198 = vmatpush.msra.mxu0 %v355
    %1199 = vmatpush.msra.mxu0 %v351
    %1200 = vmatpush.msra.mxu0 %v347
    %1201 = vmatpush.msra.mxu0 %v343
    %1202 = vmatpush.msra.mxu0 %v339
    %1203 = vmatpush.msra.mxu0 %v335
    %1204 = vmatpush.msra.mxu0 %v331
    %1205 = vmatpush.msra.mxu0 %v327
    %1206 = vmatpush.msra.mxu0 %v323
    %1207 = vmatpush.msra.mxu0 %v319
    %1208 = vmatpush.msra.mxu0 %v315
    %1209 = vmatmul.f32.gmra.mxu0 %v640
    %v1210 = vpop.f32.mrf.mxu0
    %v1211 = vadd.f32 %v1191, %v1210
    %1212 = vdwg.mxu0
    %1213 = vmatpush.msra.mxu0 %v439
    %1214 = vmatpush.msra.mxu0 %v435
    %1215 = vmatpush.msra.mxu0 %v431
    %1216 = vmatpush.msra.mxu0 %v427
    %1217 = vmatpush.msra.mxu0 %v423
    %1218 = vmatpush.msra.mxu0 %v419
    %1219 = vmatpush.msra.mxu0 %v415
    %1220 = vmatpush.msra.mxu0 %v411
    %1221 = vmatpush.msra.mxu0 %v407
    %1222 = vmatpush.msra.mxu0 %v403
    %1223 = vmatpush.msra.mxu0 %v399
    %1224 = vmatpush.msra.mxu0 %v395
    %1225 = vmatpush.msra.mxu0 %v391
    %1226 = vmatpush.msra.mxu0 %v387
    %1227 = vmatpush.msra.mxu0 %v383
    %1228 = vmatpush.msra.mxu0 %v379
    %1229 = vmatmul.f32.gmra.mxu0 %v641
    %v1230 = vpop.f32.mrf.mxu0
    %v1231 = vadd.f32 %v1211, %v1230
    %1232 = vdwg.mxu0
    %1233 = vmatpush.msra.mxu0 %v503
    %1234 = vmatpush.msra.mxu0 %v499
    %1235 = vmatpush.msra.mxu0 %v495
    %1236 = vmatpush.msra.mxu0 %v491
    %1237 = vmatpush.msra.mxu0 %v487
    %1238 = vmatpush.msra.mxu0 %v483
    %1239 = vmatpush.msra.mxu0 %v479
    %1240 = vmatpush.msra.mxu0 %v475
    %1241 = vmatpush.msra.mxu0 %v471
    %1242 = vmatpush.msra.mxu0 %v467
    %1243 = vmatpush.msra.mxu0 %v463
    %1244 = vmatpush.msra.mxu0 %v459
    %1245 = vmatpush.msra.mxu0 %v455
    %1246 = vmatpush.msra.mxu0 %v451
    %1247 = vmatpush.msra.mxu0 %v447
    %1248 = vmatpush.msra.mxu0 %v443
    %1249 = vmatmul.f32.gmra.mxu0 %v642
    %v1250 = vpop.f32.mrf.mxu0
    %v1251 = vadd.f32 %v1231, %v1250
    %1252 = vdwg.mxu0
    %1253 = vmatpush.msra.mxu0 %v567
    %1254 = vmatpush.msra.mxu0 %v563
    %1255 = vmatpush.msra.mxu0 %v559
    %1256 = vmatpush.msra.mxu0 %v555
    %1257 = vmatpush.msra.mxu0 %v551
    %1258 = vmatpush.msra.mxu0 %v547
    %1259 = vmatpush.msra.mxu0 %v543
    %1260 = vmatpush.msra.mxu0 %v539
    %1261 = vmatpush.msra.mxu0 %v535
    %1262 = vmatpush.msra.mxu0 %v531
    %1263 = vmatpush.msra.mxu0 %v527
    %1264 = vmatpush.msra.mxu0 %v523
    %1265 = vmatpush.msra.mxu0 %v519
    %1266 = vmatpush.msra.mxu0 %v515
    %1267 = vmatpush.msra.mxu0 %v511
    %1268 = vmatpush.msra.mxu0 %v507
    %1269 = vmatmul.f32.gmra.mxu0 %v643
    %v1270 = vpop.f32.mrf.mxu0
    %v1271 = vadd.f32 %v1251, %v1270
    %1272 = vdwg.mxu0
    %1273 = vmatpush.msra.mxu0 %v631
    %1274 = vmatpush.msra.mxu0 %v627
    %1275 = vmatpush.msra.mxu0 %v623
    %1276 = vmatpush.msra.mxu0 %v619
    %1277 = vmatpush.msra.mxu0 %v615
    %1278 = vmatpush.msra.mxu0 %v611
    %1279 = vmatpush.msra.mxu0 %v607
    %1280 = vmatpush.msra.mxu0 %v603
    %1281 = vmatpush.msra.mxu0 %v599
    %1282 = vmatpush.msra.mxu0 %v595
    %1283 = vmatpush.msra.mxu0 %v591
    %1284 = vmatpush.msra.mxu0 %v587
    %1285 = vmatpush.msra.mxu0 %v583
    %1286 = vmatpush.msra.mxu0 %v579
    %1287 = vmatpush.msra.mxu0 %v575
    %1288 = vmatpush.msra.mxu0 %v571
    %1289 = vmatmul.f32.gmra.mxu0 %v644
    %v1290 = vpop.f32.mrf.mxu0
    %v1291 = vadd.f32 %v1271, %v1290
    %1292 = vdwg.mxu0
    %v1293 = vld [vmem:[#allocation4] sm:$0xf]
    %v1294 = vld [vmem:[#allocation6] sm:$0xf]
    %vm1295 = vcmask 1041408
    %v1296 = vsel %vm1295, %v811, 0.0
    %v1297 = vrot.slane %v1296, 4
    %v1298 = vadd.f32 %v1296, %v1297
    %v1299 = vrot.slane %v1298, 2
    %v1300 = vadd.f32 %v1298, %v1299
    %v1301 = vrot.slane %v1300, 1
    %v1302 = vadd.f32 %v1300, %v1301
    %v1303 = vsel %vm1295, %v971, 0.0
    %v1304 = vrot.slane %v1303, 4
    %v1305 = vadd.f32 %v1303, %v1304
    %v1306 = vrot.slane %v1305, 2
    %v1307 = vadd.f32 %v1305, %v1306
    %v1308 = vrot.slane %v1307, 1
    %v1309 = vadd.f32 %v1307, %v1308
    %v1310 = vsel %vm1295, %v1131, 0.0
    %v1311 = vrot.slane %v1310, 4
    %v1312 = vadd.f32 %v1310, %v1311
    %v1313 = vrot.slane %v1312, 2
    %v1314 = vadd.f32 %v1312, %v1313
    %v1315 = vrot.slane %v1314, 1
    %v1316 = vadd.f32 %v1314, %v1315
    %v1317 = vsel %vm1295, %v1291, 0.0
    %v1318 = vrot.slane %v1317, 4
    %v1319 = vadd.f32 %v1317, %v1318
    %v1320 = vrot.slane %v1319, 2
    %v1321 = vadd.f32 %v1319, %v1320
    %v1322 = vrot.slane %v1321, 1
    %v1323 = vadd.f32 %v1321, %v1322
    %v1324 = vrcp.pop 2.0
    %v1325 = vmul.f32 2.0, %v1324
    %v1326 = vsub.f32 1.0, %v1325
    %v1327 = vmul.f32 %v1324, %v1326
    %v1328 = vadd.f32 %v1324, %v1327
    %vm1329 = vweird.f32 %v1324
    %v1330 = vsel %vm1329, %v1324, %v1328
    %v1331 = vmul.f32 %v1302, %v1330
    %v1332 = vmul.f32 %v1309, %v1330
    %v1333 = vmul.f32 %v1316, %v1330
    %v1334 = vmul.f32 %v1323, %v1330
    %v1335 = vsub.f32 %v811, %v1331
    %v1336 = vsub.f32 %v971, %v1332
    %v1337 = vsub.f32 %v1131, %v1333
    %v1338 = vsub.f32 %v1291, %v1334
    %v1339 = vmul.f32 %v1335, %v1335
    %v1340 = vmul.f32 %v1336, %v1336
    %v1341 = vmul.f32 %v1337, %v1337
    %v1342 = vmul.f32 %v1338, %v1338
    %v1343 = vsel %vm1295, %v1339, 0.0
    %v1344 = vrot.slane %v1343, 4
    %v1345 = vadd.f32 %v1343, %v1344
    %v1346 = vrot.slane %v1345, 2
    %v1347 = vadd.f32 %v1345, %v1346
    %v1348 = vrot.slane %v1347, 1
    %v1349 = vadd.f32 %v1347, %v1348
    %v1350 = vsel %vm1295, %v1340, 0.0
    %v1351 = vrot.slane %v1350, 4
    %v1352 = vadd.f32 %v1350, %v1351
    %v1353 = vrot.slane %v1352, 2
    %v1354 = vadd.f32 %v1352, %v1353
    %v1355 = vrot.slane %v1354, 1
    %v1356 = vadd.f32 %v1354, %v1355
    %v1357 = vsel %vm1295, %v1341, 0.0
    %v1358 = vrot.slane %v1357, 4
    %v1359 = vadd.f32 %v1357, %v1358
    %v1360 = vrot.slane %v1359, 2
    %v1361 = vadd.f32 %v1359, %v1360
    %v1362 = vrot.slane %v1361, 1
    %v1363 = vadd.f32 %v1361, %v1362
    %v1364 = vsel %vm1295, %v1342, 0.0
    %v1365 = vrot.slane %v1364, 4
    %v1366 = vadd.f32 %v1364, %v1365
    %v1367 = vrot.slane %v1366, 2
    %v1368 = vadd.f32 %v1366, %v1367
    %v1369 = vrot.slane %v1368, 1
    %v1370 = vadd.f32 %v1368, %v1369
    %v1371 = vmul.f32 %v1349, %v1330
    %v1372 = vmul.f32 %v1356, %v1330
    %v1373 = vmul.f32 %v1363, %v1330
    %v1374 = vmul.f32 %v1370, %v1330
    %v1375 = vadd.f32 %v1371, 1e-05
    %v1376 = vadd.f32 %v1372, 1e-05
    %v1377 = vadd.f32 %v1373, 1e-05
    %v1378 = vadd.f32 %v1374, 1e-05
    %v1379 = vrsqrt.pop %v1375
    %v1380 = vmul.f32 %v1379, %v1375
    %v1381 = vmul.f32 %v1380, %v1379
    %v1382 = vmul.f32 0.5, %v1381
    %v1383 = vsub.f32 1.5, %v1382
    %v1384 = vmul.f32 %v1379, %v1383
    %vm1385 = vweird.f32 %v1375
    %vm1386 = vweird.f32 %v1379
    %vm1387 = vmor %vm1385, %vm1386
    %v1388 = vsel %vm1387, %v1379, %v1384
    %v1389 = vrsqrt.pop %v1376
    %v1390 = vmul.f32 %v1389, %v1376
    %v1391 = vmul.f32 %v1390, %v1389
    %v1392 = vmul.f32 0.5, %v1391
    %v1393 = vsub.f32 1.5, %v1392
    %v1394 = vmul.f32 %v1389, %v1393
    %vm1395 = vweird.f32 %v1376
    %vm1396 = vweird.f32 %v1389
    %vm1397 = vmor %vm1395, %vm1396
    %v1398 = vsel %vm1397, %v1389, %v1394
    %v1399 = vrsqrt.pop %v1377
    %v1400 = vmul.f32 %v1399, %v1377
    %v1401 = vmul.f32 %v1400, %v1399
    %v1402 = vmul.f32 0.5, %v1401
    %v1403 = vsub.f32 1.5, %v1402
    %v1404 = vmul.f32 %v1399, %v1403
    %vm1405 = vweird.f32 %v1377
    %vm1406 = vweird.f32 %v1399
    %vm1407 = vmor %vm1405, %vm1406
    %v1408 = vsel %vm1407, %v1399, %v1404
    %v1409 = vrsqrt.pop %v1378
    %v1410 = vmul.f32 %v1409, %v1378
    %v1411 = vmul.f32 %v1410, %v1409
    %v1412 = vmul.f32 0.5, %v1411
    %v1413 = vsub.f32 1.5, %v1412
    %v1414 = vmul.f32 %v1409, %v1413
    %vm1415 = vweird.f32 %v1378
    %vm1416 = vweird.f32 %v1409
    %vm1417 = vmor %vm1415, %vm1416
    %v1418 = vsel %vm1417, %v1409, %v1414
    %v1419 = vmul.f32 %v1335, %v1388
    %v1420 = vmul.f32 %v1336, %v1398
    %v1421 = vmul.f32 %v1337, %v1408
    %v1422 = vmul.f32 %v1338, %v1418
    %v1424 = vperm.slane %v1293, 0
    %v1425 = vperm.slane %v1293, 1
    %v1426 = vperm.slane %v1293, 2
    %v1427 = vperm.slane %v1293, 3
    %v1432 = vmul.f32 %v1419, %v1424
    %v1433 = vmul.f32 %v1420, %v1425
    %v1434 = vmul.f32 %v1421, %v1426
    %v1435 = vmul.f32 %v1422, %v1427
    %v1437 = vperm.slane %v1294, 0
    %v1438 = vperm.slane %v1294, 1
    %v1439 = vperm.slane %v1294, 2
    %v1440 = vperm.slane %v1294, 3
    %v1445 = vadd.f32 %v1432, %v1437
    %v1446 = vadd.f32 %v1433, %v1438
    %v1447 = vadd.f32 %v1434, %v1439
    %v1448 = vadd.f32 %v1435, %v1440
    %v1449 = vmul.f32 %v1445, 0.2
    %v1450 = vmul.f32 %v1446, 0.2
    %v1451 = vmul.f32 %v1447, 0.2
    %v1452 = vmul.f32 %v1448, 0.2
    %v1453 = vmax.f32 %v1445, %v1449
    %v1454 = vmax.f32 %v1446, %v1450
    %v1455 = vmax.f32 %v1447, %v1451
    %v1456 = vmax.f32 %v1448, %v1452
    %v1457 = vld [vmem:[#allocation7] sm:$0xff]
    %v1458 = vld [vmem:[#allocation7 + $0x8] sm:$0xff]
    %v1459 = vld [vmem:[#allocation7 + $0x10] sm:$0xff]
    %v1460 = vld [vmem:[#allocation7 + $0x18] sm:$0xff]
    %v1461 = vld [vmem:[#allocation7 + $0x20] sm:$0xff]
    %v1462 = vld [vmem:[#allocation7 + $0x28] sm:$0xff]
    %v1463 = vld [vmem:[#allocation7 + $0x30] sm:$0xff]
    %v1464 = vld [vmem:[#allocation7 + $0x38] sm:$0xff]
    %v1465 = vld [vmem:[#allocation7 + $0x40] sm:$0xff]
    %v1466 = vld [vmem:[#allocation7 + $0x48] sm:$0xff]
    %v1467 = vld [vmem:[#allocation7 + $0x50] sm:$0xff]
    %v1468 = vld [vmem:[#allocation7 + $0x58] sm:$0xff]
    %v1469 = vld [vmem:[#allocation7 + $0x60] sm:$0xff]
    %v1470 = vld [vmem:[#allocation7 + $0x68] sm:$0xff]
    %v1471 = vld [vmem:[#allocation7 + $0x70] sm:$0xff]
    %v1472 = vld [vmem:[#allocation7 + $0x78] sm:$0xff]
    %v1473 = vld [vmem:[#allocation7 + $0x80] sm:$0xff]
    %v1474 = vld [vmem:[#allocation7 + $0x88] sm:$0xff]
    %v1475 = vld [vmem:[#allocation7 + $0x90] sm:$0xff]
    %v1476 = vld [vmem:[#allocation7 + $0x98] sm:$0xff]
    %v1477 = vld [vmem:[#allocation7 + $0xa0] sm:$0xff]
    %v1478 = vld [vmem:[#allocation7 + $0xa8] sm:$0xff]
    %v1479 = vld [vmem:[#allocation7 + $0xb0] sm:$0xff]
    %v1480 = vld [vmem:[#allocation7 + $0xb8] sm:$0xff]
    %v1481 = vld [vmem:[#allocation7 + $0xc0] sm:$0xff]
    %v1482 = vld [vmem:[#allocation7 + $0xc8] sm:$0xff]
    %v1483 = vld [vmem:[#allocation7 + $0xd0] sm:$0xff]
    %v1484 = vld [vmem:[#allocation7 + $0xd8] sm:$0xff]
    %v1485 = vld [vmem:[#allocation7 + $0xe0] sm:$0xff]
    %v1486 = vld [vmem:[#allocation7 + $0xe8] sm:$0xff]
    %v1487 = vld [vmem:[#allocation7 + $0xf0] sm:$0xff]
    %v1488 = vld [vmem:[#allocation7 + $0xf8] sm:$0xff]
    %v1489 = vld [vmem:[#allocation7 + $0x100] sm:$0xff]
    %v1490 = vld [vmem:[#allocation7 + $0x108] sm:$0xff]
    %v1491 = vld [vmem:[#allocation7 + $0x110] sm:$0xff]
    %v1492 = vld [vmem:[#allocation7 + $0x118] sm:$0xff]
    %v1493 = vld [vmem:[#allocation7 + $0x120] sm:$0xff]
    %v1494 = vld [vmem:[#allocation7 + $0x128] sm:$0xff]
    %v1495 = vld [vmem:[#allocation7 + $0x130] sm:$0xff]
    %v1496 = vld [vmem:[#allocation7 + $0x138] sm:$0xff]
    %v1497 = vld [vmem:[#allocation7 + $0x140] sm:$0xff]
    %v1498 = vld [vmem:[#allocation7 + $0x148] sm:$0xff]
    %v1499 = vld [vmem:[#allocation7 + $0x150] sm:$0xff]
    %v1500 = vld [vmem:[#allocation7 + $0x158] sm:$0xff]
    %v1501 = vld [vmem:[#allocation7 + $0x160] sm:$0xff]
    %v1502 = vld [vmem:[#allocation7 + $0x168] sm:$0xff]
    %v1503 = vld [vmem:[#allocation7 + $0x170] sm:$0xff]
    %v1504 = vld [vmem:[#allocation7 + $0x178] sm:$0xff]
    %v1505 = vld [vmem:[#allocation7 + $0x180] sm:$0xff]
    %v1506 = vld [vmem:[#allocation7 + $0x188] sm:$0xff]
    %v1507 = vld [vmem:[#allocation7 + $0x190] sm:$0xff]
    %v1508 = vld [vmem:[#allocation7 + $0x198] sm:$0xff]
    %v1509 = vld [vmem:[#allocation7 + $0x1a0] sm:$0xff]
    %v1510 = vld [vmem:[#allocation7 + $0x1a8] sm:$0xff]
    %v1511 = vld [vmem:[#allocation7 + $0x1b0] sm:$0xff]
    %v1512 = vld [vmem:[#allocation7 + $0x1b8] sm:$0xff]
    %v1513 = vld [vmem:[#allocation7 + $0x1c0] sm:$0xff]
    %v1514 = vld [vmem:[#allocation7 + $0x1c8] sm:$0xff]
    %v1515 = vld [vmem:[#allocation7 + $0x1d0] sm:$0xff]
    %v1516 = vld [vmem:[#allocation7 + $0x1d8] sm:$0xff]
    %v1517 = vld [vmem:[#allocation7 + $0x1e0] sm:$0xff]
    %v1518 = vld [vmem:[#allocation7 + $0x1e8] sm:$0xff]
    %v1519 = vld [vmem:[#allocation7 + $0x1f0] sm:$0xff]
    %v1520 = vld [vmem:[#allocation7 + $0x1f8] sm:$0xff]
    %v1521 = vld [vmem:[#allocation7 + $0x200] sm:$0xff]
    %v1522 = vld [vmem:[#allocation7 + $0x208] sm:$0xff]
    %v1523 = vld [vmem:[#allocation7 + $0x210] sm:$0xff]
    %v1524 = vld [vmem:[#allocation7 + $0x218] sm:$0xff]
    %v1525 = vld [vmem:[#allocation7 + $0x220] sm:$0xff]
    %v1526 = vld [vmem:[#allocation7 + $0x228] sm:$0xff]
    %v1527 = vld [vmem:[#allocation7 + $0x230] sm:$0xff]
    %v1528 = vld [vmem:[#allocation7 + $0x238] sm:$0xff]
    %v1529 = vld [vmem:[#allocation7 + $0x240] sm:$0xff]
    %v1530 = vld [vmem:[#allocation7 + $0x248] sm:$0xff]
    %v1531 = vld [vmem:[#allocation7 + $0x250] sm:$0xff]
    %v1532 = vld [vmem:[#allocation7 + $0x258] sm:$0xff]
    %v1533 = vld [vmem:[#allocation7 + $0x260] sm:$0xff]
    %v1534 = vld [vmem:[#allocation7 + $0x268] sm:$0xff]
    %v1535 = vld [vmem:[#allocation7 + $0x270] sm:$0xff]
    %v1536 = vld [vmem:[#allocation7 + $0x278] sm:$0xff]
    %v1537 = vld [vmem:[#allocation7 + $0x280] sm:$0xff]
    %v1538 = vld [vmem:[#allocation7 + $0x288] sm:$0xff]
    %v1539 = vld [vmem:[#allocation7 + $0x290] sm:$0xff]
    %v1540 = vld [vmem:[#allocation7 + $0x298] sm:$0xff]
    %v1541 = vld [vmem:[#allocation7 + $0x2a0] sm:$0xff]
    %v1542 = vld [vmem:[#allocation7 + $0x2a8] sm:$0xff]
    %v1543 = vld [vmem:[#allocation7 + $0x2b0] sm:$0xff]
    %v1544 = vld [vmem:[#allocation7 + $0x2b8] sm:$0xff]
    %v1545 = vld [vmem:[#allocation7 + $0x2c0] sm:$0xff]
    %v1546 = vld [vmem:[#allocation7 + $0x2c8] sm:$0xff]
    %v1547 = vld [vmem:[#allocation7 + $0x2d0] sm:$0xff]
    %v1548 = vld [vmem:[#allocation7 + $0x2d8] sm:$0xff]
    %v1549 = vld [vmem:[#allocation7 + $0x2e0] sm:$0xff]
    %v1550 = vld [vmem:[#allocation7 + $0x2e8] sm:$0xff]
    %v1551 = vld [vmem:[#allocation7 + $0x2f0] sm:$0xff]
    %v1552 = vld [vmem:[#allocation7 + $0x2f8] sm:$0xff]
    %v1553 = vld [vmem:[#allocation7 + $0x300] sm:$0xff]
    %v1554 = vld [vmem:[#allocation7 + $0x308] sm:$0xff]
    %v1555 = vld [vmem:[#allocation7 + $0x310] sm:$0xff]
    %v1556 = vld [vmem:[#allocation7 + $0x318] sm:$0xff]
    %v1557 = vld [vmem:[#allocation7 + $0x320] sm:$0xff]
    %v1558 = vld [vmem:[#allocation7 + $0x328] sm:$0xff]
    %v1559 = vld [vmem:[#allocation7 + $0x330] sm:$0xff]
    %v1560 = vld [vmem:[#allocation7 + $0x338] sm:$0xff]
    %v1561 = vld [vmem:[#allocation7 + $0x340] sm:$0xff]
    %v1562 = vld [vmem:[#allocation7 + $0x348] sm:$0xff]
    %v1563 = vld [vmem:[#allocation7 + $0x350] sm:$0xff]
    %v1564 = vld [vmem:[#allocation7 + $0x358] sm:$0xff]
    %v1565 = vld [vmem:[#allocation7 + $0x360] sm:$0xff]
    %v1566 = vld [vmem:[#allocation7 + $0x368] sm:$0xff]
    %v1567 = vld [vmem:[#allocation7 + $0x370] sm:$0xff]
    %v1568 = vld [vmem:[#allocation7 + $0x378] sm:$0xff]
    %v1569 = vld [vmem:[#allocation7 + $0x380] sm:$0xff]
    %v1570 = vld [vmem:[#allocation7 + $0x388] sm:$0xff]
    %v1571 = vld [vmem:[#allocation7 + $0x390] sm:$0xff]
    %v1572 = vld [vmem:[#allocation7 + $0x398] sm:$0xff]
    %v1573 = vld [vmem:[#allocation7 + $0x3a0] sm:$0xff]
    %v1574 = vld [vmem:[#allocation7 + $0x3a8] sm:$0xff]
    %v1575 = vld [vmem:[#allocation7 + $0x3b0] sm:$0xff]
    %v1576 = vld [vmem:[#allocation7 + $0x3b8] sm:$0xff]
    %v1577 = vld [vmem:[#allocation7 + $0x3c0] sm:$0xff]
    %v1578 = vld [vmem:[#allocation7 + $0x3c8] sm:$0xff]
    %v1579 = vld [vmem:[#allocation7 + $0x3d0] sm:$0xff]
    %v1580 = vld [vmem:[#allocation7 + $0x3d8] sm:$0xff]
    %v1581 = vld [vmem:[#allocation7 + $0x3e0] sm:$0xff]
    %v1582 = vld [vmem:[#allocation7 + $0x3e8] sm:$0xff]
    %v1583 = vld [vmem:[#allocation7 + $0x3f0] sm:$0xff]
    %v1584 = vld [vmem:[#allocation7 + $0x3f8] sm:$0xff]
    %1585 = vmatpush.msra.mxu0 %v1487
    %1586 = vmatpush.msra.mxu0 %v1485
    %1587 = vmatpush.msra.mxu0 %v1483
    %1588 = vmatpush.msra.mxu0 %v1481
    %1589 = vmatpush.msra.mxu0 %v1479
    %1590 = vmatpush.msra.mxu0 %v1477
    %1591 = vmatpush.msra.mxu0 %v1475
    %1592 = vmatpush.msra.mxu0 %v1473
    %1593 = vmatpush.msra.mxu0 %v1471
    %1594 = vmatpush.msra.mxu0 %v1469
    %1595 = vmatpush.msra.mxu0 %v1467
    %1596 = vmatpush.msra.mxu0 %v1465
    %1597 = vmatpush.msra.mxu0 %v1463
    %1598 = vmatpush.msra.mxu0 %v1461
    %1599 = vmatpush.msra.mxu0 %v1459
    %1600 = vmatpush.msra.mxu0 %v1457
    %1601 = vmatmul.f32.gmra.mxu0 %v1453
    %v1602 = vpop.f32.mrf.mxu0
    %v1603 = vadd.f32 0.0, %v1602
    %1604 = vdwg.mxu0
    %1605 = vmatpush.msra.mxu0 %v1519
    %1606 = vmatpush.msra.mxu0 %v1517
    %1607 = vmatpush.msra.mxu0 %v1515
    %1608 = vmatpush.msra.mxu0 %v1513
    %1609 = vmatpush.msra.mxu0 %v1511
    %1610 = vmatpush.msra.mxu0 %v1509
    %1611 = vmatpush.msra.mxu0 %v1507
    %1612 = vmatpush.msra.mxu0 %v1505
    %1613 = vmatpush.msra.mxu0 %v1503
    %1614 = vmatpush.msra.mxu0 %v1501
    %1615 = vmatpush.msra.mxu0 %v1499
    %1616 = vmatpush.msra.mxu0 %v1497
    %1617 = vmatpush.msra.mxu0 %v1495
    %1618 = vmatpush.msra.mxu0 %v1493
    %1619 = vmatpush.msra.mxu0 %v1491
    %1620 = vmatpush.msra.mxu0 %v1489
    %1621 = vmatmul.f32.gmra.mxu0 %v1454
    %v1622 = vpop.f32.mrf.mxu0
    %v1623 = vadd.f32 %v1603, %v1622
    %1624 = vdwg.mxu0
    %1625 = vmatpush.msra.mxu0 %v1551
    %1626 = vmatpush.msra.mxu0 %v1549
    %1627 = vmatpush.msra.mxu0 %v1547
    %1628 = vmatpush.msra.mxu0 %v1545
    %1629 = vmatpush.msra.mxu0 %v1543
    %1630 = vmatpush.msra.mxu0 %v1541
    %1631 = vmatpush.msra.mxu0 %v1539
    %1632 = vmatpush.msra.mxu0 %v1537
    %1633 = vmatpush.msra.mxu0 %v1535
    %1634 = vmatpush.msra.mxu0 %v1533
    %1635 = vmatpush.msra.mxu0 %v1531
    %1636 = vmatpush.msra.mxu0 %v1529
    %1637 = vmatpush.msra.mxu0 %v1527
    %1638 = vmatpush.msra.mxu0 %v1525
    %1639 = vmatpush.msra.mxu0 %v1523
    %1640 = vmatpush.msra.mxu0 %v1521
    %1641 = vmatmul.f32.gmra.mxu0 %v1455
    %v1642 = vpop.f32.mrf.mxu0
    %v1643 = vadd.f32 %v1623, %v1642
    %1644 = vdwg.mxu0
    %1645 = vmatpush.msra.mxu0 %v1583
    %1646 = vmatpush.msra.mxu0 %v1581
    %1647 = vmatpush.msra.mxu0 %v1579
    %1648 = vmatpush.msra.mxu0 %v1577
    %1649 = vmatpush.msra.mxu0 %v1575
    %1650 = vmatpush.msra.mxu0 %v1573
    %1651 = vmatpush.msra.mxu0 %v1571
    %1652 = vmatpush.msra.mxu0 %v1569
    %1653 = vmatpush.msra.mxu0 %v1567
    %1654 = vmatpush.msra.mxu0 %v1565
    %1655 = vmatpush.msra.mxu0 %v1563
    %1656 = vmatpush.msra.mxu0 %v1561
    %1657 = vmatpush.msra.mxu0 %v1559
    %1658 = vmatpush.msra.mxu0 %v1557
    %1659 = vmatpush.msra.mxu0 %v1555
    %1660 = vmatpush.msra.mxu0 %v1553
    %1661 = vmatmul.f32.gmra.mxu0 %v1456
    %v1662 = vpop.f32.mrf.mxu0
    %v1663 = vadd.f32 %v1643, %v1662
    %1664 = vdwg.mxu0
    %1665 = vmatpush.msra.mxu0 %v1488
    %1666 = vmatpush.msra.mxu0 %v1486
    %1667 = vmatpush.msra.mxu0 %v1484
    %1668 = vmatpush.msra.mxu0 %v1482
    %1669 = vmatpush.msra.mxu0 %v1480
    %1670 = vmatpush.msra.mxu0 %v1478
    %1671 = vmatpush.msra.mxu0 %v1476
    %1672 = vmatpush.msra.mxu0 %v1474
    %1673 = vmatpush.msra.mxu0 %v1472
    %1674 = vmatpush.msra.mxu0 %v1470
    %1675 = vmatpush.msra.mxu0 %v1468
    %1676 = vmatpush.msra.mxu0 %v1466
    %1677 = vmatpush.msra.mxu0 %v1464
    %1678 = vmatpush.msra.mxu0 %v1462
    %1679 = vmatpush.msra.mxu0 %v1460
    %1680 = vmatpush.msra.mxu0 %v1458
    %1681 = vmatmul.f32.gmra.mxu0 %v1453
    %v1682 = vpop.f32.mrf.mxu0
    %v1683 = vadd.f32 0.0, %v1682
    %1684 = vdwg.mxu0
    %1685 = vmatpush.msra.mxu0 %v1520
    %1686 = vmatpush.msra.mxu0 %v1518
    %1687 = vmatpush.msra.mxu0 %v1516
    %1688 = vmatpush.msra.mxu0 %v1514
    %1689 = vmatpush.msra.mxu0 %v1512
    %1690 = vmatpush.msra.mxu0 %v1510
    %1691 = vmatpush.msra.mxu0 %v1508
    %1692 = vmatpush.msra.mxu0 %v1506
    %1693 = vmatpush.msra.mxu0 %v1504
    %1694 = vmatpush.msra.mxu0 %v1502
    %1695 = vmatpush.msra.mxu0 %v1500
    %1696 = vmatpush.msra.mxu0 %v1498
    %1697 = vmatpush.msra.mxu0 %v1496
    %1698 = vmatpush.msra.mxu0 %v1494
    %1699 = vmatpush.msra.mxu0 %v1492
    %1700 = vmatpush.msra.mxu0 %v1490
    %1701 = vmatmul.f32.gmra.mxu0 %v1454
    %v1702 = vpop.f32.mrf.mxu0
    %v1703 = vadd.f32 %v1683, %v1702
    %1704 = vdwg.mxu0
    %1705 = vmatpush.msra.mxu0 %v1552
    %1706 = vmatpush.msra.mxu0 %v1550
    %1707 = vmatpush.msra.mxu0 %v1548
    %1708 = vmatpush.msra.mxu0 %v1546
    %1709 = vmatpush.msra.mxu0 %v1544
    %1710 = vmatpush.msra.mxu0 %v1542
    %1711 = vmatpush.msra.mxu0 %v1540
    %1712 = vmatpush.msra.mxu0 %v1538
    %1713 = vmatpush.msra.mxu0 %v1536
    %1714 = vmatpush.msra.mxu0 %v1534
    %1715 = vmatpush.msra.mxu0 %v1532
    %1716 = vmatpush.msra.mxu0 %v1530
    %1717 = vmatpush.msra.mxu0 %v1528
    %1718 = vmatpush.msra.mxu0 %v1526
    %1719 = vmatpush.msra.mxu0 %v1524
    %1720 = vmatpush.msra.mxu0 %v1522
    %1721 = vmatmul.f32.gmra.mxu0 %v1455
    %v1722 = vpop.f32.mrf.mxu0
    %v1723 = vadd.f32 %v1703, %v1722
    %1724 = vdwg.mxu0
    %1725 = vmatpush.msra.mxu0 %v1584
    %1726 = vmatpush.msra.mxu0 %v1582
    %1727 = vmatpush.msra.mxu0 %v1580
    %1728 = vmatpush.msra.mxu0 %v1578
    %1729 = vmatpush.msra.mxu0 %v1576
    %1730 = vmatpush.msra.mxu0 %v1574
    %1731 = vmatpush.msra.mxu0 %v1572
    %1732 = vmatpush.msra.mxu0 %v1570
    %1733 = vmatpush.msra.mxu0 %v1568
    %1734 = vmatpush.msra.mxu0 %v1566
    %1735 = vmatpush.msra.mxu0 %v1564
    %1736 = vmatpush.msra.mxu0 %v1562
    %1737 = vmatpush.msra.mxu0 %v1560
    %1738 = vmatpush.msra.mxu0 %v1558
    %1739 = vmatpush.msra.mxu0 %v1556
    %1740 = vmatpush.msra.mxu0 %v1554
    %1741 = vmatmul.f32.gmra.mxu0 %v1456
    %v1742 = vpop.f32.mrf.mxu0
    %v1743 = vadd.f32 %v1723, %v1742
    %1744 = vdwg.mxu0
    %v1745 = vld [vmem:[#allocation9] sm:$0x3]
    %v1746 = vld [vmem:[#allocation10] sm:$0x3]
    %v1747 = vsel %vm1295, %v1663, 0.0
    %v1748 = vrot.slane %v1747, 4
    %v1749 = vadd.f32 %v1747, %v1748
    %v1750 = vrot.slane %v1749, 2
    %v1751 = vadd.f32 %v1749, %v1750
    %v1752 = vrot.slane %v1751, 1
    %v1753 = vadd.f32 %v1751, %v1752
    %v1754 = vsel %vm1295, %v1743, 0.0
    %v1755 = vrot.slane %v1754, 4
    %v1756 = vadd.f32 %v1754, %v1755
    %v1757 = vrot.slane %v1756, 2
    %v1758 = vadd.f32 %v1756, %v1757
    %v1759 = vrot.slane %v1758, 1
    %v1760 = vadd.f32 %v1758, %v1759
    %v1761 = vmul.f32 %v1753, %v1330
    %v1762 = vmul.f32 %v1760, %v1330
    %v1763 = vsub.f32 %v1663, %v1761
    %v1764 = vsub.f32 %v1743, %v1762
    %v1765 = vmul.f32 %v1763, %v1763
    %v1766 = vmul.f32 %v1764, %v1764
    %v1767 = vsel %vm1295, %v1765, 0.0
    %v1768 = vrot.slane %v1767, 4
    %v1769 = vadd.f32 %v1767, %v1768
    %v1770 = vrot.slane %v1769, 2
    %v1771 = vadd.f32 %v1769, %v1770
    %v1772 = vrot.slane %v1771, 1
    %v1773 = vadd.f32 %v1771, %v1772
    %v1774 = vsel %vm1295, %v1766, 0.0
    %v1775 = vrot.slane %v1774, 4
    %v1776 = vadd.f32 %v1774, %v1775
    %v1777 = vrot.slane %v1776, 2
    %v1778 = vadd.f32 %v1776, %v1777
    %v1779 = vrot.slane %v1778, 1
    %v1780 = vadd.f32 %v1778, %v1779
    %v1781 = vmul.f32 %v1773, %v1330
    %v1782 = vmul.f32 %v1780, %v1330
    %v1783 = vadd.f32 %v1781, 1e-05
    %v1784 = vadd.f32 %v1782, 1e-05
    %v1785 = vrsqrt.pop %v1783
    %v1786 = vmul.f32 %v1785, %v1783
    %v1787 = vmul.f32 %v1786, %v1785
    %v1788 = vmul.f32 0.5, %v1787
    %v1789 = vsub.f32 1.5, %v1788
    %v1790 = vmul.f32 %v1785, %v1789
    %vm1791 = vweird.f32 %v1783
    %vm1792 = vweird.f32 %v1785
    %vm1793 = vmor %vm1791, %vm1792
    %v1794 = vsel %vm1793, %v1785, %v1790
    %v1795 = vrsqrt.pop %v1784
    %v1796 = vmul.f32 %v1795, %v1784
    %v1797 = vmul.f32 %v1796, %v1795
    %v1798 = vmul.f32 0.5, %v1797
    %v1799 = vsub.f32 1.5, %v1798
    %v1800 = vmul.f32 %v1795, %v1799
    %vm1801 = vweird.f32 %v1784
    %vm1802 = vweird.f32 %v1795
    %vm1803 = vmor %vm1801, %vm1802
    %v1804 = vsel %vm1803, %v1795, %v1800
    %v1805 = vmul.f32 %v1763, %v1794
    %v1806 = vmul.f32 %v1764, %v1804
    %v1808 = vperm.slane %v1745, 0
    %v1809 = vperm.slane %v1745, 1
    %v1812 = vmul.f32 %v1805, %v1808
    %v1813 = vmul.f32 %v1806, %v1809
    %v1815 = vperm.slane %v1746, 0
    %v1816 = vperm.slane %v1746, 1
    %v1819 = vadd.f32 %v1812, %v1815
    %v1820 = vadd.f32 %v1813, %v1816
    %v1821 = vmul.f32 %v1819, 0.2
    %v1822 = vmul.f32 %v1820, 0.2
    %v1823 = vmax.f32 %v1819, %v1821
    %v1824 = vmax.f32 %v1820, %v1822
    %v1825 = vld [vmem:[%s7] sm:$0xff]
    %v1826 = vld [vmem:[%s7 + $0x8] sm:$0xff]
    %v1827 = vld [vmem:[%s7 + $0x10] sm:$0xff]
    %v1828 = vld [vmem:[%s7 + $0x18] sm:$0xff]
    %v1829 = vld [vmem:[%s7 + $0x20] sm:$0xff]
    %v1830 = vld [vmem:[%s7 + $0x28] sm:$0xff]
    %v1831 = vld [vmem:[%s7 + $0x30] sm:$0xff]
    %v1832 = vld [vmem:[%s7 + $0x38] sm:$0xff]
    %v1833 = vld [vmem:[%s7 + $0x40] sm:$0xff]
    %v1834 = vld [vmem:[%s7 + $0x48] sm:$0xff]
    %v1835 = vld [vmem:[%s7 + $0x50] sm:$0xff]
    %v1836 = vld [vmem:[%s7 + $0x58] sm:$0xff]
    %v1837 = vld [vmem:[%s7 + $0x60] sm:$0xff]
    %v1838 = vld [vmem:[%s7 + $0x68] sm:$0xff]
    %v1839 = vld [vmem:[%s7 + $0x70] sm:$0xff]
    %v1840 = vld [vmem:[%s7 + $0x78] sm:$0xff]
    %v1841 = vld [vmem:[%s7 + $0x80] sm:$0xff]
    %v1842 = vld [vmem:[%s7 + $0x88] sm:$0xff]
    %v1843 = vld [vmem:[%s7 + $0x90] sm:$0xff]
    %v1844 = vld [vmem:[%s7 + $0x98] sm:$0xff]
    %v1845 = vld [vmem:[%s7 + $0xa0] sm:$0xff]
    %v1846 = vld [vmem:[%s7 + $0xa8] sm:$0xff]
    %v1847 = vld [vmem:[%s7 + $0xb0] sm:$0xff]
    %v1848 = vld [vmem:[%s7 + $0xb8] sm:$0xff]
    %v1849 = vld [vmem:[%s7 + $0xc0] sm:$0xff]
    %v1850 = vld [vmem:[%s7 + $0xc8] sm:$0xff]
    %v1851 = vld [vmem:[%s7 + $0xd0] sm:$0xff]
    %v1852 = vld [vmem:[%s7 + $0xd8] sm:$0xff]
    %v1853 = vld [vmem:[%s7 + $0xe0] sm:$0xff]
    %v1854 = vld [vmem:[%s7 + $0xe8] sm:$0xff]
    %v1855 = vld [vmem:[%s7 + $0xf0] sm:$0xff]
    %v1856 = vld [vmem:[%s7 + $0xf8] sm:$0xff]
    %v1857 = vld [vmem:[%s8] sm:$0x1]
    %v1859 = vperm.slane %v1857, 0
    %1861 = vmatpush.msra.mxu0 %v1840
    %1862 = vmatpush.msra.mxu0 %v1839
    %1863 = vmatpush.msra.mxu0 %v1838
    %1864 = vmatpush.msra.mxu0 %v1837
    %1865 = vmatpush.msra.mxu0 %v1836
    %1866 = vmatpush.msra.mxu0 %v1835
    %1867 = vmatpush.msra.mxu0 %v1834
    %1868 = vmatpush.msra.mxu0 %v1833
    %1869 = vmatpush.msra.mxu0 %v1832
    %1870 = vmatpush.msra.mxu0 %v1831
    %1871 = vmatpush.msra.mxu0 %v1830
    %1872 = vmatpush.msra.mxu0 %v1829
    %1873 = vmatpush.msra.mxu0 %v1828
    %1874 = vmatpush.msra.mxu0 %v1827
    %1875 = vmatpush.msra.mxu0 %v1826
    %1876 = vmatpush.msra.mxu0 %v1825
    %1877 = vmatmul.f32.gmra.mxu0 %v1823
    %v1878 = vpop.f32.mrf.mxu0
    %v1879 = vadd.f32 %v1859, %v1878
    %1880 = vdwg.mxu0
    %1881 = vmatpush.msra.mxu0 %v1856
    %1882 = vmatpush.msra.mxu0 %v1855
    %1883 = vmatpush.msra.mxu0 %v1854
    %1884 = vmatpush.msra.mxu0 %v1853
    %1885 = vmatpush.msra.mxu0 %v1852
    %1886 = vmatpush.msra.mxu0 %v1851
    %1887 = vmatpush.msra.mxu0 %v1850
    %1888 = vmatpush.msra.mxu0 %v1849
    %1889 = vmatpush.msra.mxu0 %v1848
    %1890 = vmatpush.msra.mxu0 %v1847
    %1891 = vmatpush.msra.mxu0 %v1846
    %1892 = vmatpush.msra.mxu0 %v1845
    %1893 = vmatpush.msra.mxu0 %v1844
    %1894 = vmatpush.msra.mxu0 %v1843
    %1895 = vmatpush.msra.mxu0 %v1842
    %1896 = vmatpush.msra.mxu0 %v1841
    %1897 = vmatmul.f32.gmra.mxu0 %v1824
    %v1898 = vpop.f32.mrf.mxu0
    %v1899 = vadd.f32 %v1879, %v1898
    %1900 = vdwg.mxu0
    %1901 = vst [vmem:[%s9] sm:$0x3] %v1899
    // Predicated region
    $region62: #{transform_net.5} parent=1 // pred_check
      _
    $region63: #{transform_net.5} parent=1 // pred_check_branch
      %1903 = sbr.rel (0) target = $region65
    $region64: #{transform_net.5} parent=1 // pred_region
      _
    $region65: #{transform_net.5} parent=1 // pred_fallthru
      _
    // Predicated region
    $region66: #{transform_net.5} parent=1 // pred_check
      _
    $region67: #{transform_net.5} parent=1 // pred_check_branch
      %1905 = sbr.rel (0) target = $region69
    $region68: #{transform_net.5} parent=1 // pred_region
      _
    $region69: #{transform_net.5} parent=1 // pred_fallthru
      _
    %1906 = vsyncpa [#allocation3], 1
    %1907 = vsyncpa [#allocation5], 1
    %1908 = vsyncpa [#allocation8], 1
    %1909 = vsyncpa [#allocation11], 1

</llo_original>
